<compile_context>
chip_gen: v5e
topology: v5e:2x2
jax: 0.10.0
libtpu: 0.0.40
codegen_flags: <defaults>
</compile_context>

<pallas_src>
import functools
import math

import jax
import jax.numpy as jnp
from jax.experimental import pallas as pl
from jax.experimental.pallas import tpu as pltpu


# ----------------------------- fused decoder kernel -----------------------------

def _fused_decoder_kernel(nhead, num_layers,
                          tgt_ref, mem_ref,
                          wattn_ref, wout_ref, w1_ref, w2_ref,
                          vece_ref, b1_ref, fin_ref,
                          out_ref):
    L, E = tgt_ref.shape
    S = mem_ref.shape[0]
    H = nhead
    hd = E // H

    def layernorm(y, g, b, eps=1e-5):
        n = y.shape[-1]
        s1 = jnp.sum(y, axis=-1, keepdims=True)
        s2 = jnp.sum(y * y, axis=-1, keepdims=True)
        mu = s1 * (1.0 / n)
        var = s2 * (1.0 / n) - mu * mu
        return (y - mu) * jax.lax.rsqrt(var + eps) * g + b

    def split_heads(t):
        # (R, E) f32 -> (H, R, hd) bf16 for the MXU score / P@V contractions
        r = t.shape[0]
        return jnp.transpose(t.reshape(r, H, hd), (1, 0, 2)).astype(jnp.bfloat16)

    def attention(q, k, v, wo, bo):
        # q: (L, E) f32 (softmax scale already folded into the q projection);
        # k, v: (S, E) f32; wo: (E, E) bf16 pre-transposed; bo: (1, E) f32.
        qh = split_heads(q)                 # (H, L, hd)
        kh = split_heads(k)                 # (H, S, hd)
        vh = split_heads(v)                 # (H, S, hd)
        s = jnp.einsum('hld,hsd->hls', qh, kh,
                       preferred_element_type=jnp.float32)
        s = s - jnp.max(s, axis=-1, keepdims=True)
        p = jnp.exp(s)
        p = p * pl.reciprocal(jnp.sum(p, axis=-1, keepdims=True), approx=True)
        o = jnp.einsum('hls,hsd->hld', p.astype(jnp.bfloat16), vh,
                       preferred_element_type=jnp.float32)          # (H, L, hd)
        # merge heads and do ONE (L,E)@(E,E) output projection
        o_flat = jnp.transpose(o, (1, 0, 2)).reshape(q.shape[0], E).astype(jnp.bfloat16)
        return jnp.dot(o_flat, wo, preferred_element_type=jnp.float32) + bo

    mem_b = mem_ref[...].astype(jnp.bfloat16)                        # (S, E)
    x = tgt_ref[...]                                                 # (L, E) f32

    # Layer loop unrolled (latency-bound at these shapes; all weights already in VMEM).
    for l in range(num_layers):
        ve = vece_ref[l]          # (16, E) f32 rows:
                                  # 0 sa_bq*scale, 1 sa_bk, 2 sa_bv, 3 sa_out_b,
                                  # 4 ca_bq*scale, 5 ca_bk, 6 ca_bv, 7 ca_out_b,
                                  # 8 b2, 9 g1, 10 be1, 11 g2, 12 be2, 13 g3, 14 be3
        q0 = x                    # forward_post ends with `tgt = tgt + q` (query_pos is None)

        # ---------------- self attention ----------------
        xb = x.astype(jnp.bfloat16)
        q = jnp.dot(xb, wattn_ref[l, 0], preferred_element_type=jnp.float32) + ve[0:1]
        k = jnp.dot(xb, wattn_ref[l, 1], preferred_element_type=jnp.float32) + ve[1:2]
        v = jnp.dot(xb, wattn_ref[l, 2], preferred_element_type=jnp.float32) + ve[2:3]
        a = attention(q, k, v, wout_ref[l, 0], ve[3:4])
        x = layernorm(x + a, ve[9:10], ve[10:11])

        # ---------------- cross attention ----------------
        xb = x.astype(jnp.bfloat16)
        q = jnp.dot(xb, wattn_ref[l, 3], preferred_element_type=jnp.float32) + ve[4:5]
        k = jnp.dot(mem_b, wattn_ref[l, 4], preferred_element_type=jnp.float32) + ve[5:6]
        v = jnp.dot(mem_b, wattn_ref[l, 5], preferred_element_type=jnp.float32) + ve[6:7]
        a = attention(q, k, v, wout_ref[l, 1], ve[7:8])
        x = layernorm(x + a, ve[11:12], ve[12:13])

        # ---------------- feed forward (relu) ----------------
        xb = x.astype(jnp.bfloat16)
        hid = jnp.maximum(
            jnp.dot(xb, w1_ref[l], preferred_element_type=jnp.float32) + b1_ref[l], 0.0)
        a = jnp.dot(hid.astype(jnp.bfloat16), w2_ref[l],
                    preferred_element_type=jnp.float32) + ve[8:9]
        x = layernorm(x + a, ve[13:14], ve[14:15])

        # trailing residual of forward_post
        x = x + q0

    # final LayerNorm with the scalar `weight` folded into gamma/beta (host side)
    fin = fin_ref[...]                       # (2, E)
    out_ref[...] = layernorm(x, fin[0:1], fin[1:2])


# ----------------------------- wrapper -----------------------------

def decoder_forward(tgt, memory, packed, final_gamma, final_beta, weight, nhead):
    """Runs the whole decoder (all layers + final norm * weight) in one pallas_call."""
    L, E = tgt.shape
    NL = packed['w_attn'].shape[0]

    # Fold the scalar `weight` into the final LayerNorm affine params (host side).
    fin = jnp.concatenate([final_gamma.reshape(1, E) * weight,
                           final_beta.reshape(1, E) * weight], axis=0)

    kernel = functools.partial(_fused_decoder_kernel, nhead, NL)
    # Grid-less call: every operand is small and lives whole in VMEM; the layer loop is
    # unrolled inside the kernel (no per-grid-step bookkeeping, no HBM round-trips).
    return pl.pallas_call(
        kernel,
        out_shape=jax.ShapeDtypeStruct((L, E), jnp.float32),
    )(tgt, memory, packed['w_attn'], packed['w_out'], packed['w1'], packed['w2'],
      packed['vec_e'], packed['b1'], fin)


# ----------------------------- host-side parameter packing -----------------------------

def pack_params(layers, nhead):
    """Pack per-layer PyTorch-layout params into stacked, pre-transposed slabs.

    Weights destined for the MXU are stored as bf16; biases / LN params stay f32.
    The 1/sqrt(hd) softmax scale is folded into the q-projection weights and biases.
    """
    E = layers[0]['sa_out_w'].shape[0]
    F = layers[0]['w1'].shape[0]
    hd = E // nhead
    scale = 1.0 / math.sqrt(hd)

    w_attn, w_out, w1s, w2s, vec_e, b1s = [], [], [], [], [], []
    for p in layers:
        sa_wq, sa_wk, sa_wv = jnp.split(p['sa_in_w'], 3, axis=0)
        ca_wq, ca_wk, ca_wv = jnp.split(p['ca_in_w'], 3, axis=0)
        # pre-transpose to (in_features, out_features); fold softmax scale into q weights;
        # q/k/v for self- and cross-attention are separate slices of a LEADING dim (no lane
        # slicing inside the kernel).
        w_attn.append(jnp.stack([sa_wq.T * scale, sa_wk.T, sa_wv.T,
                                 ca_wq.T * scale, ca_wk.T, ca_wv.T], axis=0))   # (6, E, E)
        w_out.append(jnp.stack([p['sa_out_w'].T, p['ca_out_w'].T], axis=0))     # (2, E, E)
        w1s.append(p['w1'].T)    # (E, F)
        w2s.append(p['w2'].T)    # (F, E)

        sa_bq, sa_bk, sa_bv = jnp.split(p['sa_in_b'], 3)
        ca_bq, ca_bk, ca_bv = jnp.split(p['ca_in_b'], 3)
        rows = [sa_bq * scale, sa_bk, sa_bv, p['sa_out_b'],
                ca_bq * scale, ca_bk, ca_bv, p['ca_out_b'],
                p['b2'],
                p['g1'], p['be1'], p['g2'], p['be2'], p['g3'], p['be3']]
        ve = jnp.stack([r.reshape(E) for r in rows], axis=0)                    # (15, E)
        ve = jnp.concatenate([ve, jnp.zeros((16 - ve.shape[0], E), jnp.float32)], axis=0)
        vec_e.append(ve)
        b1s.append(p['b1'].reshape(1, F))

    return {
        'w_attn': jnp.stack(w_attn).astype(jnp.bfloat16),   # (NL, 6, E, E)
        'w_out': jnp.stack(w_out).astype(jnp.bfloat16),     # (NL, 2, E, E)
        'w1': jnp.stack(w1s).astype(jnp.bfloat16),          # (NL, E, F)
        'w2': jnp.stack(w2s).astype(jnp.bfloat16),          # (NL, F, E)
        'vec_e': jnp.stack(vec_e),                          # (NL, 16, E) f32
        'b1': jnp.stack(b1s),                               # (NL, 1, F) f32
    }


# ----------------------------- deterministic parameter init -----------------------------

def init_layer_params(key, d_model, dim_feedforward):
    """PyTorch-layout parameters (weights are (out_features, in_features)).
    Biases / LN params get small random values so the correctness check exercises
    every packed parameter row."""
    E, F = d_model, dim_feedforward
    ks = jax.random.split(key, 18)

    def xavier(k, shape):
        fan_out, fan_in = shape
        a = math.sqrt(6.0 / (fan_in + fan_out))
        return jax.random.uniform(k, shape, jnp.float32, -a, a)

    def small(k, shape):
        return 0.05 * jax.random.normal(k, shape, jnp.float32)

    return {
        # self attention: stacked in_proj (q|k|v) as in nn.MultiheadAttention
        'sa_in_w': xavier(ks[0], (3 * E, E)), 'sa_in_b': small(ks[1], (3 * E,)),
        'sa_out_w': xavier(ks[2], (E, E)), 'sa_out_b': small(ks[3], (E,)),
        # cross attention
        'ca_in_w': xavier(ks[4], (3 * E, E)), 'ca_in_b': small(ks[5], (3 * E,)),
        'ca_out_w': xavier(ks[6], (E, E)), 'ca_out_b': small(ks[7], (E,)),
        # feed forward
        'w1': xavier(ks[8], (F, E)), 'b1': small(ks[9], (F,)),
        'w2': xavier(ks[10], (E, F)), 'b2': small(ks[11], (E,)),
        # layer norms
        'g1': 1.0 + small(ks[12], (E,)), 'be1': small(ks[13], (E,)),
        'g2': 1.0 + small(ks[14], (E,)), 'be2': small(ks[15], (E,)),
        'g3': 1.0 + small(ks[16], (E,)), 'be3': small(ks[17], (E,)),
    }


# ----------------------------- pure-JAX reference (for validation) -----------------------------

def _reference_decoder(tgt, memory, layers, final_gamma, final_beta, weight, nhead):
    """Mirrors the PyTorch module (eval mode, forward_post, return_intermediate=False)."""
    hi = jax.lax.Precision.HIGHEST

    def ln(x, g, b, eps=1e-5):
        mu = jnp.mean(x, -1, keepdims=True)
        var = jnp.mean((x - mu) ** 2, -1, keepdims=True)
        return (x - mu) / jnp.sqrt(var + eps) * g + b

    def mha(q_in, k_in, v_in, in_w, in_b, out_w, out_b):
        E = q_in.shape[-1]
        hd = E // nhead
        wq, wk, wv = in_w[0:E], in_w[E:2 * E], in_w[2 * E:3 * E]
        bq, bk, bv = in_b[0:E], in_b[E:2 * E], in_b[2 * E:3 * E]
        q = jnp.dot(q_in, wq.T, precision=hi) + bq
        k = jnp.dot(k_in, wk.T, precision=hi) + bk
        v = jnp.dot(v_in, wv.T, precision=hi) + bv
        outs = []
        for h in range(nhead):
            qh = q[:, h * hd:(h + 1) * hd] / math.sqrt(hd)
            kh = k[:, h * hd:(h + 1) * hd]
            vh = v[:, h * hd:(h + 1) * hd]
            p = jax.nn.softmax(jnp.dot(qh, kh.T, precision=hi), axis=-1)
            outs.append(jnp.dot(p, vh, precision=hi))
        o = jnp.concatenate(outs, axis=-1)
        return jnp.dot(o, out_w.T, precision=hi) + out_b

    x = tgt
    for p in layers:
        q0 = x
        a = mha(x, x, x, p['sa_in_w'], p['sa_in_b'], p['sa_out_w'], p['sa_out_b'])
        x = ln(x + a, p['g1'], p['be1'])
        a = mha(x, memory, memory, p['ca_in_w'], p['ca_in_b'], p['ca_out_w'], p['ca_out_b'])
        x = ln(x + a, p['g2'], p['be2'])
        hid = jax.nn.relu(jnp.dot(x, p['w1'].T, precision=hi) + p['b1'])
        a = jnp.dot(hid, p['w2'].T, precision=hi) + p['b2']
        x = ln(x + a, p['g3'], p['be3'])
        x = x + q0
    x = ln(x, final_gamma.reshape(-1), final_beta.reshape(-1))
    return x * weight


# ----------------------------- main -----------------------------

if __name__ == "__main__":
    d_model, nhead, num_layers, dim_ff = 32, 4, 2, 64
    L, S = 8, 16  # tgt length, memory length (PyTorch (L,1,E) / (S,1,E), batch squeezed)

    key = jax.random.PRNGKey(0)
    k_tgt, k_mem, k_par, k_fin = jax.random.split(key, 4)
    tgt = jax.random.normal(k_tgt, (L, d_model), jnp.float32)
    memory = jax.random.normal(k_mem, (S, d_model), jnp.float32)

    layer_keys = jax.random.split(k_par, num_layers)
    layers = [init_layer_params(k, d_model, dim_ff) for k in layer_keys]
    packed = pack_params(layers, nhead)

    kg, kb = jax.random.split(k_fin)
    final_gamma = 1.0 + 0.05 * jax.random.normal(kg, (1, d_model), jnp.float32)
    final_beta = 0.05 * jax.random.normal(kb, (1, d_model), jnp.float32)
    weight = 2.0  # Decoder(weight=2.0)

    out = decoder_forward(tgt, memory, packed, final_gamma, final_beta, weight, nhead)
    out = jax.block_until_ready(out)
    assert out.shape == (L, d_model) and out.dtype == jnp.float32

    # Validate against a pure-JAX f32 HIGHEST-precision reference. Tolerances cover bf16 MXU
    # operands (f32 accumulation) and the approximate EUP reciprocal in the softmax; real
    # packing/layout bugs produce O(1) max error and O(0.3) mean error, far above these.
    ref = _reference_decoder(tgt, memory, layers, final_gamma, final_beta, weight, nhead)
    max_err = float(jnp.max(jnp.abs(out - ref)))
    mean_err = float(jnp.mean(jnp.abs(out - ref)))
    assert max_err < 0.30, f"kernel/reference mismatch: max abs err = {max_err}"
    assert mean_err < 0.06, f"kernel/reference mismatch: mean abs err = {mean_err}"
    print("KERNEL_OK")
</pallas_src>

<mosaic_0001>
module attributes {stable_mosaic.version = 11 : i64} {
  func.func @_fused_decoder_kernel(%arg0: memref<8x32xf32, #tpu.memory_space<vmem>>, %arg1: memref<16x32xf32, #tpu.memory_space<vmem>>, %arg2: memref<2x6x32x32xbf16, #tpu.memory_space<vmem>>, %arg3: memref<2x2x32x32xbf16, #tpu.memory_space<vmem>>, %arg4: memref<2x32x64xbf16, #tpu.memory_space<vmem>>, %arg5: memref<2x64x32xbf16, #tpu.memory_space<vmem>>, %arg6: memref<2x16x32xf32, #tpu.memory_space<vmem>>, %arg7: memref<2x1x64xf32, #tpu.memory_space<vmem>>, %arg8: memref<2x32xf32, #tpu.memory_space<vmem>>, %arg9: memref<8x32xf32, #tpu.memory_space<vmem>>) attributes {dimension_semantics = [], scalar_prefetch = 0 : i64, scratch_operands = 0 : i64, tpu.core_type = #tpu.core_type<tc>} {
    %c0 = arith.constant 0 : index
    %c0_0 = arith.constant 0 : index
    %0 = vector.load %arg1[%c0, %c0_0] : memref<16x32xf32, #tpu.memory_space<vmem>>, vector<16x32xf32>
    %1 = arith.truncf %0 : vector<16x32xf32> to vector<16x32xbf16>
    %c0_1 = arith.constant 0 : index
    %c0_2 = arith.constant 0 : index
    %2 = vector.load %arg0[%c0_1, %c0_2] : memref<8x32xf32, #tpu.memory_space<vmem>>, vector<8x32xf32>
    %c0_3 = arith.constant 0 : index
    %c0_4 = arith.constant 0 : index
    %c0_5 = arith.constant 0 : index
    %3 = vector.load %arg6[%c0_3, %c0_4, %c0_5] : memref<2x16x32xf32, #tpu.memory_space<vmem>>, vector<1x16x32xf32>
    %4 = vector.shape_cast %3 : vector<1x16x32xf32> to vector<16x32xf32>
    %5 = arith.truncf %2 : vector<8x32xf32> to vector<8x32xbf16>
    %c0_6 = arith.constant 0 : index
    %c0_7 = arith.constant 0 : index
    %c0_8 = arith.constant 0 : index
    %c0_9 = arith.constant 0 : index
    %6 = vector.load %arg2[%c0_6, %c0_7, %c0_8, %c0_9] : memref<2x6x32x32xbf16, #tpu.memory_space<vmem>>, vector<1x1x32x32xbf16>
    %7 = vector.shape_cast %6 : vector<1x1x32x32xbf16> to vector<32x32xbf16>
    %cst = arith.constant dense<0.000000e+00> : vector<8x32xf32>
    %8 = tpu.matmul %5, %7, %cst {dimension_numbers = #tpu.dot_dimension_numbers<[1], [0], [0], [1], [0, 0, 1, 1], [], []>} : vector<8x32xbf16>, vector<32x32xbf16>, vector<8x32xf32> -> vector<8x32xf32>
    %9 = vector.extract_strided_slice %4 {offsets = [0, 0], sizes = [1, 32], strides = [1, 1]} : vector<16x32xf32> to vector<1x32xf32>
    %10 = vector.broadcast %9 : vector<1x32xf32> to vector<8x32xf32>
    %11 = arith.addf %8, %10 : vector<8x32xf32>
    %c0_10 = arith.constant 0 : index
    %c1 = arith.constant 1 : index
    %c0_11 = arith.constant 0 : index
    %c0_12 = arith.constant 0 : index
    %12 = vector.load %arg2[%c0_10, %c1, %c0_11, %c0_12] : memref<2x6x32x32xbf16, #tpu.memory_space<vmem>>, vector<1x1x32x32xbf16>
    %13 = vector.shape_cast %12 : vector<1x1x32x32xbf16> to vector<32x32xbf16>
    %cst_13 = arith.constant dense<0.000000e+00> : vector<8x32xf32>
    %14 = tpu.matmul %5, %13, %cst_13 {dimension_numbers = #tpu.dot_dimension_numbers<[1], [0], [0], [1], [0, 0, 1, 1], [], []>} : vector<8x32xbf16>, vector<32x32xbf16>, vector<8x32xf32> -> vector<8x32xf32>
    %15 = vector.extract_strided_slice %4 {offsets = [1, 0], sizes = [1, 32], strides = [1, 1]} : vector<16x32xf32> to vector<1x32xf32>
    %16 = vector.broadcast %15 : vector<1x32xf32> to vector<8x32xf32>
    %17 = arith.addf %14, %16 : vector<8x32xf32>
    %c0_14 = arith.constant 0 : index
    %c2 = arith.constant 2 : index
    %c0_15 = arith.constant 0 : index
    %c0_16 = arith.constant 0 : index
    %18 = vector.load %arg2[%c0_14, %c2, %c0_15, %c0_16] : memref<2x6x32x32xbf16, #tpu.memory_space<vmem>>, vector<1x1x32x32xbf16>
    %19 = vector.shape_cast %18 : vector<1x1x32x32xbf16> to vector<32x32xbf16>
    %cst_17 = arith.constant dense<0.000000e+00> : vector<8x32xf32>
    %20 = tpu.matmul %5, %19, %cst_17 {dimension_numbers = #tpu.dot_dimension_numbers<[1], [0], [0], [1], [0, 0, 1, 1], [], []>} : vector<8x32xbf16>, vector<32x32xbf16>, vector<8x32xf32> -> vector<8x32xf32>
    %21 = vector.extract_strided_slice %4 {offsets = [2, 0], sizes = [1, 32], strides = [1, 1]} : vector<16x32xf32> to vector<1x32xf32>
    %22 = vector.broadcast %21 : vector<1x32xf32> to vector<8x32xf32>
    %23 = arith.addf %20, %22 : vector<8x32xf32>
    %c0_18 = arith.constant 0 : index
    %c0_19 = arith.constant 0 : index
    %c0_20 = arith.constant 0 : index
    %c0_21 = arith.constant 0 : index
    %24 = vector.load %arg3[%c0_18, %c0_19, %c0_20, %c0_21] : memref<2x2x32x32xbf16, #tpu.memory_space<vmem>>, vector<1x1x32x32xbf16>
    %25 = vector.shape_cast %24 : vector<1x1x32x32xbf16> to vector<32x32xbf16>
    %26 = vector.extract_strided_slice %4 {offsets = [3, 0], sizes = [1, 32], strides = [1, 1]} : vector<16x32xf32> to vector<1x32xf32>
    %27 = vector.shape_cast %11 : vector<8x32xf32> to vector<8x4x8xf32>
    %28 = tpu.transpose %27, [1, 0, 2] : vector<8x4x8xf32> -> vector<4x8x8xf32>
    %29 = arith.truncf %28 : vector<4x8x8xf32> to vector<4x8x8xbf16>
    %30 = vector.shape_cast %17 : vector<8x32xf32> to vector<8x4x8xf32>
    %31 = tpu.transpose %30, [1, 0, 2] : vector<8x4x8xf32> -> vector<4x8x8xf32>
    %32 = arith.truncf %31 : vector<4x8x8xf32> to vector<4x8x8xbf16>
    %33 = vector.shape_cast %23 : vector<8x32xf32> to vector<8x4x8xf32>
    %34 = tpu.transpose %33, [1, 0, 2] : vector<8x4x8xf32> -> vector<4x8x8xf32>
    %35 = arith.truncf %34 : vector<4x8x8xf32> to vector<4x8x8xbf16>
    "tpu.trace_start"() <{level = 10 : i32, message = "hld,hsd->hls"}> : () -> ()
    %cst_22 = arith.constant dense<0.000000e+00> : vector<4x8x8xf32>
    %36 = tpu.matmul %29, %32, %cst_22 {dimension_numbers = #tpu.dot_dimension_numbers<[2], [2], [1], [1], [0, 0, 0, 1, 1, 1], [0], [0]>} : vector<4x8x8xbf16>, vector<4x8x8xbf16>, vector<4x8x8xf32> -> vector<4x8x8xf32>
    "tpu.trace_stop"() : () -> ()
    %cst_23 = arith.constant dense<0xFF800000> : vector<4x8xf32>
    %37 = vector.multi_reduction <maximumf>, %36, %cst_23 [2] : vector<4x8x8xf32> to vector<4x8xf32>
    %38 = vector.shape_cast %37 : vector<4x8xf32> to vector<4x8x1xf32>
    %39 = vector.broadcast %38 : vector<4x8x1xf32> to vector<4x8x8xf32>
    %40 = arith.subf %36, %39 : vector<4x8x8xf32>
    %41 = math.exp %40 : vector<4x8x8xf32>
    %cst_24 = arith.constant dense<0.000000e+00> : vector<4x8xf32>
    %42 = vector.multi_reduction <add>, %41, %cst_24 [2] : vector<4x8x8xf32> to vector<4x8xf32>
    %43 = vector.shape_cast %42 : vector<4x8xf32> to vector<4x8x1xf32>
    %44 = tpu.reciprocal %43 {approx = true} : vector<4x8x1xf32> -> vector<4x8x1xf32>
    %45 = vector.broadcast %44 : vector<4x8x1xf32> to vector<4x8x8xf32>
    %46 = arith.mulf %41, %45 : vector<4x8x8xf32>
    %47 = arith.truncf %46 : vector<4x8x8xf32> to vector<4x8x8xbf16>
    "tpu.trace_start"() <{level = 10 : i32, message = "hls,hsd->hld"}> : () -> ()
    %cst_25 = arith.constant dense<0.000000e+00> : vector<4x8x8xf32>
    %48 = tpu.matmul %47, %35, %cst_25 {dimension_numbers = #tpu.dot_dimension_numbers<[2], [1], [1], [2], [0, 0, 0, 1, 1, 2], [0], [0]>} : vector<4x8x8xbf16>, vector<4x8x8xbf16>, vector<4x8x8xf32> -> vector<4x8x8xf32>
    "tpu.trace_stop"() : () -> ()
    %49 = tpu.transpose %48, [1, 0, 2] : vector<4x8x8xf32> -> vector<8x4x8xf32>
    %50 = vector.shape_cast %49 : vector<8x4x8xf32> to vector<8x32xf32>
    %51 = arith.truncf %50 : vector<8x32xf32> to vector<8x32xbf16>
    %cst_26 = arith.constant dense<0.000000e+00> : vector<8x32xf32>
    %52 = tpu.matmul %51, %25, %cst_26 {dimension_numbers = #tpu.dot_dimension_numbers<[1], [0], [0], [1], [0, 0, 1, 1], [], []>} : vector<8x32xbf16>, vector<32x32xbf16>, vector<8x32xf32> -> vector<8x32xf32>
    %53 = vector.broadcast %26 : vector<1x32xf32> to vector<8x32xf32>
    %54 = arith.addf %52, %53 : vector<8x32xf32>
    %55 = arith.addf %2, %54 : vector<8x32xf32>
    %56 = vector.extract_strided_slice %4 {offsets = [9, 0], sizes = [1, 32], strides = [1, 1]} : vector<16x32xf32> to vector<1x32xf32>
    %57 = vector.extract_strided_slice %4 {offsets = [10, 0], sizes = [1, 32], strides = [1, 1]} : vector<16x32xf32> to vector<1x32xf32>
    %cst_27 = arith.constant dense<0.000000e+00> : vector<8xf32>
    %58 = vector.multi_reduction <add>, %55, %cst_27 [1] : vector<8x32xf32> to vector<8xf32>
    %59 = vector.shape_cast %58 : vector<8xf32> to vector<8x1xf32>
    %60 = arith.mulf %55, %55 : vector<8x32xf32>
    %cst_28 = arith.constant dense<0.000000e+00> : vector<8xf32>
    %61 = vector.multi_reduction <add>, %60, %cst_28 [1] : vector<8x32xf32> to vector<8xf32>
    %62 = vector.shape_cast %61 : vector<8xf32> to vector<8x1xf32>
    %cst_29 = arith.constant 3.125000e-02 : f32
    %63 = vector.broadcast %cst_29 : f32 to vector<8x1xf32>
    %64 = arith.mulf %59, %63 : vector<8x1xf32>
    %cst_30 = arith.constant 3.125000e-02 : f32
    %65 = vector.broadcast %cst_30 : f32 to vector<8x1xf32>
    %66 = arith.mulf %62, %65 : vector<8x1xf32>
    %67 = arith.mulf %64, %64 : vector<8x1xf32>
    %68 = arith.subf %66, %67 : vector<8x1xf32>
    %69 = vector.broadcast %64 : vector<8x1xf32> to vector<8x32xf32>
    %70 = arith.subf %55, %69 : vector<8x32xf32>
    %cst_31 = arith.constant 9.99999974E-6 : f32
    %71 = vector.broadcast %cst_31 : f32 to vector<8x1xf32>
    %72 = arith.addf %68, %71 : vector<8x1xf32>
    %73 = math.rsqrt %72 : vector<8x1xf32>
    %74 = vector.broadcast %73 : vector<8x1xf32> to vector<8x32xf32>
    %75 = arith.mulf %70, %74 : vector<8x32xf32>
    %76 = vector.broadcast %56 : vector<1x32xf32> to vector<8x32xf32>
    %77 = arith.mulf %75, %76 : vector<8x32xf32>
    %78 = vector.broadcast %57 : vector<1x32xf32> to vector<8x32xf32>
    %79 = arith.addf %77, %78 : vector<8x32xf32>
    %80 = arith.truncf %79 : vector<8x32xf32> to vector<8x32xbf16>
    %c0_32 = arith.constant 0 : index
    %c3 = arith.constant 3 : index
    %c0_33 = arith.constant 0 : index
    %c0_34 = arith.constant 0 : index
    %81 = vector.load %arg2[%c0_32, %c3, %c0_33, %c0_34] : memref<2x6x32x32xbf16, #tpu.memory_space<vmem>>, vector<1x1x32x32xbf16>
    %82 = vector.shape_cast %81 : vector<1x1x32x32xbf16> to vector<32x32xbf16>
    %cst_35 = arith.constant dense<0.000000e+00> : vector<8x32xf32>
    %83 = tpu.matmul %80, %82, %cst_35 {dimension_numbers = #tpu.dot_dimension_numbers<[1], [0], [0], [1], [0, 0, 1, 1], [], []>} : vector<8x32xbf16>, vector<32x32xbf16>, vector<8x32xf32> -> vector<8x32xf32>
    %84 = vector.extract_strided_slice %4 {offsets = [4, 0], sizes = [1, 32], strides = [1, 1]} : vector<16x32xf32> to vector<1x32xf32>
    %85 = vector.broadcast %84 : vector<1x32xf32> to vector<8x32xf32>
    %86 = arith.addf %83, %85 : vector<8x32xf32>
    %c0_36 = arith.constant 0 : index
    %c4 = arith.constant 4 : index
    %c0_37 = arith.constant 0 : index
    %c0_38 = arith.constant 0 : index
    %87 = vector.load %arg2[%c0_36, %c4, %c0_37, %c0_38] : memref<2x6x32x32xbf16, #tpu.memory_space<vmem>>, vector<1x1x32x32xbf16>
    %88 = vector.shape_cast %87 : vector<1x1x32x32xbf16> to vector<32x32xbf16>
    %cst_39 = arith.constant dense<0.000000e+00> : vector<16x32xf32>
    %89 = tpu.matmul %1, %88, %cst_39 {dimension_numbers = #tpu.dot_dimension_numbers<[1], [0], [0], [1], [0, 0, 1, 1], [], []>} : vector<16x32xbf16>, vector<32x32xbf16>, vector<16x32xf32> -> vector<16x32xf32>
    %90 = vector.extract_strided_slice %4 {offsets = [5, 0], sizes = [1, 32], strides = [1, 1]} : vector<16x32xf32> to vector<1x32xf32>
    %91 = vector.broadcast %90 : vector<1x32xf32> to vector<16x32xf32>
    %92 = arith.addf %89, %91 : vector<16x32xf32>
    %c0_40 = arith.constant 0 : index
    %c5 = arith.constant 5 : index
    %c0_41 = arith.constant 0 : index
    %c0_42 = arith.constant 0 : index
    %93 = vector.load %arg2[%c0_40, %c5, %c0_41, %c0_42] : memref<2x6x32x32xbf16, #tpu.memory_space<vmem>>, vector<1x1x32x32xbf16>
    %94 = vector.shape_cast %93 : vector<1x1x32x32xbf16> to vector<32x32xbf16>
    %cst_43 = arith.constant dense<0.000000e+00> : vector<16x32xf32>
    %95 = tpu.matmul %1, %94, %cst_43 {dimension_numbers = #tpu.dot_dimension_numbers<[1], [0], [0], [1], [0, 0, 1, 1], [], []>} : vector<16x32xbf16>, vector<32x32xbf16>, vector<16x32xf32> -> vector<16x32xf32>
    %96 = vector.extract_strided_slice %4 {offsets = [6, 0], sizes = [1, 32], strides = [1, 1]} : vector<16x32xf32> to vector<1x32xf32>
    %97 = vector.broadcast %96 : vector<1x32xf32> to vector<16x32xf32>
    %98 = arith.addf %95, %97 : vector<16x32xf32>
    %c0_44 = arith.constant 0 : index
    %c1_45 = arith.constant 1 : index
    %c0_46 = arith.constant 0 : index
    %c0_47 = arith.constant 0 : index
    %99 = vector.load %arg3[%c0_44, %c1_45, %c0_46, %c0_47] : memref<2x2x32x32xbf16, #tpu.memory_space<vmem>>, vector<1x1x32x32xbf16>
    %100 = vector.shape_cast %99 : vector<1x1x32x32xbf16> to vector<32x32xbf16>
    %101 = vector.extract_strided_slice %4 {offsets = [7, 0], sizes = [1, 32], strides = [1, 1]} : vector<16x32xf32> to vector<1x32xf32>
    %102 = vector.shape_cast %86 : vector<8x32xf32> to vector<8x4x8xf32>
    %103 = tpu.transpose %102, [1, 0, 2] : vector<8x4x8xf32> -> vector<4x8x8xf32>
    %104 = arith.truncf %103 : vector<4x8x8xf32> to vector<4x8x8xbf16>
    %105 = vector.shape_cast %92 : vector<16x32xf32> to vector<16x4x8xf32>
    %106 = tpu.transpose %105, [1, 0, 2] : vector<16x4x8xf32> -> vector<4x16x8xf32>
    %107 = arith.truncf %106 : vector<4x16x8xf32> to vector<4x16x8xbf16>
    %108 = vector.shape_cast %98 : vector<16x32xf32> to vector<16x4x8xf32>
    %109 = tpu.transpose %108, [1, 0, 2] : vector<16x4x8xf32> -> vector<4x16x8xf32>
    %110 = arith.truncf %109 : vector<4x16x8xf32> to vector<4x16x8xbf16>
    "tpu.trace_start"() <{level = 10 : i32, message = "hld,hsd->hls"}> : () -> ()
    %cst_48 = arith.constant dense<0.000000e+00> : vector<4x8x16xf32>
    %111 = tpu.matmul %104, %107, %cst_48 {dimension_numbers = #tpu.dot_dimension_numbers<[2], [2], [1], [1], [0, 0, 0, 1, 1, 1], [0], [0]>} : vector<4x8x8xbf16>, vector<4x16x8xbf16>, vector<4x8x16xf32> -> vector<4x8x16xf32>
    "tpu.trace_stop"() : () -> ()
    %cst_49 = arith.constant dense<0xFF800000> : vector<4x8xf32>
    %112 = vector.multi_reduction <maximumf>, %111, %cst_49 [2] : vector<4x8x16xf32> to vector<4x8xf32>
    %113 = vector.shape_cast %112 : vector<4x8xf32> to vector<4x8x1xf32>
    %114 = vector.broadcast %113 : vector<4x8x1xf32> to vector<4x8x16xf32>
    %115 = arith.subf %111, %114 : vector<4x8x16xf32>
    %116 = math.exp %115 : vector<4x8x16xf32>
    %cst_50 = arith.constant dense<0.000000e+00> : vector<4x8xf32>
    %117 = vector.multi_reduction <add>, %116, %cst_50 [2] : vector<4x8x16xf32> to vector<4x8xf32>
    %118 = vector.shape_cast %117 : vector<4x8xf32> to vector<4x8x1xf32>
    %119 = tpu.reciprocal %118 {approx = true} : vector<4x8x1xf32> -> vector<4x8x1xf32>
    %120 = vector.broadcast %119 : vector<4x8x1xf32> to vector<4x8x16xf32>
    %121 = arith.mulf %116, %120 : vector<4x8x16xf32>
    %122 = arith.truncf %121 : vector<4x8x16xf32> to vector<4x8x16xbf16>
    "tpu.trace_start"() <{level = 10 : i32, message = "hls,hsd->hld"}> : () -> ()
    %cst_51 = arith.constant dense<0.000000e+00> : vector<4x8x8xf32>
    %123 = tpu.matmul %122, %110, %cst_51 {dimension_numbers = #tpu.dot_dimension_numbers<[2], [1], [1], [2], [0, 0, 0, 1, 1, 2], [0], [0]>} : vector<4x8x16xbf16>, vector<4x16x8xbf16>, vector<4x8x8xf32> -> vector<4x8x8xf32>
    "tpu.trace_stop"() : () -> ()
    %124 = tpu.transpose %123, [1, 0, 2] : vector<4x8x8xf32> -> vector<8x4x8xf32>
    %125 = vector.shape_cast %124 : vector<8x4x8xf32> to vector<8x32xf32>
    %126 = arith.truncf %125 : vector<8x32xf32> to vector<8x32xbf16>
    %cst_52 = arith.constant dense<0.000000e+00> : vector<8x32xf32>
    %127 = tpu.matmul %126, %100, %cst_52 {dimension_numbers = #tpu.dot_dimension_numbers<[1], [0], [0], [1], [0, 0, 1, 1], [], []>} : vector<8x32xbf16>, vector<32x32xbf16>, vector<8x32xf32> -> vector<8x32xf32>
    %128 = vector.broadcast %101 : vector<1x32xf32> to vector<8x32xf32>
    %129 = arith.addf %127, %128 : vector<8x32xf32>
    %130 = arith.addf %79, %129 : vector<8x32xf32>
    %131 = vector.extract_strided_slice %4 {offsets = [11, 0], sizes = [1, 32], strides = [1, 1]} : vector<16x32xf32> to vector<1x32xf32>
    %132 = vector.extract_strided_slice %4 {offsets = [12, 0], sizes = [1, 32], strides = [1, 1]} : vector<16x32xf32> to vector<1x32xf32>
    %cst_53 = arith.constant dense<0.000000e+00> : vector<8xf32>
    %133 = vector.multi_reduction <add>, %130, %cst_53 [1] : vector<8x32xf32> to vector<8xf32>
    %134 = vector.shape_cast %133 : vector<8xf32> to vector<8x1xf32>
    %135 = arith.mulf %130, %130 : vector<8x32xf32>
    %cst_54 = arith.constant dense<0.000000e+00> : vector<8xf32>
    %136 = vector.multi_reduction <add>, %135, %cst_54 [1] : vector<8x32xf32> to vector<8xf32>
    %137 = vector.shape_cast %136 : vector<8xf32> to vector<8x1xf32>
    %cst_55 = arith.constant 3.125000e-02 : f32
    %138 = vector.broadcast %cst_55 : f32 to vector<8x1xf32>
    %139 = arith.mulf %134, %138 : vector<8x1xf32>
    %cst_56 = arith.constant 3.125000e-02 : f32
    %140 = vector.broadcast %cst_56 : f32 to vector<8x1xf32>
    %141 = arith.mulf %137, %140 : vector<8x1xf32>
    %142 = arith.mulf %139, %139 : vector<8x1xf32>
    %143 = arith.subf %141, %142 : vector<8x1xf32>
    %144 = vector.broadcast %139 : vector<8x1xf32> to vector<8x32xf32>
    %145 = arith.subf %130, %144 : vector<8x32xf32>
    %cst_57 = arith.constant 9.99999974E-6 : f32
    %146 = vector.broadcast %cst_57 : f32 to vector<8x1xf32>
    %147 = arith.addf %143, %146 : vector<8x1xf32>
    %148 = math.rsqrt %147 : vector<8x1xf32>
    %149 = vector.broadcast %148 : vector<8x1xf32> to vector<8x32xf32>
    %150 = arith.mulf %145, %149 : vector<8x32xf32>
    %151 = vector.broadcast %131 : vector<1x32xf32> to vector<8x32xf32>
    %152 = arith.mulf %150, %151 : vector<8x32xf32>
    %153 = vector.broadcast %132 : vector<1x32xf32> to vector<8x32xf32>
    %154 = arith.addf %152, %153 : vector<8x32xf32>
    %155 = arith.truncf %154 : vector<8x32xf32> to vector<8x32xbf16>
    %c0_58 = arith.constant 0 : index
    %c0_59 = arith.constant 0 : index
    %c0_60 = arith.constant 0 : index
    %156 = vector.load %arg4[%c0_58, %c0_59, %c0_60] : memref<2x32x64xbf16, #tpu.memory_space<vmem>>, vector<1x32x64xbf16>
    %157 = vector.shape_cast %156 : vector<1x32x64xbf16> to vector<32x64xbf16>
    %cst_61 = arith.constant dense<0.000000e+00> : vector<8x64xf32>
    %158 = tpu.matmul %155, %157, %cst_61 {dimension_numbers = #tpu.dot_dimension_numbers<[1], [0], [0], [1], [0, 0, 1, 1], [], []>} : vector<8x32xbf16>, vector<32x64xbf16>, vector<8x64xf32> -> vector<8x64xf32>
    %c0_62 = arith.constant 0 : index
    %c0_63 = arith.constant 0 : index
    %c0_64 = arith.constant 0 : index
    %159 = vector.load %arg7[%c0_62, %c0_63, %c0_64] : memref<2x1x64xf32, #tpu.memory_space<vmem>>, vector<1x1x64xf32>
    %160 = vector.shape_cast %159 : vector<1x1x64xf32> to vector<1x64xf32>
    %161 = vector.broadcast %160 : vector<1x64xf32> to vector<8x64xf32>
    %162 = arith.addf %158, %161 : vector<8x64xf32>
    %cst_65 = arith.constant 0.000000e+00 : f32
    %163 = vector.broadcast %cst_65 : f32 to vector<8x64xf32>
    %164 = arith.maximumf %162, %163 : vector<8x64xf32>
    %165 = arith.truncf %164 : vector<8x64xf32> to vector<8x64xbf16>
    %c0_66 = arith.constant 0 : index
    %c0_67 = arith.constant 0 : index
    %c0_68 = arith.constant 0 : index
    %166 = vector.load %arg5[%c0_66, %c0_67, %c0_68] : memref<2x64x32xbf16, #tpu.memory_space<vmem>>, vector<1x64x32xbf16>
    %167 = vector.shape_cast %166 : vector<1x64x32xbf16> to vector<64x32xbf16>
    %cst_69 = arith.constant dense<0.000000e+00> : vector<8x32xf32>
    %168 = tpu.matmul %165, %167, %cst_69 {dimension_numbers = #tpu.dot_dimension_numbers<[1], [0], [0], [1], [0, 0, 1, 1], [], []>} : vector<8x64xbf16>, vector<64x32xbf16>, vector<8x32xf32> -> vector<8x32xf32>
    %169 = vector.extract_strided_slice %4 {offsets = [8, 0], sizes = [1, 32], strides = [1, 1]} : vector<16x32xf32> to vector<1x32xf32>
    %170 = vector.broadcast %169 : vector<1x32xf32> to vector<8x32xf32>
    %171 = arith.addf %168, %170 : vector<8x32xf32>
    %172 = arith.addf %154, %171 : vector<8x32xf32>
    %173 = vector.extract_strided_slice %4 {offsets = [13, 0], sizes = [1, 32], strides = [1, 1]} : vector<16x32xf32> to vector<1x32xf32>
    %174 = vector.extract_strided_slice %4 {offsets = [14, 0], sizes = [1, 32], strides = [1, 1]} : vector<16x32xf32> to vector<1x32xf32>
    %cst_70 = arith.constant dense<0.000000e+00> : vector<8xf32>
    %175 = vector.multi_reduction <add>, %172, %cst_70 [1] : vector<8x32xf32> to vector<8xf32>
    %176 = vector.shape_cast %175 : vector<8xf32> to vector<8x1xf32>
    %177 = arith.mulf %172, %172 : vector<8x32xf32>
    %cst_71 = arith.constant dense<0.000000e+00> : vector<8xf32>
    %178 = vector.multi_reduction <add>, %177, %cst_71 [1] : vector<8x32xf32> to vector<8xf32>
    %179 = vector.shape_cast %178 : vector<8xf32> to vector<8x1xf32>
    %cst_72 = arith.constant 3.125000e-02 : f32
    %180 = vector.broadcast %cst_72 : f32 to vector<8x1xf32>
    %181 = arith.mulf %176, %180 : vector<8x1xf32>
    %cst_73 = arith.constant 3.125000e-02 : f32
    %182 = vector.broadcast %cst_73 : f32 to vector<8x1xf32>
    %183 = arith.mulf %179, %182 : vector<8x1xf32>
    %184 = arith.mulf %181, %181 : vector<8x1xf32>
    %185 = arith.subf %183, %184 : vector<8x1xf32>
    %186 = vector.broadcast %181 : vector<8x1xf32> to vector<8x32xf32>
    %187 = arith.subf %172, %186 : vector<8x32xf32>
    %cst_74 = arith.constant 9.99999974E-6 : f32
    %188 = vector.broadcast %cst_74 : f32 to vector<8x1xf32>
    %189 = arith.addf %185, %188 : vector<8x1xf32>
    %190 = math.rsqrt %189 : vector<8x1xf32>
    %191 = vector.broadcast %190 : vector<8x1xf32> to vector<8x32xf32>
    %192 = arith.mulf %187, %191 : vector<8x32xf32>
    %193 = vector.broadcast %173 : vector<1x32xf32> to vector<8x32xf32>
    %194 = arith.mulf %192, %193 : vector<8x32xf32>
    %195 = vector.broadcast %174 : vector<1x32xf32> to vector<8x32xf32>
    %196 = arith.addf %194, %195 : vector<8x32xf32>
    %197 = arith.addf %196, %2 : vector<8x32xf32>
    %c1_75 = arith.constant 1 : index
    %c0_76 = arith.constant 0 : index
    %c0_77 = arith.constant 0 : index
    %198 = vector.load %arg6[%c1_75, %c0_76, %c0_77] : memref<2x16x32xf32, #tpu.memory_space<vmem>>, vector<1x16x32xf32>
    %199 = vector.shape_cast %198 : vector<1x16x32xf32> to vector<16x32xf32>
    %200 = arith.truncf %197 : vector<8x32xf32> to vector<8x32xbf16>
    %c1_78 = arith.constant 1 : index
    %c0_79 = arith.constant 0 : index
    %c0_80 = arith.constant 0 : index
    %c0_81 = arith.constant 0 : index
    %201 = vector.load %arg2[%c1_78, %c0_79, %c0_80, %c0_81] : memref<2x6x32x32xbf16, #tpu.memory_space<vmem>>, vector<1x1x32x32xbf16>
    %202 = vector.shape_cast %201 : vector<1x1x32x32xbf16> to vector<32x32xbf16>
    %cst_82 = arith.constant dense<0.000000e+00> : vector<8x32xf32>
    %203 = tpu.matmul %200, %202, %cst_82 {dimension_numbers = #tpu.dot_dimension_numbers<[1], [0], [0], [1], [0, 0, 1, 1], [], []>} : vector<8x32xbf16>, vector<32x32xbf16>, vector<8x32xf32> -> vector<8x32xf32>
    %204 = vector.extract_strided_slice %199 {offsets = [0, 0], sizes = [1, 32], strides = [1, 1]} : vector<16x32xf32> to vector<1x32xf32>
    %205 = vector.broadcast %204 : vector<1x32xf32> to vector<8x32xf32>
    %206 = arith.addf %203, %205 : vector<8x32xf32>
    %c1_83 = arith.constant 1 : index
    %c1_84 = arith.constant 1 : index
    %c0_85 = arith.constant 0 : index
    %c0_86 = arith.constant 0 : index
    %207 = vector.load %arg2[%c1_83, %c1_84, %c0_85, %c0_86] : memref<2x6x32x32xbf16, #tpu.memory_space<vmem>>, vector<1x1x32x32xbf16>
    %208 = vector.shape_cast %207 : vector<1x1x32x32xbf16> to vector<32x32xbf16>
    %cst_87 = arith.constant dense<0.000000e+00> : vector<8x32xf32>
    %209 = tpu.matmul %200, %208, %cst_87 {dimension_numbers = #tpu.dot_dimension_numbers<[1], [0], [0], [1], [0, 0, 1, 1], [], []>} : vector<8x32xbf16>, vector<32x32xbf16>, vector<8x32xf32> -> vector<8x32xf32>
    %210 = vector.extract_strided_slice %199 {offsets = [1, 0], sizes = [1, 32], strides = [1, 1]} : vector<16x32xf32> to vector<1x32xf32>
    %211 = vector.broadcast %210 : vector<1x32xf32> to vector<8x32xf32>
    %212 = arith.addf %209, %211 : vector<8x32xf32>
    %c1_88 = arith.constant 1 : index
    %c2_89 = arith.constant 2 : index
    %c0_90 = arith.constant 0 : index
    %c0_91 = arith.constant 0 : index
    %213 = vector.load %arg2[%c1_88, %c2_89, %c0_90, %c0_91] : memref<2x6x32x32xbf16, #tpu.memory_space<vmem>>, vector<1x1x32x32xbf16>
    %214 = vector.shape_cast %213 : vector<1x1x32x32xbf16> to vector<32x32xbf16>
    %cst_92 = arith.constant dense<0.000000e+00> : vector<8x32xf32>
    %215 = tpu.matmul %200, %214, %cst_92 {dimension_numbers = #tpu.dot_dimension_numbers<[1], [0], [0], [1], [0, 0, 1, 1], [], []>} : vector<8x32xbf16>, vector<32x32xbf16>, vector<8x32xf32> -> vector<8x32xf32>
    %216 = vector.extract_strided_slice %199 {offsets = [2, 0], sizes = [1, 32], strides = [1, 1]} : vector<16x32xf32> to vector<1x32xf32>
    %217 = vector.broadcast %216 : vector<1x32xf32> to vector<8x32xf32>
    %218 = arith.addf %215, %217 : vector<8x32xf32>
    %c1_93 = arith.constant 1 : index
    %c0_94 = arith.constant 0 : index
    %c0_95 = arith.constant 0 : index
    %c0_96 = arith.constant 0 : index
    %219 = vector.load %arg3[%c1_93, %c0_94, %c0_95, %c0_96] : memref<2x2x32x32xbf16, #tpu.memory_space<vmem>>, vector<1x1x32x32xbf16>
    %220 = vector.shape_cast %219 : vector<1x1x32x32xbf16> to vector<32x32xbf16>
    %221 = vector.extract_strided_slice %199 {offsets = [3, 0], sizes = [1, 32], strides = [1, 1]} : vector<16x32xf32> to vector<1x32xf32>
    %222 = vector.shape_cast %206 : vector<8x32xf32> to vector<8x4x8xf32>
    %223 = tpu.transpose %222, [1, 0, 2] : vector<8x4x8xf32> -> vector<4x8x8xf32>
    %224 = arith.truncf %223 : vector<4x8x8xf32> to vector<4x8x8xbf16>
    %225 = vector.shape_cast %212 : vector<8x32xf32> to vector<8x4x8xf32>
    %226 = tpu.transpose %225, [1, 0, 2] : vector<8x4x8xf32> -> vector<4x8x8xf32>
    %227 = arith.truncf %226 : vector<4x8x8xf32> to vector<4x8x8xbf16>
    %228 = vector.shape_cast %218 : vector<8x32xf32> to vector<8x4x8xf32>
    %229 = tpu.transpose %228, [1, 0, 2] : vector<8x4x8xf32> -> vector<4x8x8xf32>
    %230 = arith.truncf %229 : vector<4x8x8xf32> to vector<4x8x8xbf16>
    "tpu.trace_start"() <{level = 10 : i32, message = "hld,hsd->hls"}> : () -> ()
    %cst_97 = arith.constant dense<0.000000e+00> : vector<4x8x8xf32>
    %231 = tpu.matmul %224, %227, %cst_97 {dimension_numbers = #tpu.dot_dimension_numbers<[2], [2], [1], [1], [0, 0, 0, 1, 1, 1], [0], [0]>} : vector<4x8x8xbf16>, vector<4x8x8xbf16>, vector<4x8x8xf32> -> vector<4x8x8xf32>
    "tpu.trace_stop"() : () -> ()
    %cst_98 = arith.constant dense<0xFF800000> : vector<4x8xf32>
    %232 = vector.multi_reduction <maximumf>, %231, %cst_98 [2] : vector<4x8x8xf32> to vector<4x8xf32>
    %233 = vector.shape_cast %232 : vector<4x8xf32> to vector<4x8x1xf32>
    %234 = vector.broadcast %233 : vector<4x8x1xf32> to vector<4x8x8xf32>
    %235 = arith.subf %231, %234 : vector<4x8x8xf32>
    %236 = math.exp %235 : vector<4x8x8xf32>
    %cst_99 = arith.constant dense<0.000000e+00> : vector<4x8xf32>
    %237 = vector.multi_reduction <add>, %236, %cst_99 [2] : vector<4x8x8xf32> to vector<4x8xf32>
    %238 = vector.shape_cast %237 : vector<4x8xf32> to vector<4x8x1xf32>
    %239 = tpu.reciprocal %238 {approx = true} : vector<4x8x1xf32> -> vector<4x8x1xf32>
    %240 = vector.broadcast %239 : vector<4x8x1xf32> to vector<4x8x8xf32>
    %241 = arith.mulf %236, %240 : vector<4x8x8xf32>
    %242 = arith.truncf %241 : vector<4x8x8xf32> to vector<4x8x8xbf16>
    "tpu.trace_start"() <{level = 10 : i32, message = "hls,hsd->hld"}> : () -> ()
    %cst_100 = arith.constant dense<0.000000e+00> : vector<4x8x8xf32>
    %243 = tpu.matmul %242, %230, %cst_100 {dimension_numbers = #tpu.dot_dimension_numbers<[2], [1], [1], [2], [0, 0, 0, 1, 1, 2], [0], [0]>} : vector<4x8x8xbf16>, vector<4x8x8xbf16>, vector<4x8x8xf32> -> vector<4x8x8xf32>
    "tpu.trace_stop"() : () -> ()
    %244 = tpu.transpose %243, [1, 0, 2] : vector<4x8x8xf32> -> vector<8x4x8xf32>
    %245 = vector.shape_cast %244 : vector<8x4x8xf32> to vector<8x32xf32>
    %246 = arith.truncf %245 : vector<8x32xf32> to vector<8x32xbf16>
    %cst_101 = arith.constant dense<0.000000e+00> : vector<8x32xf32>
    %247 = tpu.matmul %246, %220, %cst_101 {dimension_numbers = #tpu.dot_dimension_numbers<[1], [0], [0], [1], [0, 0, 1, 1], [], []>} : vector<8x32xbf16>, vector<32x32xbf16>, vector<8x32xf32> -> vector<8x32xf32>
    %248 = vector.broadcast %221 : vector<1x32xf32> to vector<8x32xf32>
    %249 = arith.addf %247, %248 : vector<8x32xf32>
    %250 = arith.addf %197, %249 : vector<8x32xf32>
    %251 = vector.extract_strided_slice %199 {offsets = [9, 0], sizes = [1, 32], strides = [1, 1]} : vector<16x32xf32> to vector<1x32xf32>
    %252 = vector.extract_strided_slice %199 {offsets = [10, 0], sizes = [1, 32], strides = [1, 1]} : vector<16x32xf32> to vector<1x32xf32>
    %cst_102 = arith.constant dense<0.000000e+00> : vector<8xf32>
    %253 = vector.multi_reduction <add>, %250, %cst_102 [1] : vector<8x32xf32> to vector<8xf32>
    %254 = vector.shape_cast %253 : vector<8xf32> to vector<8x1xf32>
    %255 = arith.mulf %250, %250 : vector<8x32xf32>
    %cst_103 = arith.constant dense<0.000000e+00> : vector<8xf32>
    %256 = vector.multi_reduction <add>, %255, %cst_103 [1] : vector<8x32xf32> to vector<8xf32>
    %257 = vector.shape_cast %256 : vector<8xf32> to vector<8x1xf32>
    %cst_104 = arith.constant 3.125000e-02 : f32
    %258 = vector.broadcast %cst_104 : f32 to vector<8x1xf32>
    %259 = arith.mulf %254, %258 : vector<8x1xf32>
    %cst_105 = arith.constant 3.125000e-02 : f32
    %260 = vector.broadcast %cst_105 : f32 to vector<8x1xf32>
    %261 = arith.mulf %257, %260 : vector<8x1xf32>
    %262 = arith.mulf %259, %259 : vector<8x1xf32>
    %263 = arith.subf %261, %262 : vector<8x1xf32>
    %264 = vector.broadcast %259 : vector<8x1xf32> to vector<8x32xf32>
    %265 = arith.subf %250, %264 : vector<8x32xf32>
    %cst_106 = arith.constant 9.99999974E-6 : f32
    %266 = vector.broadcast %cst_106 : f32 to vector<8x1xf32>
    %267 = arith.addf %263, %266 : vector<8x1xf32>
    %268 = math.rsqrt %267 : vector<8x1xf32>
    %269 = vector.broadcast %268 : vector<8x1xf32> to vector<8x32xf32>
    %270 = arith.mulf %265, %269 : vector<8x32xf32>
    %271 = vector.broadcast %251 : vector<1x32xf32> to vector<8x32xf32>
    %272 = arith.mulf %270, %271 : vector<8x32xf32>
    %273 = vector.broadcast %252 : vector<1x32xf32> to vector<8x32xf32>
    %274 = arith.addf %272, %273 : vector<8x32xf32>
    %275 = arith.truncf %274 : vector<8x32xf32> to vector<8x32xbf16>
    %c1_107 = arith.constant 1 : index
    %c3_108 = arith.constant 3 : index
    %c0_109 = arith.constant 0 : index
    %c0_110 = arith.constant 0 : index
    %276 = vector.load %arg2[%c1_107, %c3_108, %c0_109, %c0_110] : memref<2x6x32x32xbf16, #tpu.memory_space<vmem>>, vector<1x1x32x32xbf16>
    %277 = vector.shape_cast %276 : vector<1x1x32x32xbf16> to vector<32x32xbf16>
    %cst_111 = arith.constant dense<0.000000e+00> : vector<8x32xf32>
    %278 = tpu.matmul %275, %277, %cst_111 {dimension_numbers = #tpu.dot_dimension_numbers<[1], [0], [0], [1], [0, 0, 1, 1], [], []>} : vector<8x32xbf16>, vector<32x32xbf16>, vector<8x32xf32> -> vector<8x32xf32>
    %279 = vector.extract_strided_slice %199 {offsets = [4, 0], sizes = [1, 32], strides = [1, 1]} : vector<16x32xf32> to vector<1x32xf32>
    %280 = vector.broadcast %279 : vector<1x32xf32> to vector<8x32xf32>
    %281 = arith.addf %278, %280 : vector<8x32xf32>
    %c1_112 = arith.constant 1 : index
    %c4_113 = arith.constant 4 : index
    %c0_114 = arith.constant 0 : index
    %c0_115 = arith.constant 0 : index
    %282 = vector.load %arg2[%c1_112, %c4_113, %c0_114, %c0_115] : memref<2x6x32x32xbf16, #tpu.memory_space<vmem>>, vector<1x1x32x32xbf16>
    %283 = vector.shape_cast %282 : vector<1x1x32x32xbf16> to vector<32x32xbf16>
    %cst_116 = arith.constant dense<0.000000e+00> : vector<16x32xf32>
    %284 = tpu.matmul %1, %283, %cst_116 {dimension_numbers = #tpu.dot_dimension_numbers<[1], [0], [0], [1], [0, 0, 1, 1], [], []>} : vector<16x32xbf16>, vector<32x32xbf16>, vector<16x32xf32> -> vector<16x32xf32>
    %285 = vector.extract_strided_slice %199 {offsets = [5, 0], sizes = [1, 32], strides = [1, 1]} : vector<16x32xf32> to vector<1x32xf32>
    %286 = vector.broadcast %285 : vector<1x32xf32> to vector<16x32xf32>
    %287 = arith.addf %284, %286 : vector<16x32xf32>
    %c1_117 = arith.constant 1 : index
    %c5_118 = arith.constant 5 : index
    %c0_119 = arith.constant 0 : index
    %c0_120 = arith.constant 0 : index
    %288 = vector.load %arg2[%c1_117, %c5_118, %c0_119, %c0_120] : memref<2x6x32x32xbf16, #tpu.memory_space<vmem>>, vector<1x1x32x32xbf16>
    %289 = vector.shape_cast %288 : vector<1x1x32x32xbf16> to vector<32x32xbf16>
    %cst_121 = arith.constant dense<0.000000e+00> : vector<16x32xf32>
    %290 = tpu.matmul %1, %289, %cst_121 {dimension_numbers = #tpu.dot_dimension_numbers<[1], [0], [0], [1], [0, 0, 1, 1], [], []>} : vector<16x32xbf16>, vector<32x32xbf16>, vector<16x32xf32> -> vector<16x32xf32>
    %291 = vector.extract_strided_slice %199 {offsets = [6, 0], sizes = [1, 32], strides = [1, 1]} : vector<16x32xf32> to vector<1x32xf32>
    %292 = vector.broadcast %291 : vector<1x32xf32> to vector<16x32xf32>
    %293 = arith.addf %290, %292 : vector<16x32xf32>
    %c1_122 = arith.constant 1 : index
    %c1_123 = arith.constant 1 : index
    %c0_124 = arith.constant 0 : index
    %c0_125 = arith.constant 0 : index
    %294 = vector.load %arg3[%c1_122, %c1_123, %c0_124, %c0_125] : memref<2x2x32x32xbf16, #tpu.memory_space<vmem>>, vector<1x1x32x32xbf16>
    %295 = vector.shape_cast %294 : vector<1x1x32x32xbf16> to vector<32x32xbf16>
    %296 = vector.extract_strided_slice %199 {offsets = [7, 0], sizes = [1, 32], strides = [1, 1]} : vector<16x32xf32> to vector<1x32xf32>
    %297 = vector.shape_cast %281 : vector<8x32xf32> to vector<8x4x8xf32>
    %298 = tpu.transpose %297, [1, 0, 2] : vector<8x4x8xf32> -> vector<4x8x8xf32>
    %299 = arith.truncf %298 : vector<4x8x8xf32> to vector<4x8x8xbf16>
    %300 = vector.shape_cast %287 : vector<16x32xf32> to vector<16x4x8xf32>
    %301 = tpu.transpose %300, [1, 0, 2] : vector<16x4x8xf32> -> vector<4x16x8xf32>
    %302 = arith.truncf %301 : vector<4x16x8xf32> to vector<4x16x8xbf16>
    %303 = vector.shape_cast %293 : vector<16x32xf32> to vector<16x4x8xf32>
    %304 = tpu.transpose %303, [1, 0, 2] : vector<16x4x8xf32> -> vector<4x16x8xf32>
    %305 = arith.truncf %304 : vector<4x16x8xf32> to vector<4x16x8xbf16>
    "tpu.trace_start"() <{level = 10 : i32, message = "hld,hsd->hls"}> : () -> ()
    %cst_126 = arith.constant dense<0.000000e+00> : vector<4x8x16xf32>
    %306 = tpu.matmul %299, %302, %cst_126 {dimension_numbers = #tpu.dot_dimension_numbers<[2], [2], [1], [1], [0, 0, 0, 1, 1, 1], [0], [0]>} : vector<4x8x8xbf16>, vector<4x16x8xbf16>, vector<4x8x16xf32> -> vector<4x8x16xf32>
    "tpu.trace_stop"() : () -> ()
    %cst_127 = arith.constant dense<0xFF800000> : vector<4x8xf32>
    %307 = vector.multi_reduction <maximumf>, %306, %cst_127 [2] : vector<4x8x16xf32> to vector<4x8xf32>
    %308 = vector.shape_cast %307 : vector<4x8xf32> to vector<4x8x1xf32>
    %309 = vector.broadcast %308 : vector<4x8x1xf32> to vector<4x8x16xf32>
    %310 = arith.subf %306, %309 : vector<4x8x16xf32>
    %311 = math.exp %310 : vector<4x8x16xf32>
    %cst_128 = arith.constant dense<0.000000e+00> : vector<4x8xf32>
    %312 = vector.multi_reduction <add>, %311, %cst_128 [2] : vector<4x8x16xf32> to vector<4x8xf32>
    %313 = vector.shape_cast %312 : vector<4x8xf32> to vector<4x8x1xf32>
    %314 = tpu.reciprocal %313 {approx = true} : vector<4x8x1xf32> -> vector<4x8x1xf32>
    %315 = vector.broadcast %314 : vector<4x8x1xf32> to vector<4x8x16xf32>
    %316 = arith.mulf %311, %315 : vector<4x8x16xf32>
    %317 = arith.truncf %316 : vector<4x8x16xf32> to vector<4x8x16xbf16>
    "tpu.trace_start"() <{level = 10 : i32, message = "hls,hsd->hld"}> : () -> ()
    %cst_129 = arith.constant dense<0.000000e+00> : vector<4x8x8xf32>
    %318 = tpu.matmul %317, %305, %cst_129 {dimension_numbers = #tpu.dot_dimension_numbers<[2], [1], [1], [2], [0, 0, 0, 1, 1, 2], [0], [0]>} : vector<4x8x16xbf16>, vector<4x16x8xbf16>, vector<4x8x8xf32> -> vector<4x8x8xf32>
    "tpu.trace_stop"() : () -> ()
    %319 = tpu.transpose %318, [1, 0, 2] : vector<4x8x8xf32> -> vector<8x4x8xf32>
    %320 = vector.shape_cast %319 : vector<8x4x8xf32> to vector<8x32xf32>
    %321 = arith.truncf %320 : vector<8x32xf32> to vector<8x32xbf16>
    %cst_130 = arith.constant dense<0.000000e+00> : vector<8x32xf32>
    %322 = tpu.matmul %321, %295, %cst_130 {dimension_numbers = #tpu.dot_dimension_numbers<[1], [0], [0], [1], [0, 0, 1, 1], [], []>} : vector<8x32xbf16>, vector<32x32xbf16>, vector<8x32xf32> -> vector<8x32xf32>
    %323 = vector.broadcast %296 : vector<1x32xf32> to vector<8x32xf32>
    %324 = arith.addf %322, %323 : vector<8x32xf32>
    %325 = arith.addf %274, %324 : vector<8x32xf32>
    %326 = vector.extract_strided_slice %199 {offsets = [11, 0], sizes = [1, 32], strides = [1, 1]} : vector<16x32xf32> to vector<1x32xf32>
    %327 = vector.extract_strided_slice %199 {offsets = [12, 0], sizes = [1, 32], strides = [1, 1]} : vector<16x32xf32> to vector<1x32xf32>
    %cst_131 = arith.constant dense<0.000000e+00> : vector<8xf32>
    %328 = vector.multi_reduction <add>, %325, %cst_131 [1] : vector<8x32xf32> to vector<8xf32>
    %329 = vector.shape_cast %328 : vector<8xf32> to vector<8x1xf32>
    %330 = arith.mulf %325, %325 : vector<8x32xf32>
    %cst_132 = arith.constant dense<0.000000e+00> : vector<8xf32>
    %331 = vector.multi_reduction <add>, %330, %cst_132 [1] : vector<8x32xf32> to vector<8xf32>
    %332 = vector.shape_cast %331 : vector<8xf32> to vector<8x1xf32>
    %cst_133 = arith.constant 3.125000e-02 : f32
    %333 = vector.broadcast %cst_133 : f32 to vector<8x1xf32>
    %334 = arith.mulf %329, %333 : vector<8x1xf32>
    %cst_134 = arith.constant 3.125000e-02 : f32
    %335 = vector.broadcast %cst_134 : f32 to vector<8x1xf32>
    %336 = arith.mulf %332, %335 : vector<8x1xf32>
    %337 = arith.mulf %334, %334 : vector<8x1xf32>
    %338 = arith.subf %336, %337 : vector<8x1xf32>
    %339 = vector.broadcast %334 : vector<8x1xf32> to vector<8x32xf32>
    %340 = arith.subf %325, %339 : vector<8x32xf32>
    %cst_135 = arith.constant 9.99999974E-6 : f32
    %341 = vector.broadcast %cst_135 : f32 to vector<8x1xf32>
    %342 = arith.addf %338, %341 : vector<8x1xf32>
    %343 = math.rsqrt %342 : vector<8x1xf32>
    %344 = vector.broadcast %343 : vector<8x1xf32> to vector<8x32xf32>
    %345 = arith.mulf %340, %344 : vector<8x32xf32>
    %346 = vector.broadcast %326 : vector<1x32xf32> to vector<8x32xf32>
    %347 = arith.mulf %345, %346 : vector<8x32xf32>
    %348 = vector.broadcast %327 : vector<1x32xf32> to vector<8x32xf32>
    %349 = arith.addf %347, %348 : vector<8x32xf32>
    %350 = arith.truncf %349 : vector<8x32xf32> to vector<8x32xbf16>
    %c1_136 = arith.constant 1 : index
    %c0_137 = arith.constant 0 : index
    %c0_138 = arith.constant 0 : index
    %351 = vector.load %arg4[%c1_136, %c0_137, %c0_138] : memref<2x32x64xbf16, #tpu.memory_space<vmem>>, vector<1x32x64xbf16>
    %352 = vector.shape_cast %351 : vector<1x32x64xbf16> to vector<32x64xbf16>
    %cst_139 = arith.constant dense<0.000000e+00> : vector<8x64xf32>
    %353 = tpu.matmul %350, %352, %cst_139 {dimension_numbers = #tpu.dot_dimension_numbers<[1], [0], [0], [1], [0, 0, 1, 1], [], []>} : vector<8x32xbf16>, vector<32x64xbf16>, vector<8x64xf32> -> vector<8x64xf32>
    %c1_140 = arith.constant 1 : index
    %c0_141 = arith.constant 0 : index
    %c0_142 = arith.constant 0 : index
    %354 = vector.load %arg7[%c1_140, %c0_141, %c0_142] : memref<2x1x64xf32, #tpu.memory_space<vmem>>, vector<1x1x64xf32>
    %355 = vector.shape_cast %354 : vector<1x1x64xf32> to vector<1x64xf32>
    %356 = vector.broadcast %355 : vector<1x64xf32> to vector<8x64xf32>
    %357 = arith.addf %353, %356 : vector<8x64xf32>
    %cst_143 = arith.constant 0.000000e+00 : f32
    %358 = vector.broadcast %cst_143 : f32 to vector<8x64xf32>
    %359 = arith.maximumf %357, %358 : vector<8x64xf32>
    %360 = arith.truncf %359 : vector<8x64xf32> to vector<8x64xbf16>
    %c1_144 = arith.constant 1 : index
    %c0_145 = arith.constant 0 : index
    %c0_146 = arith.constant 0 : index
    %361 = vector.load %arg5[%c1_144, %c0_145, %c0_146] : memref<2x64x32xbf16, #tpu.memory_space<vmem>>, vector<1x64x32xbf16>
    %362 = vector.shape_cast %361 : vector<1x64x32xbf16> to vector<64x32xbf16>
    %cst_147 = arith.constant dense<0.000000e+00> : vector<8x32xf32>
    %363 = tpu.matmul %360, %362, %cst_147 {dimension_numbers = #tpu.dot_dimension_numbers<[1], [0], [0], [1], [0, 0, 1, 1], [], []>} : vector<8x64xbf16>, vector<64x32xbf16>, vector<8x32xf32> -> vector<8x32xf32>
    %364 = vector.extract_strided_slice %199 {offsets = [8, 0], sizes = [1, 32], strides = [1, 1]} : vector<16x32xf32> to vector<1x32xf32>
    %365 = vector.broadcast %364 : vector<1x32xf32> to vector<8x32xf32>
    %366 = arith.addf %363, %365 : vector<8x32xf32>
    %367 = arith.addf %349, %366 : vector<8x32xf32>
    %368 = vector.extract_strided_slice %199 {offsets = [13, 0], sizes = [1, 32], strides = [1, 1]} : vector<16x32xf32> to vector<1x32xf32>
    %369 = vector.extract_strided_slice %199 {offsets = [14, 0], sizes = [1, 32], strides = [1, 1]} : vector<16x32xf32> to vector<1x32xf32>
    %cst_148 = arith.constant dense<0.000000e+00> : vector<8xf32>
    %370 = vector.multi_reduction <add>, %367, %cst_148 [1] : vector<8x32xf32> to vector<8xf32>
    %371 = vector.shape_cast %370 : vector<8xf32> to vector<8x1xf32>
    %372 = arith.mulf %367, %367 : vector<8x32xf32>
    %cst_149 = arith.constant dense<0.000000e+00> : vector<8xf32>
    %373 = vector.multi_reduction <add>, %372, %cst_149 [1] : vector<8x32xf32> to vector<8xf32>
    %374 = vector.shape_cast %373 : vector<8xf32> to vector<8x1xf32>
    %cst_150 = arith.constant 3.125000e-02 : f32
    %375 = vector.broadcast %cst_150 : f32 to vector<8x1xf32>
    %376 = arith.mulf %371, %375 : vector<8x1xf32>
    %cst_151 = arith.constant 3.125000e-02 : f32
    %377 = vector.broadcast %cst_151 : f32 to vector<8x1xf32>
    %378 = arith.mulf %374, %377 : vector<8x1xf32>
    %379 = arith.mulf %376, %376 : vector<8x1xf32>
    %380 = arith.subf %378, %379 : vector<8x1xf32>
    %381 = vector.broadcast %376 : vector<8x1xf32> to vector<8x32xf32>
    %382 = arith.subf %367, %381 : vector<8x32xf32>
    %cst_152 = arith.constant 9.99999974E-6 : f32
    %383 = vector.broadcast %cst_152 : f32 to vector<8x1xf32>
    %384 = arith.addf %380, %383 : vector<8x1xf32>
    %385 = math.rsqrt %384 : vector<8x1xf32>
    %386 = vector.broadcast %385 : vector<8x1xf32> to vector<8x32xf32>
    %387 = arith.mulf %382, %386 : vector<8x32xf32>
    %388 = vector.broadcast %368 : vector<1x32xf32> to vector<8x32xf32>
    %389 = arith.mulf %387, %388 : vector<8x32xf32>
    %390 = vector.broadcast %369 : vector<1x32xf32> to vector<8x32xf32>
    %391 = arith.addf %389, %390 : vector<8x32xf32>
    %392 = arith.addf %391, %197 : vector<8x32xf32>
    %c0_153 = arith.constant 0 : index
    %c0_154 = arith.constant 0 : index
    %393 = vector.load %arg8[%c0_153, %c0_154] : memref<2x32xf32, #tpu.memory_space<vmem>>, vector<2x32xf32>
    %394 = vector.extract_strided_slice %393 {offsets = [0, 0], sizes = [1, 32], strides = [1, 1]} : vector<2x32xf32> to vector<1x32xf32>
    %395 = vector.extract_strided_slice %393 {offsets = [1, 0], sizes = [1, 32], strides = [1, 1]} : vector<2x32xf32> to vector<1x32xf32>
    %cst_155 = arith.constant dense<0.000000e+00> : vector<8xf32>
    %396 = vector.multi_reduction <add>, %392, %cst_155 [1] : vector<8x32xf32> to vector<8xf32>
    %397 = vector.shape_cast %396 : vector<8xf32> to vector<8x1xf32>
    %398 = arith.mulf %392, %392 : vector<8x32xf32>
    %cst_156 = arith.constant dense<0.000000e+00> : vector<8xf32>
    %399 = vector.multi_reduction <add>, %398, %cst_156 [1] : vector<8x32xf32> to vector<8xf32>
    %400 = vector.shape_cast %399 : vector<8xf32> to vector<8x1xf32>
    %cst_157 = arith.constant 3.125000e-02 : f32
    %401 = vector.broadcast %cst_157 : f32 to vector<8x1xf32>
    %402 = arith.mulf %397, %401 : vector<8x1xf32>
    %cst_158 = arith.constant 3.125000e-02 : f32
    %403 = vector.broadcast %cst_158 : f32 to vector<8x1xf32>
    %404 = arith.mulf %400, %403 : vector<8x1xf32>
    %405 = arith.mulf %402, %402 : vector<8x1xf32>
    %406 = arith.subf %404, %405 : vector<8x1xf32>
    %407 = vector.broadcast %402 : vector<8x1xf32> to vector<8x32xf32>
    %408 = arith.subf %392, %407 : vector<8x32xf32>
    %cst_159 = arith.constant 9.99999974E-6 : f32
    %409 = vector.broadcast %cst_159 : f32 to vector<8x1xf32>
    %410 = arith.addf %406, %409 : vector<8x1xf32>
    %411 = math.rsqrt %410 : vector<8x1xf32>
    %412 = vector.broadcast %411 : vector<8x1xf32> to vector<8x32xf32>
    %413 = arith.mulf %408, %412 : vector<8x32xf32>
    %414 = vector.broadcast %394 : vector<1x32xf32> to vector<8x32xf32>
    %415 = arith.mulf %413, %414 : vector<8x32xf32>
    %416 = vector.broadcast %395 : vector<1x32xf32> to vector<8x32xf32>
    %417 = arith.addf %415, %416 : vector<8x32xf32>
    %c0_160 = arith.constant 0 : index
    %c0_161 = arith.constant 0 : index
    %418 = vector.load %arg9[%c0_160, %c0_161] : memref<8x32xf32, #tpu.memory_space<vmem>>, vector<8x32xf32>
    tpu.vector_store %arg9[%c0_160, %c0_161], %417 {strides = array<i32>} : memref<8x32xf32, #tpu.memory_space<vmem>>, vector<8x32xf32>,
    return
  }
}

</mosaic_0001>

<llo_original>
// kernel: tpu_custom_call.1
$region0: #{tpu_custom_call.1}
  #allocation0 [shape = 'u32[]', space=smem, size = 0x4, offset = 0x4, fixed_abs, tag = 'smem constant byte address 0x4 - core index']
  #allocation1 [shape = 'u32[72,128]{1,0:T(1,128)}', space=vmem, size = 0x9000, scoped, tag = 'internal scratch']
  %s0 = inlined_call_operand.hbm [shape: f32[8,32], index: 0, kind: input, shape index: {}]
  %s1 = inlined_call_operand.hbm [shape: f32[16,32], index: 1, kind: input, shape index: {}]
  %s2 = inlined_call_operand.hbm [shape: bf16[2,6,32,32], index: 2, kind: input, shape index: {}]
  %s3 = inlined_call_operand.vmem [shape: bf16[2,2,32,32], index: 3, kind: input, shape index: {}]
  %s4 = inlined_call_operand.vmem [shape: bf16[2,32,64], index: 4, kind: input, shape index: {}]
  %s5 = inlined_call_operand.vmem [shape: bf16[2,64,32], index: 5, kind: input, shape index: {}]
  %s6 = inlined_call_operand.hbm [shape: f32[2,16,32], index: 6, kind: input, shape index: {}]
  %s7 = inlined_call_operand.vmem [shape: f32[2,1,64], index: 7, kind: input, shape index: {}]
  %s8 = inlined_call_operand.vmem [shape: f32[2,32], index: 8, kind: input, shape index: {}]
  %s9 = inlined_call_operand.hbm [shape: f32[8,32], index: 9, kind: output, shape index: {}]
  %s10 = sld [smem:[#allocation0]]
  $region62: #{tpu_custom_call.1} parent=0
    _
  %s12 = ssub.s32 1, %s10
  %s13 = scalar_select 0, %s12, %s10
  $region1: #{tpu_custom_call.1} parent=0
    #allocation2 [shape = 'u8[4096]{0}', space=vmem, size = 0x1000, scoped, tag = 'input window, operand 0, single buffered']
    #allocation3 [shape = 's32[1]{0}', space=sflag, size = 0x4, scoped, tag = 'scoped memory for tpu_custom_call.1']
    #allocation4 [shape = 's32[1]{0}', space=sflag, size = 0x4, scoped, tag = 'scoped memory for tpu_custom_call.1']
    #allocation5 [shape = 'u8[8192]{0}', space=vmem, size = 0x2000, scoped, tag = 'input window, operand 1, single buffered']
    #allocation6 [shape = 's32[1]{0}', space=sflag, size = 0x4, scoped, tag = 'scoped memory for tpu_custom_call.1']
    #allocation7 [shape = 'u8[98304]{0}', space=vmem, size = 0x18000, scoped, tag = 'input window, operand 2, single buffered']
    #allocation8 [shape = 'u8[16384]{0}', space=vmem, size = 0x4000, scoped, tag = 'input window, operand 6, single buffered']
    #allocation9 [shape = 's32[1]{0}', space=sflag, size = 0x4, scoped, tag = 'scoped memory for tpu_custom_call.1']
    #allocation10 [shape = 'u8[4096]{0}', space=vmem, size = 0x1000, scoped, tag = 'output window, operand 0, single buffered']
    %14 = vsyncpa [#allocation3], 0
    %15 = vsyncpa [#allocation6], 0
    %16 = vsyncpa [#allocation9], 0
    %17 = vsyncpa [#allocation4], 0
    // Predicated region
    $region2: #{tpu_custom_call.1} parent=1 // pred_check
      _
    $region3: #{tpu_custom_call.1} parent=1 // pred_check_branch
      %19 = sbr.rel (0) target = $region5
    $region4: #{tpu_custom_call.1} parent=1 // pred_region
      %21 = vsyncadd [#allocation3], 0
      %s23 = sshll.u32 %s0, 4
      %s24 = int_to_ptr.hbm [resolvable:$true] %s23
      %s25 = sshll.u32 [#allocation2], 4
      %s26 = int_to_ptr.vmem [resolvable:$true] %s25
      %28 = dma.hbm_to_vmem [thread:$0]  %s24, 128, %s26, [#allocation3]
    $region5: #{tpu_custom_call.1} parent=1 // pred_fallthru
      _
    // Predicated region
    $region6: #{tpu_custom_call.1} parent=1 // pred_check
      _
    $region7: #{tpu_custom_call.1} parent=1 // pred_check_branch
      %30 = sbr.rel (0) target = $region9
    $region8: #{tpu_custom_call.1} parent=1 // pred_region
      %32 = vsyncadd [#allocation6], 0
      %s33 = sshll.u32 %s1, 4
      %s34 = int_to_ptr.hbm [resolvable:$true] %s33
      %s35 = sshll.u32 [#allocation5], 4
      %s36 = int_to_ptr.vmem [resolvable:$true] %s35
      %41 = dma.hbm_to_vmem [thread:$0]  %s34, 256, %s36, [#allocation6], 128, 128, 8
    $region9: #{tpu_custom_call.1} parent=1 // pred_fallthru
      _
    // Predicated region
    $region10: #{tpu_custom_call.1} parent=1 // pred_check
      _
    $region11: #{tpu_custom_call.1} parent=1 // pred_check_branch
      %43 = sbr.rel (0) target = $region13
    $region12: #{tpu_custom_call.1} parent=1 // pred_region
      %45 = vsyncadd [#allocation6], 0
      %s46 = sshll.u32 %s2, 4
      %s47 = int_to_ptr.hbm [resolvable:$true] %s46
      %s48 = sshll.u32 [#allocation7], 4
      %s49 = int_to_ptr.vmem [resolvable:$true] %s48
      %54 = dma.hbm_to_vmem [thread:$0]  %s47, 3072, %s49, [#allocation6], 64, 64, 4
    $region13: #{tpu_custom_call.1} parent=1 // pred_fallthru
      _
    // Predicated region
    $region14: #{tpu_custom_call.1} parent=1 // pred_check
      _
    $region15: #{tpu_custom_call.1} parent=1 // pred_check_branch
      %56 = sbr.rel (0) target = $region17
    $region16: #{tpu_custom_call.1} parent=1 // pred_region
      _
    $region17: #{tpu_custom_call.1} parent=1 // pred_fallthru
      _
    // Predicated region
    $region18: #{tpu_custom_call.1} parent=1 // pred_check
      _
    $region19: #{tpu_custom_call.1} parent=1 // pred_check_branch
      %58 = sbr.rel (0) target = $region21
    $region20: #{tpu_custom_call.1} parent=1 // pred_region
      _
    $region21: #{tpu_custom_call.1} parent=1 // pred_fallthru
      _
    // Predicated region
    $region22: #{tpu_custom_call.1} parent=1 // pred_check
      _
    $region23: #{tpu_custom_call.1} parent=1 // pred_check_branch
      %60 = sbr.rel (0) target = $region25
    $region24: #{tpu_custom_call.1} parent=1 // pred_region
      _
    $region25: #{tpu_custom_call.1} parent=1 // pred_fallthru
      _
    // Predicated region
    $region26: #{tpu_custom_call.1} parent=1 // pred_check
      _
    $region27: #{tpu_custom_call.1} parent=1 // pred_check_branch
      %62 = sbr.rel (0) target = $region29
    $region28: #{tpu_custom_call.1} parent=1 // pred_region
      %64 = vsyncadd [#allocation9], 0
      %s65 = sshll.u32 %s6, 4
      %s66 = int_to_ptr.hbm [resolvable:$true] %s65
      %s67 = sshll.u32 [#allocation8], 4
      %s68 = int_to_ptr.vmem [resolvable:$true] %s67
      %73 = dma.hbm_to_vmem [thread:$0]  %s66, 512, %s68, [#allocation9], 128, 128, 8
    $region29: #{tpu_custom_call.1} parent=1 // pred_fallthru
      _
    // Predicated region
    $region30: #{tpu_custom_call.1} parent=1 // pred_check
      _
    $region31: #{tpu_custom_call.1} parent=1 // pred_check_branch
      %75 = sbr.rel (0) target = $region33
    $region32: #{tpu_custom_call.1} parent=1 // pred_region
      _
    $region33: #{tpu_custom_call.1} parent=1 // pred_fallthru
      _
    // Predicated region
    $region34: #{tpu_custom_call.1} parent=1 // pred_check
      _
    $region35: #{tpu_custom_call.1} parent=1 // pred_check_branch
      %77 = sbr.rel (0) target = $region37
    $region36: #{tpu_custom_call.1} parent=1 // pred_region
      _
    $region37: #{tpu_custom_call.1} parent=1 // pred_fallthru
      _
    // Predicated region
    $region38: #{tpu_custom_call.1} parent=1 // pred_check
      _
    $region39: #{tpu_custom_call.1} parent=1 // pred_check_branch
      %79 = sbr.rel (0) target = $region41
    $region40: #{tpu_custom_call.1} parent=1 // pred_region
      %81 = dma.done [#allocation3], 128
    $region41: #{tpu_custom_call.1} parent=1 // pred_fallthru
      _
    // Predicated region
    $region42: #{tpu_custom_call.1} parent=1 // pred_check
      _
    $region43: #{tpu_custom_call.1} parent=1 // pred_check_branch
      %83 = sbr.rel (0) target = $region45
    $region44: #{tpu_custom_call.1} parent=1 // pred_region
      %85 = dma.done [#allocation6], 256
    $region45: #{tpu_custom_call.1} parent=1 // pred_fallthru
      _
    // Predicated region
    $region46: #{tpu_custom_call.1} parent=1 // pred_check
      _
    $region47: #{tpu_custom_call.1} parent=1 // pred_check_branch
      %87 = sbr.rel (0) target = $region49
    $region48: #{tpu_custom_call.1} parent=1 // pred_region
      %89 = dma.done [#allocation6], 3072
    $region49: #{tpu_custom_call.1} parent=1 // pred_fallthru
      _
    // Predicated region
    $region50: #{tpu_custom_call.1} parent=1 // pred_check
      _
    $region51: #{tpu_custom_call.1} parent=1 // pred_check_branch
      %91 = sbr.rel (0) target = $region53
    $region52: #{tpu_custom_call.1} parent=1 // pred_region
      %93 = dma.done [#allocation9], 512
    $region53: #{tpu_custom_call.1} parent=1 // pred_fallthru
      _
    %v95 = vld [vmem:[#allocation5] sm:$0xff]
    %v96 = vld [vmem:[#allocation5 + $0x8] sm:$0xff]
    %v97 = vpack.c.bf16 %v96, %v95
    %v98 = vld [vmem:[#allocation2] sm:$0xff]
    %v99 = vld [vmem:[#allocation8] sm:$0xff]
    %v100 = vld [vmem:[#allocation8 + $0x8] sm:$0xff]
    %v101 = vpack.c.bf16 %v98, %v98
    %v102 = vld [vmem:[#allocation7] sm:$0xf]
    %v103 = vld [vmem:[#allocation7 + $0x4] sm:$0xf]
    %v104 = vld [vmem:[#allocation7 + $0x8] sm:$0xf]
    %v105 = vld [vmem:[#allocation7 + $0xc] sm:$0xf]
    %v106 = vperm.slane %v99, 0
    %v111 = vunpack.c.l.b16 %v102
    %v112 = vunpack.c.l.b16 %v103
    %v113 = vunpack.c.l.b16 %v104
    %v114 = vunpack.c.l.b16 %v105
    %v115 = vpack.c.b16 %v112, %v111
    %v116 = vpack.c.b16 %v114, %v113
    %vm119 = vcmask 261120
    %v121 = vsel %vm119, %v101, 0
    %123 = vmatpush.bf16.msra.mxu0 0
    %124 = vmatpush.bf16.msra.mxu0 0
    %125 = vmatpush.bf16.msra.mxu0 0
    %126 = vmatpush.bf16.msra.mxu0 0
    %127 = vmatpush.bf16.msra.mxu0 0
    %128 = vmatpush.bf16.msra.mxu0 0
    %129 = vmatpush.bf16.msra.mxu0 %v116
    %130 = vmatpush.bf16.msra.mxu0 %v115
    %131 = vmatmul.bf16.gmra.mxu0 %v121
    %v132 = vpop.f32.mrf.mxu0
    %v133 = vadd.f32 %v106, %v132
    %v134 = vpop.f32.mrf.mxu0
    %135 = vdwg.mxu0
    %s136 = scalar_lea.vmem [#allocation7], 16
    %v137 = vld [vmem:[%s136] sm:$0xf]
    %v138 = vld [vmem:[%s136 + $0x4] sm:$0xf]
    %v139 = vld [vmem:[%s136 + $0x8] sm:$0xf]
    %v140 = vld [vmem:[%s136 + $0xc] sm:$0xf]
    %v141 = vperm.slane %v99, 1
    %v146 = vunpack.c.l.b16 %v137
    %v147 = vunpack.c.l.b16 %v138
    %v148 = vunpack.c.l.b16 %v139
    %v149 = vunpack.c.l.b16 %v140
    %v150 = vpack.c.b16 %v147, %v146
    %v151 = vpack.c.b16 %v149, %v148
    %154 = vmatpush.bf16.msra.mxu0 0
    %155 = vmatpush.bf16.msra.mxu0 0
    %156 = vmatpush.bf16.msra.mxu0 0
    %157 = vmatpush.bf16.msra.mxu0 0
    %158 = vmatpush.bf16.msra.mxu0 0
    %159 = vmatpush.bf16.msra.mxu0 0
    %160 = vmatpush.bf16.msra.mxu0 %v151
    %161 = vmatpush.bf16.msra.mxu0 %v150
    %162 = vmatmul.bf16.gmra.mxu0 %v121
    %v163 = vpop.f32.mrf.mxu0
    %v164 = vadd.f32 %v141, %v163
    %v165 = vpop.f32.mrf.mxu0
    %166 = vdwg.mxu0
    %s167 = scalar_lea.vmem [#allocation7], 32
    %v168 = vld [vmem:[%s167] sm:$0xf]
    %v169 = vld [vmem:[%s167 + $0x4] sm:$0xf]
    %v170 = vld [vmem:[%s167 + $0x8] sm:$0xf]
    %v171 = vld [vmem:[%s167 + $0xc] sm:$0xf]
    %v172 = vperm.slane %v99, 2
    %v177 = vunpack.c.l.b16 %v168
    %v178 = vunpack.c.l.b16 %v169
    %v179 = vunpack.c.l.b16 %v170
    %v180 = vunpack.c.l.b16 %v171
    %v181 = vpack.c.b16 %v178, %v177
    %v182 = vpack.c.b16 %v180, %v179
    %185 = vmatpush.bf16.msra.mxu0 0
    %186 = vmatpush.bf16.msra.mxu0 0
    %187 = vmatpush.bf16.msra.mxu0 0
    %188 = vmatpush.bf16.msra.mxu0 0
    %189 = vmatpush.bf16.msra.mxu0 0
    %190 = vmatpush.bf16.msra.mxu0 0
    %191 = vmatpush.bf16.msra.mxu0 %v182
    %192 = vmatpush.bf16.msra.mxu0 %v181
    %193 = vmatmul.bf16.gmra.mxu0 %v121
    %v194 = vpop.f32.mrf.mxu0
    %v195 = vadd.f32 %v172, %v194
    %v196 = vpop.f32.mrf.mxu0
    %197 = vdwg.mxu0
    %v198 = vld [vmem:[%s3] sm:$0xf]
    %v199 = vld [vmem:[%s3 + $0x4] sm:$0xf]
    %v200 = vld [vmem:[%s3 + $0x8] sm:$0xf]
    %v201 = vld [vmem:[%s3 + $0xc] sm:$0xf]
    %203 = vrot.lane.b32.xlu0 %v133, 120
    %v204 = vpop.permute.xlu0 %203
    %206 = vrot.lane.b32.xlu0 %v133, 112
    %v207 = vpop.permute.xlu0 %206
    %209 = vrot.lane.b32.xlu0 %v133, 104
    %v210 = vpop.permute.xlu0 %209
    %v212 = vrot.slane %v207, 4
    %vm213 = vcmask 1047556
    %v214 = vsel %vm213, %v212, %v133
    %v215 = vrot.slane %v133, 4
    %v216 = vsel %vm213, %v207, %v215
    %v218 = vunpack.c.l.s4 1983009808
    %v219 = vunpack.c.0.s8 %v218
    %v220 = vperm.slane %v214, %v219
    %v222 = vunpack.c.l.s4 1983009808
    %v223 = vunpack.c.0.s8 %v222
    %v224 = vperm.slane %v216, %v223
    %v225 = vrot.slane %v210, 4
    %v226 = vsel %vm213, %v225, %v204
    %v227 = vrot.slane %v204, 4
    %v228 = vsel %vm213, %v210, %v227
    %v230 = vunpack.c.l.s4 1983009808
    %v231 = vunpack.c.0.s8 %v230
    %v232 = vperm.slane %v226, %v231
    %v234 = vunpack.c.l.s4 1983009808
    %v235 = vunpack.c.0.s8 %v234
    %v236 = vperm.slane %v228, %v235
    %v237 = vrot.slane %v232, 4
    %v238 = vsel %vm213, %v237, %v220
    %v239 = vrot.slane %v220, 4
    %v240 = vsel %vm213, %v232, %v239
    %v242 = vunpack.c.l.s4 1934713408
    %v243 = vunpack.c.0.s8 %v242
    %v244 = vperm.slane %v238, %v243
    %v246 = vunpack.c.l.s4 1934713408
    %v247 = vunpack.c.0.s8 %v246
    %v248 = vperm.slane %v240, %v247
    %v249 = vrot.slane %v236, 4
    %v250 = vsel %vm213, %v249, %v224
    %v251 = vrot.slane %v224, 4
    %v252 = vsel %vm213, %v236, %v251
    %v254 = vunpack.c.l.s4 1934713408
    %v255 = vunpack.c.0.s8 %v254
    %v256 = vperm.slane %v250, %v255
    %v258 = vunpack.c.l.s4 1934713408
    %v259 = vunpack.c.0.s8 %v258
    %v260 = vperm.slane %v252, %v259
    %v261 = vrot.slane %v244, 4
    %v262 = vsel %vm213, 0.0, %v261
    %v263 = vrot.slane %v248, 4
    %v264 = vsel %vm213, 0.0, %v263
    %v265 = vrot.slane %v256, 4
    %v266 = vsel %vm213, 0.0, %v265
    %v267 = vrot.slane %v260, 4
    %v268 = vsel %vm213, 0.0, %v267
    %v269 = vsel %vm213, %v263, %v244
    %v271 = vunpack.c.l.s4 1983009808
    %v272 = vunpack.c.0.s8 %v271
    %v273 = vperm.slane %v269, %v272
    %v274 = vrot.slane %v264, 4
    %v275 = vsel %vm213, %v274, %v262
    %v277 = vunpack.c.l.s4 1983009808
    %v278 = vunpack.c.0.s8 %v277
    %v279 = vperm.slane %v275, %v278
    %v280 = vsel %vm213, %v267, %v256
    %v282 = vunpack.c.l.s4 1983009808
    %v283 = vunpack.c.0.s8 %v282
    %v284 = vperm.slane %v280, %v283
    %v285 = vrot.slane %v268, 4
    %v286 = vsel %vm213, %v285, %v266
    %v288 = vunpack.c.l.s4 1983009808
    %v289 = vunpack.c.0.s8 %v288
    %v290 = vperm.slane %v286, %v289
    %v291 = vrot.slane %v279, 4
    %v292 = vsel %vm213, %v291, %v273
    %v293 = vrot.slane %v273, 4
    %v294 = vsel %vm213, %v279, %v293
    %v296 = vunpack.c.l.s4 1934713408
    %v297 = vunpack.c.0.s8 %v296
    %v298 = vperm.slane %v292, %v297
    %v300 = vunpack.c.l.s4 1934713408
    %v301 = vunpack.c.0.s8 %v300
    %v302 = vperm.slane %v294, %v301
    %v303 = vrot.slane %v290, 4
    %v304 = vsel %vm213, %v303, %v284
    %v305 = vrot.slane %v284, 4
    %v306 = vsel %vm213, %v290, %v305
    %v308 = vunpack.c.l.s4 1934713408
    %v309 = vunpack.c.0.s8 %v308
    %v310 = vperm.slane %v304, %v309
    %v312 = vunpack.c.l.s4 1934713408
    %v313 = vunpack.c.0.s8 %v312
    %v314 = vperm.slane %v306, %v313
    %v315 = vrot.slane %v310, 4
    %v316 = vsel %vm213, %v315, %v298
    %v317 = vrot.slane %v298, 4
    %v318 = vsel %vm213, %v310, %v317
    %v319 = vrot.slane %v314, 4
    %v320 = vsel %vm213, %v319, %v302
    %v321 = vrot.slane %v302, 4
    %v322 = vsel %vm213, %v314, %v321
    %v323 = vpack.c.bf16 %v316, %v316
    %v324 = vpack.c.bf16 %v318, %v318
    %v325 = vpack.c.bf16 %v320, %v320
    %v326 = vpack.c.bf16 %v322, %v322
    %328 = vrot.lane.b32.xlu0 %v164, 120
    %v329 = vpop.permute.xlu0 %328
    %331 = vrot.lane.b32.xlu0 %v164, 112
    %v332 = vpop.permute.xlu0 %331
    %334 = vrot.lane.b32.xlu0 %v164, 104
    %v335 = vpop.permute.xlu0 %334
    %v337 = vrot.slane %v332, 4
    %v338 = vsel %vm213, %v337, %v164
    %v339 = vrot.slane %v164, 4
    %v340 = vsel %vm213, %v332, %v339
    %v342 = vunpack.c.l.s4 1983009808
    %v343 = vunpack.c.0.s8 %v342
    %v344 = vperm.slane %v338, %v343
    %v346 = vunpack.c.l.s4 1983009808
    %v347 = vunpack.c.0.s8 %v346
    %v348 = vperm.slane %v340, %v347
    %v349 = vrot.slane %v335, 4
    %v350 = vsel %vm213, %v349, %v329
    %v351 = vrot.slane %v329, 4
    %v352 = vsel %vm213, %v335, %v351
    %v354 = vunpack.c.l.s4 1983009808
    %v355 = vunpack.c.0.s8 %v354
    %v356 = vperm.slane %v350, %v355
    %v358 = vunpack.c.l.s4 1983009808
    %v359 = vunpack.c.0.s8 %v358
    %v360 = vperm.slane %v352, %v359
    %v361 = vrot.slane %v356, 4
    %v362 = vsel %vm213, %v361, %v344
    %v363 = vrot.slane %v344, 4
    %v364 = vsel %vm213, %v356, %v363
    %v366 = vunpack.c.l.s4 1934713408
    %v367 = vunpack.c.0.s8 %v366
    %v368 = vperm.slane %v362, %v367
    %v370 = vunpack.c.l.s4 1934713408
    %v371 = vunpack.c.0.s8 %v370
    %v372 = vperm.slane %v364, %v371
    %v373 = vrot.slane %v360, 4
    %v374 = vsel %vm213, %v373, %v348
    %v375 = vrot.slane %v348, 4
    %v376 = vsel %vm213, %v360, %v375
    %v378 = vunpack.c.l.s4 1934713408
    %v379 = vunpack.c.0.s8 %v378
    %v380 = vperm.slane %v374, %v379
    %v382 = vunpack.c.l.s4 1934713408
    %v383 = vunpack.c.0.s8 %v382
    %v384 = vperm.slane %v376, %v383
    %v385 = vrot.slane %v368, 4
    %v386 = vsel %vm213, 0.0, %v385
    %v387 = vrot.slane %v372, 4
    %v388 = vsel %vm213, 0.0, %v387
    %v389 = vrot.slane %v380, 4
    %v390 = vsel %vm213, 0.0, %v389
    %v391 = vrot.slane %v384, 4
    %v392 = vsel %vm213, 0.0, %v391
    %v393 = vsel %vm213, %v387, %v368
    %v395 = vunpack.c.l.s4 1983009808
    %v396 = vunpack.c.0.s8 %v395
    %v397 = vperm.slane %v393, %v396
    %v398 = vrot.slane %v388, 4
    %v399 = vsel %vm213, %v398, %v386
    %v401 = vunpack.c.l.s4 1983009808
    %v402 = vunpack.c.0.s8 %v401
    %v403 = vperm.slane %v399, %v402
    %v404 = vsel %vm213, %v391, %v380
    %v406 = vunpack.c.l.s4 1983009808
    %v407 = vunpack.c.0.s8 %v406
    %v408 = vperm.slane %v404, %v407
    %v409 = vrot.slane %v392, 4
    %v410 = vsel %vm213, %v409, %v390
    %v412 = vunpack.c.l.s4 1983009808
    %v413 = vunpack.c.0.s8 %v412
    %v414 = vperm.slane %v410, %v413
    %v415 = vrot.slane %v403, 4
    %v416 = vsel %vm213, %v415, %v397
    %v417 = vrot.slane %v397, 4
    %v418 = vsel %vm213, %v403, %v417
    %v420 = vunpack.c.l.s4 1934713408
    %v421 = vunpack.c.0.s8 %v420
    %v422 = vperm.slane %v416, %v421
    %v424 = vunpack.c.l.s4 1934713408
    %v425 = vunpack.c.0.s8 %v424
    %v426 = vperm.slane %v418, %v425
    %v427 = vrot.slane %v414, 4
    %v428 = vsel %vm213, %v427, %v408
    %v429 = vrot.slane %v408, 4
    %v430 = vsel %vm213, %v414, %v429
    %v432 = vunpack.c.l.s4 1934713408
    %v433 = vunpack.c.0.s8 %v432
    %v434 = vperm.slane %v428, %v433
    %v436 = vunpack.c.l.s4 1934713408
    %v437 = vunpack.c.0.s8 %v436
    %v438 = vperm.slane %v430, %v437
    %v439 = vrot.slane %v434, 4
    %v440 = vsel %vm213, %v439, %v422
    %v441 = vrot.slane %v422, 4
    %v442 = vsel %vm213, %v434, %v441
    %v443 = vrot.slane %v438, 4
    %v444 = vsel %vm213, %v443, %v426
    %v445 = vrot.slane %v426, 4
    %v446 = vsel %vm213, %v438, %v445
    %v447 = vpack.c.bf16 %v440, %v440
    %v448 = vpack.c.bf16 %v442, %v442
    %v449 = vpack.c.bf16 %v444, %v444
    %v450 = vpack.c.bf16 %v446, %v446
    %452 = vrot.lane.b32.xlu0 %v195, 120
    %v453 = vpop.permute.xlu0 %452
    %455 = vrot.lane.b32.xlu0 %v195, 112
    %v456 = vpop.permute.xlu0 %455
    %458 = vrot.lane.b32.xlu0 %v195, 104
    %v459 = vpop.permute.xlu0 %458
    %v461 = vrot.slane %v456, 4
    %v462 = vsel %vm213, %v461, %v195
    %v463 = vrot.slane %v195, 4
    %v464 = vsel %vm213, %v456, %v463
    %v466 = vunpack.c.l.s4 1983009808
    %v467 = vunpack.c.0.s8 %v466
    %v468 = vperm.slane %v462, %v467
    %v470 = vunpack.c.l.s4 1983009808
    %v471 = vunpack.c.0.s8 %v470
    %v472 = vperm.slane %v464, %v471
    %v473 = vrot.slane %v459, 4
    %v474 = vsel %vm213, %v473, %v453
    %v475 = vrot.slane %v453, 4
    %v476 = vsel %vm213, %v459, %v475
    %v478 = vunpack.c.l.s4 1983009808
    %v479 = vunpack.c.0.s8 %v478
    %v480 = vperm.slane %v474, %v479
    %v482 = vunpack.c.l.s4 1983009808
    %v483 = vunpack.c.0.s8 %v482
    %v484 = vperm.slane %v476, %v483
    %v485 = vrot.slane %v480, 4
    %v486 = vsel %vm213, %v485, %v468
    %v487 = vrot.slane %v468, 4
    %v488 = vsel %vm213, %v480, %v487
    %v490 = vunpack.c.l.s4 1934713408
    %v491 = vunpack.c.0.s8 %v490
    %v492 = vperm.slane %v486, %v491
    %v494 = vunpack.c.l.s4 1934713408
    %v495 = vunpack.c.0.s8 %v494
    %v496 = vperm.slane %v488, %v495
    %v497 = vrot.slane %v484, 4
    %v498 = vsel %vm213, %v497, %v472
    %v499 = vrot.slane %v472, 4
    %v500 = vsel %vm213, %v484, %v499
    %v502 = vunpack.c.l.s4 1934713408
    %v503 = vunpack.c.0.s8 %v502
    %v504 = vperm.slane %v498, %v503
    %v506 = vunpack.c.l.s4 1934713408
    %v507 = vunpack.c.0.s8 %v506
    %v508 = vperm.slane %v500, %v507
    %v509 = vrot.slane %v492, 4
    %v510 = vsel %vm213, 0.0, %v509
    %v511 = vrot.slane %v496, 4
    %v512 = vsel %vm213, 0.0, %v511
    %v513 = vrot.slane %v504, 4
    %v514 = vsel %vm213, 0.0, %v513
    %v515 = vrot.slane %v508, 4
    %v516 = vsel %vm213, 0.0, %v515
    %v517 = vsel %vm213, %v511, %v492
    %v519 = vunpack.c.l.s4 1983009808
    %v520 = vunpack.c.0.s8 %v519
    %v521 = vperm.slane %v517, %v520
    %v522 = vrot.slane %v512, 4
    %v523 = vsel %vm213, %v522, %v510
    %v525 = vunpack.c.l.s4 1983009808
    %v526 = vunpack.c.0.s8 %v525
    %v527 = vperm.slane %v523, %v526
    %v528 = vsel %vm213, %v515, %v504
    %v530 = vunpack.c.l.s4 1983009808
    %v531 = vunpack.c.0.s8 %v530
    %v532 = vperm.slane %v528, %v531
    %v533 = vrot.slane %v516, 4
    %v534 = vsel %vm213, %v533, %v514
    %v536 = vunpack.c.l.s4 1983009808
    %v537 = vunpack.c.0.s8 %v536
    %v538 = vperm.slane %v534, %v537
    %v539 = vrot.slane %v527, 4
    %v540 = vsel %vm213, %v539, %v521
    %v541 = vrot.slane %v521, 4
    %v542 = vsel %vm213, %v527, %v541
    %v544 = vunpack.c.l.s4 1934713408
    %v545 = vunpack.c.0.s8 %v544
    %v546 = vperm.slane %v540, %v545
    %v548 = vunpack.c.l.s4 1934713408
    %v549 = vunpack.c.0.s8 %v548
    %v550 = vperm.slane %v542, %v549
    %v551 = vrot.slane %v538, 4
    %v552 = vsel %vm213, %v551, %v532
    %v553 = vrot.slane %v532, 4
    %v554 = vsel %vm213, %v538, %v553
    %v556 = vunpack.c.l.s4 1934713408
    %v557 = vunpack.c.0.s8 %v556
    %v558 = vperm.slane %v552, %v557
    %v560 = vunpack.c.l.s4 1934713408
    %v561 = vunpack.c.0.s8 %v560
    %v562 = vperm.slane %v554, %v561
    %v563 = vrot.slane %v558, 4
    %v564 = vsel %vm213, %v563, %v546
    %v565 = vrot.slane %v546, 4
    %v566 = vsel %vm213, %v558, %v565
    %v567 = vrot.slane %v562, 4
    %v568 = vsel %vm213, %v567, %v550
    %v569 = vrot.slane %v550, 4
    %v570 = vsel %vm213, %v562, %v569
    %v571 = vpack.c.bf16 %v564, %v564
    %v572 = vpack.c.bf16 %v566, %v566
    %v573 = vpack.c.bf16 %v568, %v568
    %v574 = vpack.c.bf16 %v570, %v570
    %vm575 = vcmask 64512
    %v577 = vsel %vm575, %v323, 0
    %v580 = vsel %vm575, %v447, 0
    %582 = vmatpush.bf16.xpose.msra.mxu0 0
    %583 = vmatpush.bf16.xpose.msra.mxu0 0
    %584 = vmatpush.bf16.xpose.msra.mxu0 0
    %585 = vmatpush.bf16.xpose.msra.mxu0 0
    %586 = vmatpush.bf16.xpose.msra.mxu0 0
    %587 = vmatpush.bf16.xpose.msra.mxu0 0
    %588 = vmatpush.bf16.xpose.msra.mxu0 0
    %589 = vmatpush.bf16.xpose.msra.mxu0 %v580
    %590 = vmatmul.bf16.gmra.mxu0 %v577
    %v591 = vpop.f32.mrf.mxu0
    %v592 = vadd.f32 0.0, %v591
    %v593 = vpop.f32.mrf.mxu0
    %594 = vdwg.mxu0
    %v596 = vsel %vm575, %v324, 0
    %v599 = vsel %vm575, %v448, 0
    %601 = vmatpush.bf16.xpose.msra.mxu0 0
    %602 = vmatpush.bf16.xpose.msra.mxu0 0
    %603 = vmatpush.bf16.xpose.msra.mxu0 0
    %604 = vmatpush.bf16.xpose.msra.mxu0 0
    %605 = vmatpush.bf16.xpose.msra.mxu0 0
    %606 = vmatpush.bf16.xpose.msra.mxu0 0
    %607 = vmatpush.bf16.xpose.msra.mxu0 0
    %608 = vmatpush.bf16.xpose.msra.mxu0 %v599
    %609 = vmatmul.bf16.gmra.mxu0 %v596
    %v610 = vpop.f32.mrf.mxu0
    %v611 = vadd.f32 0.0, %v610
    %v612 = vpop.f32.mrf.mxu0
    %613 = vdwg.mxu0
    %v615 = vsel %vm575, %v325, 0
    %v618 = vsel %vm575, %v449, 0
    %620 = vmatpush.bf16.xpose.msra.mxu0 0
    %621 = vmatpush.bf16.xpose.msra.mxu0 0
    %622 = vmatpush.bf16.xpose.msra.mxu0 0
    %623 = vmatpush.bf16.xpose.msra.mxu0 0
    %624 = vmatpush.bf16.xpose.msra.mxu0 0
    %625 = vmatpush.bf16.xpose.msra.mxu0 0
    %626 = vmatpush.bf16.xpose.msra.mxu0 0
    %627 = vmatpush.bf16.xpose.msra.mxu0 %v618
    %628 = vmatmul.bf16.gmra.mxu0 %v615
    %v629 = vpop.f32.mrf.mxu0
    %v630 = vadd.f32 0.0, %v629
    %v631 = vpop.f32.mrf.mxu0
    %632 = vdwg.mxu0
    %v634 = vsel %vm575, %v326, 0
    %v637 = vsel %vm575, %v450, 0
    %639 = vmatpush.bf16.xpose.msra.mxu0 0
    %640 = vmatpush.bf16.xpose.msra.mxu0 0
    %641 = vmatpush.bf16.xpose.msra.mxu0 0
    %642 = vmatpush.bf16.xpose.msra.mxu0 0
    %643 = vmatpush.bf16.xpose.msra.mxu0 0
    %644 = vmatpush.bf16.xpose.msra.mxu0 0
    %645 = vmatpush.bf16.xpose.msra.mxu0 0
    %646 = vmatpush.bf16.xpose.msra.mxu0 %v637
    %647 = vmatmul.bf16.gmra.mxu0 %v634
    %v648 = vpop.f32.mrf.mxu0
    %v649 = vadd.f32 0.0, %v648
    %v650 = vpop.f32.mrf.mxu0
    %651 = vdwg.mxu0
    %v652 = vsel %vm575, %v592, -inf
    %653 = vmax.xlane.f32.xlu0 %v652
    %v654 = vpop.xlane.xlu0 %653
    %v655 = vsel %vm575, %v611, -inf
    %656 = vmax.xlane.f32.xlu0 %v655
    %v657 = vpop.xlane.xlu0 %656
    %v658 = vsel %vm575, %v630, -inf
    %659 = vmax.xlane.f32.xlu0 %v658
    %v660 = vpop.xlane.xlu0 %659
    %v661 = vsel %vm575, %v649, -inf
    %662 = vmax.xlane.f32.xlu0 %v661
    %v663 = vpop.xlane.xlu0 %662
    %v664 = vsub.f32 %v592, %v654
    %v665 = vsub.f32 %v611, %v657
    %v666 = vsub.f32 %v630, %v660
    %v667 = vsub.f32 %v649, %v663
    %v668 = vmul.f32 %v664, 1.442695
    %v669 = vpow.pop %v668
    %v670 = vmul.f32 %v665, 1.442695
    %v671 = vpow.pop %v670
    %v672 = vmul.f32 %v666, 1.442695
    %v673 = vpow.pop %v672
    %v674 = vmul.f32 %v667, 1.442695
    %v675 = vpow.pop %v674
    %v676 = vsel %vm575, %v669, 0.0
    %677 = vadd.xlane.f32.xlu0 %v676
    %v678 = vpop.xlane.xlu0 %677
    %v679 = vsel %vm575, %v671, 0.0
    %680 = vadd.xlane.f32.xlu0 %v679
    %v681 = vpop.xlane.xlu0 %680
    %v682 = vsel %vm575, %v673, 0.0
    %683 = vadd.xlane.f32.xlu0 %v682
    %v684 = vpop.xlane.xlu0 %683
    %v685 = vsel %vm575, %v675, 0.0
    %686 = vadd.xlane.f32.xlu0 %v685
    %v687 = vpop.xlane.xlu0 %686
    %v688 = vrcp.pop %v678
    %v689 = vrcp.pop %v681
    %v690 = vrcp.pop %v684
    %v691 = vrcp.pop %v687
    %v692 = vmul.f32 %v669, %v688
    %v693 = vmul.f32 %v671, %v689
    %v694 = vmul.f32 %v673, %v690
    %v695 = vmul.f32 %v675, %v691
    %v696 = vpack.c.bf16 %v692, %v692
    %v697 = vpack.c.bf16 %v693, %v693
    %v698 = vpack.c.bf16 %v694, %v694
    %v699 = vpack.c.bf16 %v695, %v695
    %v701 = vsel %vm575, %v696, 0
    %vm703 = vcmask 1043456
    %v705 = vsel %vm703, %v571, 0
    %707 = vmatpush.bf16.msra.mxu0 0
    %708 = vmatpush.bf16.msra.mxu0 0
    %709 = vmatpush.bf16.msra.mxu0 0
    %710 = vmatpush.bf16.msra.mxu0 0
    %711 = vmatpush.bf16.msra.mxu0 0
    %712 = vmatpush.bf16.msra.mxu0 0
    %713 = vmatpush.bf16.msra.mxu0 0
    %714 = vmatpush.bf16.msra.mxu0 %v705
    %715 = vmatmul.bf16.gmra.mxu0 %v701
    %v716 = vpop.f32.mrf.mxu0
    %v717 = vadd.f32 0.0, %v716
    %v718 = vpop.f32.mrf.mxu0
    %719 = vdwg.mxu0
    %v721 = vsel %vm575, %v697, 0
    %v724 = vsel %vm703, %v572, 0
    %726 = vmatpush.bf16.msra.mxu0 0
    %727 = vmatpush.bf16.msra.mxu0 0
    %728 = vmatpush.bf16.msra.mxu0 0
    %729 = vmatpush.bf16.msra.mxu0 0
    %730 = vmatpush.bf16.msra.mxu0 0
    %731 = vmatpush.bf16.msra.mxu0 0
    %732 = vmatpush.bf16.msra.mxu0 0
    %733 = vmatpush.bf16.msra.mxu0 %v724
    %734 = vmatmul.bf16.gmra.mxu0 %v721
    %v735 = vpop.f32.mrf.mxu0
    %v736 = vadd.f32 0.0, %v735
    %v737 = vpop.f32.mrf.mxu0
    %738 = vdwg.mxu0
    %v740 = vsel %vm575, %v698, 0
    %v743 = vsel %vm703, %v573, 0
    %745 = vmatpush.bf16.msra.mxu0 0
    %746 = vmatpush.bf16.msra.mxu0 0
    %747 = vmatpush.bf16.msra.mxu0 0
    %748 = vmatpush.bf16.msra.mxu0 0
    %749 = vmatpush.bf16.msra.mxu0 0
    %750 = vmatpush.bf16.msra.mxu0 0
    %751 = vmatpush.bf16.msra.mxu0 0
    %752 = vmatpush.bf16.msra.mxu0 %v743
    %753 = vmatmul.bf16.gmra.mxu0 %v740
    %v754 = vpop.f32.mrf.mxu0
    %v755 = vadd.f32 0.0, %v754
    %v756 = vpop.f32.mrf.mxu0
    %757 = vdwg.mxu0
    %v759 = vsel %vm575, %v699, 0
    %v762 = vsel %vm703, %v574, 0
    %764 = vmatpush.bf16.msra.mxu0 0
    %765 = vmatpush.bf16.msra.mxu0 0
    %766 = vmatpush.bf16.msra.mxu0 0
    %767 = vmatpush.bf16.msra.mxu0 0
    %768 = vmatpush.bf16.msra.mxu0 0
    %769 = vmatpush.bf16.msra.mxu0 0
    %770 = vmatpush.bf16.msra.mxu0 0
    %771 = vmatpush.bf16.msra.mxu0 %v762
    %772 = vmatmul.bf16.gmra.mxu0 %v759
    %v773 = vpop.f32.mrf.mxu0
    %v774 = vadd.f32 0.0, %v773
    %v775 = vpop.f32.mrf.mxu0
    %776 = vdwg.mxu0
    %v777 = vrot.slane %v755, 4
    %v778 = vsel %vm213, %v777, %v717
    %v779 = vrot.slane %v717, 4
    %v780 = vsel %vm213, %v755, %v779
    %v782 = vunpack.c.l.s4 1983009808
    %v783 = vunpack.c.0.s8 %v782
    %v784 = vperm.slane %v778, %v783
    %v786 = vunpack.c.l.s4 1983009808
    %v787 = vunpack.c.0.s8 %v786
    %v788 = vperm.slane %v780, %v787
    %v789 = vrot.slane %v774, 4
    %v790 = vsel %vm213, %v789, %v736
    %v791 = vrot.slane %v736, 4
    %v792 = vsel %vm213, %v774, %v791
    %v794 = vunpack.c.l.s4 1983009808
    %v795 = vunpack.c.0.s8 %v794
    %v796 = vperm.slane %v790, %v795
    %v798 = vunpack.c.l.s4 1983009808
    %v799 = vunpack.c.0.s8 %v798
    %v800 = vperm.slane %v792, %v799
    %v801 = vrot.slane %v796, 4
    %v802 = vsel %vm213, %v801, %v784
    %v803 = vrot.slane %v784, 4
    %v804 = vsel %vm213, %v796, %v803
    %v806 = vunpack.c.l.s4 1934713408
    %v807 = vunpack.c.0.s8 %v806
    %v808 = vperm.slane %v802, %v807
    %v810 = vunpack.c.l.s4 1934713408
    %v811 = vunpack.c.0.s8 %v810
    %v812 = vperm.slane %v804, %v811
    %v813 = vrot.slane %v800, 4
    %v814 = vsel %vm213, %v813, %v788
    %v815 = vrot.slane %v788, 4
    %v816 = vsel %vm213, %v800, %v815
    %v818 = vunpack.c.l.s4 1934713408
    %v819 = vunpack.c.0.s8 %v818
    %v820 = vperm.slane %v814, %v819
    %v822 = vunpack.c.l.s4 1934713408
    %v823 = vunpack.c.0.s8 %v822
    %v824 = vperm.slane %v816, %v823
    %v825 = vrot.slane %v808, 4
    %v826 = vsel %vm213, 0.0, %v825
    %v827 = vrot.slane %v812, 4
    %v828 = vsel %vm213, 0.0, %v827
    %v829 = vrot.slane %v820, 4
    %v830 = vsel %vm213, 0.0, %v829
    %v831 = vrot.slane %v824, 4
    %v832 = vsel %vm213, 0.0, %v831
    %v833 = vsel %vm213, %v827, %v808
    %v835 = vunpack.c.l.s4 1983009808
    %v836 = vunpack.c.0.s8 %v835
    %v837 = vperm.slane %v833, %v836
    %v838 = vrot.slane %v828, 4
    %v839 = vsel %vm213, %v838, %v826
    %v841 = vunpack.c.l.s4 1983009808
    %v842 = vunpack.c.0.s8 %v841
    %v843 = vperm.slane %v839, %v842
    %v844 = vsel %vm213, %v831, %v820
    %v846 = vunpack.c.l.s4 1983009808
    %v847 = vunpack.c.0.s8 %v846
    %v848 = vperm.slane %v844, %v847
    %v849 = vrot.slane %v832, 4
    %v850 = vsel %vm213, %v849, %v830
    %v852 = vunpack.c.l.s4 1983009808
    %v853 = vunpack.c.0.s8 %v852
    %v854 = vperm.slane %v850, %v853
    %v855 = vrot.slane %v843, 4
    %v856 = vsel %vm213, %v855, %v837
    %v857 = vrot.slane %v837, 4
    %v858 = vsel %vm213, %v843, %v857
    %v860 = vunpack.c.l.s4 1934713408
    %v861 = vunpack.c.0.s8 %v860
    %v862 = vperm.slane %v856, %v861
    %v864 = vunpack.c.l.s4 1934713408
    %v865 = vunpack.c.0.s8 %v864
    %v866 = vperm.slane %v858, %v865
    %v867 = vrot.slane %v854, 4
    %v868 = vsel %vm213, %v867, %v848
    %v869 = vrot.slane %v848, 4
    %v870 = vsel %vm213, %v854, %v869
    %v872 = vunpack.c.l.s4 1934713408
    %v873 = vunpack.c.0.s8 %v872
    %v874 = vperm.slane %v868, %v873
    %v876 = vunpack.c.l.s4 1934713408
    %v877 = vunpack.c.0.s8 %v876
    %v878 = vperm.slane %v870, %v877
    %v879 = vrot.slane %v874, 4
    %v880 = vsel %vm213, %v879, %v862
    %v881 = vrot.slane %v862, 4
    %v882 = vsel %vm213, %v874, %v881
    %v883 = vrot.slane %v878, 4
    %v884 = vsel %vm213, %v883, %v866
    %v885 = vrot.slane %v866, 4
    %v886 = vsel %vm213, %v878, %v885
    %888 = vrot.lane.b32.xlu0 %v882, 8
    %v889 = vpop.permute.xlu0 %888
    %892 = vrot.lane.b32.xlu0 %v884, 16
    %v893 = vpop.permute.xlu0 %892
    %896 = vrot.lane.b32.xlu0 %v886, 24
    %v897 = vpop.permute.xlu0 %896
    %v899 = vsel %vm575, %v880, %v889
    %vm900 = vcmask 130048
    %v901 = vsel %vm900, %v899, %v893
    %vm902 = vcmask 195584
    %v903 = vsel %vm902, %v901, %v897
    %v904 = vpack.c.bf16 %v903, %v903
    %v905 = vperm.slane %v99, 3
    %v910 = vunpack.c.l.b16 %v198
    %v911 = vunpack.c.l.b16 %v199
    %v912 = vunpack.c.l.b16 %v200
    %v913 = vunpack.c.l.b16 %v201
    %v914 = vpack.c.b16 %v911, %v910
    %v915 = vpack.c.b16 %v913, %v912
    %v919 = vsel %vm119, %v904, 0
    %921 = vmatpush.bf16.msra.mxu0 0
    %922 = vmatpush.bf16.msra.mxu0 0
    %923 = vmatpush.bf16.msra.mxu0 0
    %924 = vmatpush.bf16.msra.mxu0 0
    %925 = vmatpush.bf16.msra.mxu0 0
    %926 = vmatpush.bf16.msra.mxu0 0
    %927 = vmatpush.bf16.msra.mxu0 %v915
    %928 = vmatpush.bf16.msra.mxu0 %v914
    %929 = vmatmul.bf16.gmra.mxu0 %v919
    %v930 = vpop.f32.mrf.mxu0
    %v931 = vadd.f32 %v905, %v930
    %v932 = vpop.f32.mrf.mxu0
    %933 = vdwg.mxu0
    %v934 = vadd.f32 %v98, %v931
    %v935 = vsel %vm119, %v934, 0.0
    %936 = vadd.xlane.f32.xlu0 %v935
    %v937 = vpop.xlane.xlu0 %936
    %v938 = vmul.f32 %v934, %v934
    %v939 = vsel %vm119, %v938, 0.0
    %940 = vadd.xlane.f32.xlu0 %v939
    %v941 = vpop.xlane.xlu0 %940
    %v942 = vmul.f32 %v937, 0.03125
    %v943 = vmul.f32 %v941, 0.03125
    %v944 = vmul.f32 %v942, %v942
    %v945 = vsub.f32 %v943, %v944
    %v946 = vsub.f32 %v934, %v942
    %v947 = vadd.f32 %v945, 1e-05
    %v948 = vrsqrt.pop %v947
    %v949 = vmul.f32 %v948, %v947
    %v950 = vmul.f32 %v949, %v948
    %v951 = vmul.f32 0.5, %v950
    %v952 = vsub.f32 1.5, %v951
    %v953 = vmul.f32 %v948, %v952
    %vm954 = vweird.f32 %v947
    %vm955 = vweird.f32 %v948
    %vm956 = vmor %vm954, %vm955
    %v957 = vsel %vm956, %v948, %v953
    %v958 = vmul.f32 %v946, %v957
    %v959 = vperm.slane %v100, 1
    %v960 = vmul.f32 %v958, %v959
    %v961 = vperm.slane %v100, 2
    %v962 = vadd.f32 %v960, %v961
    %v963 = vpack.c.bf16 %v962, %v962
    %s964 = scalar_lea.vmem [#allocation7], 48
    %v965 = vld [vmem:[%s964] sm:$0xf]
    %v966 = vld [vmem:[%s964 + $0x4] sm:$0xf]
    %v967 = vld [vmem:[%s964 + $0x8] sm:$0xf]
    %v968 = vld [vmem:[%s964 + $0xc] sm:$0xf]
    %v969 = vperm.slane %v99, 4
    %v974 = vunpack.c.l.b16 %v965
    %v975 = vunpack.c.l.b16 %v966
    %v976 = vunpack.c.l.b16 %v967
    %v977 = vunpack.c.l.b16 %v968
    %v978 = vpack.c.b16 %v975, %v974
    %v979 = vpack.c.b16 %v977, %v976
    %v983 = vsel %vm119, %v963, 0
    %985 = vmatpush.bf16.msra.mxu0 0
    %986 = vmatpush.bf16.msra.mxu0 0
    %987 = vmatpush.bf16.msra.mxu0 0
    %988 = vmatpush.bf16.msra.mxu0 0
    %989 = vmatpush.bf16.msra.mxu0 0
    %990 = vmatpush.bf16.msra.mxu0 0
    %991 = vmatpush.bf16.msra.mxu0 %v979
    %992 = vmatpush.bf16.msra.mxu0 %v978
    %993 = vmatmul.bf16.gmra.mxu0 %v983
    %v994 = vpop.f32.mrf.mxu0
    %v995 = vadd.f32 %v969, %v994
    %v996 = vpop.f32.mrf.mxu0
    %997 = vdwg.mxu0
    %s998 = scalar_lea.vmem [#allocation7], 64
    %v999 = vld [vmem:[%s998] sm:$0xf]
    %v1000 = vld [vmem:[%s998 + $0x4] sm:$0xf]
    %v1001 = vld [vmem:[%s998 + $0x8] sm:$0xf]
    %v1002 = vld [vmem:[%s998 + $0xc] sm:$0xf]
    %v1003 = vperm.slane %v99, 5
    %v1008 = vunpack.c.l.b16 %v999
    %v1009 = vunpack.c.l.b16 %v1000
    %v1010 = vunpack.c.l.b16 %v1001
    %v1011 = vunpack.c.l.b16 %v1002
    %v1012 = vpack.c.b16 %v1009, %v1008
    %v1013 = vpack.c.b16 %v1011, %v1010
    %v1017 = vsel %vm119, %v97, 0
    %1019 = vmatpush.bf16.msra.mxu0 0
    %1020 = vmatpush.bf16.msra.mxu0 0
    %1021 = vmatpush.bf16.msra.mxu0 0
    %1022 = vmatpush.bf16.msra.mxu0 0
    %1023 = vmatpush.bf16.msra.mxu0 0
    %1024 = vmatpush.bf16.msra.mxu0 0
    %1025 = vmatpush.bf16.msra.mxu0 %v1013
    %1026 = vmatpush.bf16.msra.mxu0 %v1012
    %1027 = vmatmul.bf16.gmra.mxu0 %v1017
    %v1028 = vpop.f32.mrf.mxu0
    %v1029 = vadd.f32 %v1003, %v1028
    %v1030 = vpop.f32.mrf.mxu0
    %v1031 = vadd.f32 %v1003, %v1030
    %1032 = vdwg.mxu0
    %s1033 = scalar_lea.vmem [#allocation7], 80
    %v1034 = vld [vmem:[%s1033] sm:$0xf]
    %v1035 = vld [vmem:[%s1033 + $0x4] sm:$0xf]
    %v1036 = vld [vmem:[%s1033 + $0x8] sm:$0xf]
    %v1037 = vld [vmem:[%s1033 + $0xc] sm:$0xf]
    %v1038 = vperm.slane %v99, 6
    %v1043 = vunpack.c.l.b16 %v1034
    %v1044 = vunpack.c.l.b16 %v1035
    %v1045 = vunpack.c.l.b16 %v1036
    %v1046 = vunpack.c.l.b16 %v1037
    %v1047 = vpack.c.b16 %v1044, %v1043
    %v1048 = vpack.c.b16 %v1046, %v1045
    %1051 = vmatpush.bf16.msra.mxu0 0
    %1052 = vmatpush.bf16.msra.mxu0 0
    %1053 = vmatpush.bf16.msra.mxu0 0
    %1054 = vmatpush.bf16.msra.mxu0 0
    %1055 = vmatpush.bf16.msra.mxu0 0
    %1056 = vmatpush.bf16.msra.mxu0 0
    %1057 = vmatpush.bf16.msra.mxu0 %v1048
    %1058 = vmatpush.bf16.msra.mxu0 %v1047
    %1059 = vmatmul.bf16.gmra.mxu0 %v1017
    %v1060 = vpop.f32.mrf.mxu0
    %v1061 = vadd.f32 %v1038, %v1060
    %v1062 = vpop.f32.mrf.mxu0
    %v1063 = vadd.f32 %v1038, %v1062
    %1064 = vdwg.mxu0
    %s1065 = scalar_lea.vmem %s3, 16
    %v1066 = vld [vmem:[%s1065] sm:$0xf]
    %v1067 = vld [vmem:[%s1065 + $0x4] sm:$0xf]
    %v1068 = vld [vmem:[%s1065 + $0x8] sm:$0xf]
    %v1069 = vld [vmem:[%s1065 + $0xc] sm:$0xf]
    %1071 = vrot.lane.b32.xlu0 %v995, 120
    %v1072 = vpop.permute.xlu0 %1071
    %1074 = vrot.lane.b32.xlu0 %v995, 112
    %v1075 = vpop.permute.xlu0 %1074
    %1077 = vrot.lane.b32.xlu0 %v995, 104
    %v1078 = vpop.permute.xlu0 %1077
    %v1080 = vrot.slane %v1075, 4
    %v1081 = vsel %vm213, %v1080, %v995
    %v1082 = vrot.slane %v995, 4
    %v1083 = vsel %vm213, %v1075, %v1082
    %v1085 = vunpack.c.l.s4 1983009808
    %v1086 = vunpack.c.0.s8 %v1085
    %v1087 = vperm.slane %v1081, %v1086
    %v1089 = vunpack.c.l.s4 1983009808
    %v1090 = vunpack.c.0.s8 %v1089
    %v1091 = vperm.slane %v1083, %v1090
    %v1092 = vrot.slane %v1078, 4
    %v1093 = vsel %vm213, %v1092, %v1072
    %v1094 = vrot.slane %v1072, 4
    %v1095 = vsel %vm213, %v1078, %v1094
    %v1097 = vunpack.c.l.s4 1983009808
    %v1098 = vunpack.c.0.s8 %v1097
    %v1099 = vperm.slane %v1093, %v1098
    %v1101 = vunpack.c.l.s4 1983009808
    %v1102 = vunpack.c.0.s8 %v1101
    %v1103 = vperm.slane %v1095, %v1102
    %v1104 = vrot.slane %v1099, 4
    %v1105 = vsel %vm213, %v1104, %v1087
    %v1106 = vrot.slane %v1087, 4
    %v1107 = vsel %vm213, %v1099, %v1106
    %v1109 = vunpack.c.l.s4 1934713408
    %v1110 = vunpack.c.0.s8 %v1109
    %v1111 = vperm.slane %v1105, %v1110
    %v1113 = vunpack.c.l.s4 1934713408
    %v1114 = vunpack.c.0.s8 %v1113
    %v1115 = vperm.slane %v1107, %v1114
    %v1116 = vrot.slane %v1103, 4
    %v1117 = vsel %vm213, %v1116, %v1091
    %v1118 = vrot.slane %v1091, 4
    %v1119 = vsel %vm213, %v1103, %v1118
    %v1121 = vunpack.c.l.s4 1934713408
    %v1122 = vunpack.c.0.s8 %v1121
    %v1123 = vperm.slane %v1117, %v1122
    %v1125 = vunpack.c.l.s4 1934713408
    %v1126 = vunpack.c.0.s8 %v1125
    %v1127 = vperm.slane %v1119, %v1126
    %v1128 = vrot.slane %v1111, 4
    %v1129 = vsel %vm213, 0.0, %v1128
    %v1130 = vrot.slane %v1115, 4
    %v1131 = vsel %vm213, 0.0, %v1130
    %v1132 = vrot.slane %v1123, 4
    %v1133 = vsel %vm213, 0.0, %v1132
    %v1134 = vrot.slane %v1127, 4
    %v1135 = vsel %vm213, 0.0, %v1134
    %v1136 = vsel %vm213, %v1130, %v1111
    %v1138 = vunpack.c.l.s4 1983009808
    %v1139 = vunpack.c.0.s8 %v1138
    %v1140 = vperm.slane %v1136, %v1139
    %v1141 = vrot.slane %v1131, 4
    %v1142 = vsel %vm213, %v1141, %v1129
    %v1144 = vunpack.c.l.s4 1983009808
    %v1145 = vunpack.c.0.s8 %v1144
    %v1146 = vperm.slane %v1142, %v1145
    %v1147 = vsel %vm213, %v1134, %v1123
    %v1149 = vunpack.c.l.s4 1983009808
    %v1150 = vunpack.c.0.s8 %v1149
    %v1151 = vperm.slane %v1147, %v1150
    %v1152 = vrot.slane %v1135, 4
    %v1153 = vsel %vm213, %v1152, %v1133
    %v1155 = vunpack.c.l.s4 1983009808
    %v1156 = vunpack.c.0.s8 %v1155
    %v1157 = vperm.slane %v1153, %v1156
    %v1158 = vrot.slane %v1146, 4
    %v1159 = vsel %vm213, %v1158, %v1140
    %v1160 = vrot.slane %v1140, 4
    %v1161 = vsel %vm213, %v1146, %v1160
    %v1163 = vunpack.c.l.s4 1934713408
    %v1164 = vunpack.c.0.s8 %v1163
    %v1165 = vperm.slane %v1159, %v1164
    %v1167 = vunpack.c.l.s4 1934713408
    %v1168 = vunpack.c.0.s8 %v1167
    %v1169 = vperm.slane %v1161, %v1168
    %v1170 = vrot.slane %v1157, 4
    %v1171 = vsel %vm213, %v1170, %v1151
    %v1172 = vrot.slane %v1151, 4
    %v1173 = vsel %vm213, %v1157, %v1172
    %v1175 = vunpack.c.l.s4 1934713408
    %v1176 = vunpack.c.0.s8 %v1175
    %v1177 = vperm.slane %v1171, %v1176
    %v1179 = vunpack.c.l.s4 1934713408
    %v1180 = vunpack.c.0.s8 %v1179
    %v1181 = vperm.slane %v1173, %v1180
    %v1182 = vrot.slane %v1177, 4
    %v1183 = vsel %vm213, %v1182, %v1165
    %v1184 = vrot.slane %v1165, 4
    %v1185 = vsel %vm213, %v1177, %v1184
    %v1186 = vrot.slane %v1181, 4
    %v1187 = vsel %vm213, %v1186, %v1169
    %v1188 = vrot.slane %v1169, 4
    %v1189 = vsel %vm213, %v1181, %v1188
    %v1190 = vpack.c.bf16 %v1183, %v1183
    %v1191 = vpack.c.bf16 %v1185, %v1185
    %v1192 = vpack.c.bf16 %v1187, %v1187
    %v1193 = vpack.c.bf16 %v1189, %v1189
    %1196 = vrot.lane.b32.xlu0 %v1029, 120
    %v1197 = vpop.permute.xlu0 %1196
    %1198 = vrot.lane.b32.xlu0 %v1031, 120
    %v1199 = vpop.permute.xlu0 %1198
    %1202 = vrot.lane.b32.xlu0 %v1029, 112
    %v1203 = vpop.permute.xlu0 %1202
    %1204 = vrot.lane.b32.xlu0 %v1031, 112
    %v1205 = vpop.permute.xlu0 %1204
    %1208 = vrot.lane.b32.xlu0 %v1029, 104
    %v1209 = vpop.permute.xlu0 %1208
    %1210 = vrot.lane.b32.xlu0 %v1031, 104
    %v1211 = vpop.permute.xlu0 %1210
    %v1214 = vrot.slane %v1203, 4
    %v1215 = vsel %vm213, %v1214, %v1029
    %v1216 = vrot.slane %v1029, 4
    %v1217 = vsel %vm213, %v1203, %v1216
    %v1219 = vunpack.c.l.s4 1983009808
    %v1220 = vunpack.c.0.s8 %v1219
    %v1221 = vperm.slane %v1215, %v1220
    %v1223 = vunpack.c.l.s4 1983009808
    %v1224 = vunpack.c.0.s8 %v1223
    %v1225 = vperm.slane %v1217, %v1224
    %v1226 = vrot.slane %v1209, 4
    %v1227 = vsel %vm213, %v1226, %v1197
    %v1228 = vrot.slane %v1197, 4
    %v1229 = vsel %vm213, %v1209, %v1228
    %v1231 = vunpack.c.l.s4 1983009808
    %v1232 = vunpack.c.0.s8 %v1231
    %v1233 = vperm.slane %v1227, %v1232
    %v1235 = vunpack.c.l.s4 1983009808
    %v1236 = vunpack.c.0.s8 %v1235
    %v1237 = vperm.slane %v1229, %v1236
    %v1238 = vrot.slane %v1233, 4
    %v1239 = vsel %vm213, %v1238, %v1221
    %v1240 = vrot.slane %v1221, 4
    %v1241 = vsel %vm213, %v1233, %v1240
    %v1243 = vunpack.c.l.s4 1934713408
    %v1244 = vunpack.c.0.s8 %v1243
    %v1245 = vperm.slane %v1239, %v1244
    %v1247 = vunpack.c.l.s4 1934713408
    %v1248 = vunpack.c.0.s8 %v1247
    %v1249 = vperm.slane %v1241, %v1248
    %v1250 = vrot.slane %v1237, 4
    %v1251 = vsel %vm213, %v1250, %v1225
    %v1252 = vrot.slane %v1225, 4
    %v1253 = vsel %vm213, %v1237, %v1252
    %v1255 = vunpack.c.l.s4 1934713408
    %v1256 = vunpack.c.0.s8 %v1255
    %v1257 = vperm.slane %v1251, %v1256
    %v1259 = vunpack.c.l.s4 1934713408
    %v1260 = vunpack.c.0.s8 %v1259
    %v1261 = vperm.slane %v1253, %v1260
    %v1262 = vrot.slane %v1245, 4
    %v1263 = vsel %vm213, 0.0, %v1262
    %v1264 = vrot.slane %v1249, 4
    %v1265 = vsel %vm213, 0.0, %v1264
    %v1266 = vrot.slane %v1257, 4
    %v1267 = vsel %vm213, 0.0, %v1266
    %v1268 = vrot.slane %v1261, 4
    %v1269 = vsel %vm213, 0.0, %v1268
    %v1270 = vrot.slane %v1205, 4
    %v1271 = vsel %vm213, %v1270, %v1031
    %v1272 = vrot.slane %v1031, 4
    %v1273 = vsel %vm213, %v1205, %v1272
    %v1275 = vunpack.c.l.s4 1983009808
    %v1276 = vunpack.c.0.s8 %v1275
    %v1277 = vperm.slane %v1271, %v1276
    %v1279 = vunpack.c.l.s4 1983009808
    %v1280 = vunpack.c.0.s8 %v1279
    %v1281 = vperm.slane %v1273, %v1280
    %v1282 = vrot.slane %v1211, 4
    %v1283 = vsel %vm213, %v1282, %v1199
    %v1284 = vrot.slane %v1199, 4
    %v1285 = vsel %vm213, %v1211, %v1284
    %v1287 = vunpack.c.l.s4 1983009808
    %v1288 = vunpack.c.0.s8 %v1287
    %v1289 = vperm.slane %v1283, %v1288
    %v1291 = vunpack.c.l.s4 1983009808
    %v1292 = vunpack.c.0.s8 %v1291
    %v1293 = vperm.slane %v1285, %v1292
    %v1294 = vrot.slane %v1289, 4
    %v1295 = vsel %vm213, %v1294, %v1277
    %v1296 = vrot.slane %v1277, 4
    %v1297 = vsel %vm213, %v1289, %v1296
    %v1299 = vunpack.c.l.s4 1934713408
    %v1300 = vunpack.c.0.s8 %v1299
    %v1301 = vperm.slane %v1295, %v1300
    %v1303 = vunpack.c.l.s4 1934713408
    %v1304 = vunpack.c.0.s8 %v1303
    %v1305 = vperm.slane %v1297, %v1304
    %v1306 = vrot.slane %v1293, 4
    %v1307 = vsel %vm213, %v1306, %v1281
    %v1308 = vrot.slane %v1281, 4
    %v1309 = vsel %vm213, %v1293, %v1308
    %v1311 = vunpack.c.l.s4 1934713408
    %v1312 = vunpack.c.0.s8 %v1311
    %v1313 = vperm.slane %v1307, %v1312
    %v1315 = vunpack.c.l.s4 1934713408
    %v1316 = vunpack.c.0.s8 %v1315
    %v1317 = vperm.slane %v1309, %v1316
    %v1318 = vrot.slane %v1301, 4
    %v1319 = vsel %vm213, 0.0, %v1318
    %v1320 = vrot.slane %v1305, 4
    %v1321 = vsel %vm213, 0.0, %v1320
    %v1322 = vrot.slane %v1313, 4
    %v1323 = vsel %vm213, 0.0, %v1322
    %v1324 = vrot.slane %v1317, 4
    %v1325 = vsel %vm213, 0.0, %v1324
    %v1326 = vsel %vm213, %v1264, %v1245
    %v1328 = vunpack.c.l.s4 1983009808
    %v1329 = vunpack.c.0.s8 %v1328
    %v1330 = vperm.slane %v1326, %v1329
    %v1331 = vrot.slane %v1265, 4
    %v1332 = vsel %vm213, %v1331, %v1263
    %v1334 = vunpack.c.l.s4 1983009808
    %v1335 = vunpack.c.0.s8 %v1334
    %v1336 = vperm.slane %v1332, %v1335
    %v1337 = vsel %vm213, %v1268, %v1257
    %v1339 = vunpack.c.l.s4 1983009808
    %v1340 = vunpack.c.0.s8 %v1339
    %v1341 = vperm.slane %v1337, %v1340
    %v1342 = vrot.slane %v1269, 4
    %v1343 = vsel %vm213, %v1342, %v1267
    %v1345 = vunpack.c.l.s4 1983009808
    %v1346 = vunpack.c.0.s8 %v1345
    %v1347 = vperm.slane %v1343, %v1346
    %v1348 = vrot.slane %v1336, 4
    %v1349 = vsel %vm213, %v1348, %v1330
    %v1350 = vrot.slane %v1330, 4
    %v1351 = vsel %vm213, %v1336, %v1350
    %v1353 = vunpack.c.l.s4 1934713408
    %v1354 = vunpack.c.0.s8 %v1353
    %v1355 = vperm.slane %v1349, %v1354
    %v1357 = vunpack.c.l.s4 1934713408
    %v1358 = vunpack.c.0.s8 %v1357
    %v1359 = vperm.slane %v1351, %v1358
    %v1360 = vrot.slane %v1347, 4
    %v1361 = vsel %vm213, %v1360, %v1341
    %v1362 = vrot.slane %v1341, 4
    %v1363 = vsel %vm213, %v1347, %v1362
    %v1365 = vunpack.c.l.s4 1934713408
    %v1366 = vunpack.c.0.s8 %v1365
    %v1367 = vperm.slane %v1361, %v1366
    %v1369 = vunpack.c.l.s4 1934713408
    %v1370 = vunpack.c.0.s8 %v1369
    %v1371 = vperm.slane %v1363, %v1370
    %v1372 = vrot.slane %v1367, 4
    %v1373 = vsel %vm213, %v1372, %v1355
    %v1374 = vrot.slane %v1355, 4
    %v1375 = vsel %vm213, %v1367, %v1374
    %v1376 = vrot.slane %v1371, 4
    %v1377 = vsel %vm213, %v1376, %v1359
    %v1378 = vrot.slane %v1359, 4
    %v1379 = vsel %vm213, %v1371, %v1378
    %v1380 = vsel %vm213, %v1320, %v1301
    %v1382 = vunpack.c.l.s4 1983009808
    %v1383 = vunpack.c.0.s8 %v1382
    %v1384 = vperm.slane %v1380, %v1383
    %v1385 = vrot.slane %v1321, 4
    %v1386 = vsel %vm213, %v1385, %v1319
    %v1388 = vunpack.c.l.s4 1983009808
    %v1389 = vunpack.c.0.s8 %v1388
    %v1390 = vperm.slane %v1386, %v1389
    %v1391 = vsel %vm213, %v1324, %v1313
    %v1393 = vunpack.c.l.s4 1983009808
    %v1394 = vunpack.c.0.s8 %v1393
    %v1395 = vperm.slane %v1391, %v1394
    %v1396 = vrot.slane %v1325, 4
    %v1397 = vsel %vm213, %v1396, %v1323
    %v1399 = vunpack.c.l.s4 1983009808
    %v1400 = vunpack.c.0.s8 %v1399
    %v1401 = vperm.slane %v1397, %v1400
    %v1402 = vrot.slane %v1390, 4
    %v1403 = vsel %vm213, %v1402, %v1384
    %v1404 = vrot.slane %v1384, 4
    %v1405 = vsel %vm213, %v1390, %v1404
    %v1407 = vunpack.c.l.s4 1934713408
    %v1408 = vunpack.c.0.s8 %v1407
    %v1409 = vperm.slane %v1403, %v1408
    %v1411 = vunpack.c.l.s4 1934713408
    %v1412 = vunpack.c.0.s8 %v1411
    %v1413 = vperm.slane %v1405, %v1412
    %v1414 = vrot.slane %v1401, 4
    %v1415 = vsel %vm213, %v1414, %v1395
    %v1416 = vrot.slane %v1395, 4
    %v1417 = vsel %vm213, %v1401, %v1416
    %v1419 = vunpack.c.l.s4 1934713408
    %v1420 = vunpack.c.0.s8 %v1419
    %v1421 = vperm.slane %v1415, %v1420
    %v1423 = vunpack.c.l.s4 1934713408
    %v1424 = vunpack.c.0.s8 %v1423
    %v1425 = vperm.slane %v1417, %v1424
    %v1426 = vrot.slane %v1421, 4
    %v1427 = vsel %vm213, %v1426, %v1409
    %v1428 = vrot.slane %v1409, 4
    %v1429 = vsel %vm213, %v1421, %v1428
    %v1430 = vrot.slane %v1425, 4
    %v1431 = vsel %vm213, %v1430, %v1413
    %v1432 = vrot.slane %v1413, 4
    %v1433 = vsel %vm213, %v1425, %v1432
    %v1434 = vpack.c.bf16 %v1373, %v1373
    %v1435 = vpack.c.bf16 %v1427, %v1427
    %v1436 = vpack.c.bf16 %v1375, %v1375
    %v1437 = vpack.c.bf16 %v1429, %v1429
    %v1438 = vpack.c.bf16 %v1377, %v1377
    %v1439 = vpack.c.bf16 %v1431, %v1431
    %v1440 = vpack.c.bf16 %v1379, %v1379
    %v1441 = vpack.c.bf16 %v1433, %v1433
    %1444 = vrot.lane.b32.xlu0 %v1061, 120
    %v1445 = vpop.permute.xlu0 %1444
    %1446 = vrot.lane.b32.xlu0 %v1063, 120
    %v1447 = vpop.permute.xlu0 %1446
    %1450 = vrot.lane.b32.xlu0 %v1061, 112
    %v1451 = vpop.permute.xlu0 %1450
    %1452 = vrot.lane.b32.xlu0 %v1063, 112
    %v1453 = vpop.permute.xlu0 %1452
    %1456 = vrot.lane.b32.xlu0 %v1061, 104
    %v1457 = vpop.permute.xlu0 %1456
    %1458 = vrot.lane.b32.xlu0 %v1063, 104
    %v1459 = vpop.permute.xlu0 %1458
    %v1462 = vrot.slane %v1451, 4
    %v1463 = vsel %vm213, %v1462, %v1061
    %v1464 = vrot.slane %v1061, 4
    %v1465 = vsel %vm213, %v1451, %v1464
    %v1467 = vunpack.c.l.s4 1983009808
    %v1468 = vunpack.c.0.s8 %v1467
    %v1469 = vperm.slane %v1463, %v1468
    %v1471 = vunpack.c.l.s4 1983009808
    %v1472 = vunpack.c.0.s8 %v1471
    %v1473 = vperm.slane %v1465, %v1472
    %v1474 = vrot.slane %v1457, 4
    %v1475 = vsel %vm213, %v1474, %v1445
    %v1476 = vrot.slane %v1445, 4
    %v1477 = vsel %vm213, %v1457, %v1476
    %v1479 = vunpack.c.l.s4 1983009808
    %v1480 = vunpack.c.0.s8 %v1479
    %v1481 = vperm.slane %v1475, %v1480
    %v1483 = vunpack.c.l.s4 1983009808
    %v1484 = vunpack.c.0.s8 %v1483
    %v1485 = vperm.slane %v1477, %v1484
    %v1486 = vrot.slane %v1481, 4
    %v1487 = vsel %vm213, %v1486, %v1469
    %v1488 = vrot.slane %v1469, 4
    %v1489 = vsel %vm213, %v1481, %v1488
    %v1491 = vunpack.c.l.s4 1934713408
    %v1492 = vunpack.c.0.s8 %v1491
    %v1493 = vperm.slane %v1487, %v1492
    %v1495 = vunpack.c.l.s4 1934713408
    %v1496 = vunpack.c.0.s8 %v1495
    %v1497 = vperm.slane %v1489, %v1496
    %v1498 = vrot.slane %v1485, 4
    %v1499 = vsel %vm213, %v1498, %v1473
    %v1500 = vrot.slane %v1473, 4
    %v1501 = vsel %vm213, %v1485, %v1500
    %v1503 = vunpack.c.l.s4 1934713408
    %v1504 = vunpack.c.0.s8 %v1503
    %v1505 = vperm.slane %v1499, %v1504
    %v1507 = vunpack.c.l.s4 1934713408
    %v1508 = vunpack.c.0.s8 %v1507
    %v1509 = vperm.slane %v1501, %v1508
    %v1510 = vrot.slane %v1493, 4
    %v1511 = vsel %vm213, 0.0, %v1510
    %v1512 = vrot.slane %v1497, 4
    %v1513 = vsel %vm213, 0.0, %v1512
    %v1514 = vrot.slane %v1505, 4
    %v1515 = vsel %vm213, 0.0, %v1514
    %v1516 = vrot.slane %v1509, 4
    %v1517 = vsel %vm213, 0.0, %v1516
    %v1518 = vrot.slane %v1453, 4
    %v1519 = vsel %vm213, %v1518, %v1063
    %v1520 = vrot.slane %v1063, 4
    %v1521 = vsel %vm213, %v1453, %v1520
    %v1523 = vunpack.c.l.s4 1983009808
    %v1524 = vunpack.c.0.s8 %v1523
    %v1525 = vperm.slane %v1519, %v1524
    %v1527 = vunpack.c.l.s4 1983009808
    %v1528 = vunpack.c.0.s8 %v1527
    %v1529 = vperm.slane %v1521, %v1528
    %v1530 = vrot.slane %v1459, 4
    %v1531 = vsel %vm213, %v1530, %v1447
    %v1532 = vrot.slane %v1447, 4
    %v1533 = vsel %vm213, %v1459, %v1532
    %v1535 = vunpack.c.l.s4 1983009808
    %v1536 = vunpack.c.0.s8 %v1535
    %v1537 = vperm.slane %v1531, %v1536
    %v1539 = vunpack.c.l.s4 1983009808
    %v1540 = vunpack.c.0.s8 %v1539
    %v1541 = vperm.slane %v1533, %v1540
    %v1542 = vrot.slane %v1537, 4
    %v1543 = vsel %vm213, %v1542, %v1525
    %v1544 = vrot.slane %v1525, 4
    %v1545 = vsel %vm213, %v1537, %v1544
    %v1547 = vunpack.c.l.s4 1934713408
    %v1548 = vunpack.c.0.s8 %v1547
    %v1549 = vperm.slane %v1543, %v1548
    %v1551 = vunpack.c.l.s4 1934713408
    %v1552 = vunpack.c.0.s8 %v1551
    %v1553 = vperm.slane %v1545, %v1552
    %v1554 = vrot.slane %v1541, 4
    %v1555 = vsel %vm213, %v1554, %v1529
    %v1556 = vrot.slane %v1529, 4
    %v1557 = vsel %vm213, %v1541, %v1556
    %v1559 = vunpack.c.l.s4 1934713408
    %v1560 = vunpack.c.0.s8 %v1559
    %v1561 = vperm.slane %v1555, %v1560
    %v1563 = vunpack.c.l.s4 1934713408
    %v1564 = vunpack.c.0.s8 %v1563
    %v1565 = vperm.slane %v1557, %v1564
    %v1566 = vrot.slane %v1549, 4
    %v1567 = vsel %vm213, 0.0, %v1566
    %v1568 = vrot.slane %v1553, 4
    %v1569 = vsel %vm213, 0.0, %v1568
    %v1570 = vrot.slane %v1561, 4
    %v1571 = vsel %vm213, 0.0, %v1570
    %v1572 = vrot.slane %v1565, 4
    %v1573 = vsel %vm213, 0.0, %v1572
    %v1574 = vsel %vm213, %v1512, %v1493
    %v1576 = vunpack.c.l.s4 1983009808
    %v1577 = vunpack.c.0.s8 %v1576
    %v1578 = vperm.slane %v1574, %v1577
    %v1579 = vrot.slane %v1513, 4
    %v1580 = vsel %vm213, %v1579, %v1511
    %v1582 = vunpack.c.l.s4 1983009808
    %v1583 = vunpack.c.0.s8 %v1582
    %v1584 = vperm.slane %v1580, %v1583
    %v1585 = vsel %vm213, %v1516, %v1505
    %v1587 = vunpack.c.l.s4 1983009808
    %v1588 = vunpack.c.0.s8 %v1587
    %v1589 = vperm.slane %v1585, %v1588
    %v1590 = vrot.slane %v1517, 4
    %v1591 = vsel %vm213, %v1590, %v1515
    %v1593 = vunpack.c.l.s4 1983009808
    %v1594 = vunpack.c.0.s8 %v1593
    %v1595 = vperm.slane %v1591, %v1594
    %v1596 = vrot.slane %v1584, 4
    %v1597 = vsel %vm213, %v1596, %v1578
    %v1598 = vrot.slane %v1578, 4
    %v1599 = vsel %vm213, %v1584, %v1598
    %v1601 = vunpack.c.l.s4 1934713408
    %v1602 = vunpack.c.0.s8 %v1601
    %v1603 = vperm.slane %v1597, %v1602
    %v1605 = vunpack.c.l.s4 1934713408
    %v1606 = vunpack.c.0.s8 %v1605
    %v1607 = vperm.slane %v1599, %v1606
    %v1608 = vrot.slane %v1595, 4
    %v1609 = vsel %vm213, %v1608, %v1589
    %v1610 = vrot.slane %v1589, 4
    %v1611 = vsel %vm213, %v1595, %v1610
    %v1613 = vunpack.c.l.s4 1934713408
    %v1614 = vunpack.c.0.s8 %v1613
    %v1615 = vperm.slane %v1609, %v1614
    %v1617 = vunpack.c.l.s4 1934713408
    %v1618 = vunpack.c.0.s8 %v1617
    %v1619 = vperm.slane %v1611, %v1618
    %v1620 = vrot.slane %v1615, 4
    %v1621 = vsel %vm213, %v1620, %v1603
    %v1622 = vrot.slane %v1603, 4
    %v1623 = vsel %vm213, %v1615, %v1622
    %v1624 = vrot.slane %v1619, 4
    %v1625 = vsel %vm213, %v1624, %v1607
    %v1626 = vrot.slane %v1607, 4
    %v1627 = vsel %vm213, %v1619, %v1626
    %v1628 = vsel %vm213, %v1568, %v1549
    %v1630 = vunpack.c.l.s4 1983009808
    %v1631 = vunpack.c.0.s8 %v1630
    %v1632 = vperm.slane %v1628, %v1631
    %v1633 = vrot.slane %v1569, 4
    %v1634 = vsel %vm213, %v1633, %v1567
    %v1636 = vunpack.c.l.s4 1983009808
    %v1637 = vunpack.c.0.s8 %v1636
    %v1638 = vperm.slane %v1634, %v1637
    %v1639 = vsel %vm213, %v1572, %v1561
    %v1641 = vunpack.c.l.s4 1983009808
    %v1642 = vunpack.c.0.s8 %v1641
    %v1643 = vperm.slane %v1639, %v1642
    %v1644 = vrot.slane %v1573, 4
    %v1645 = vsel %vm213, %v1644, %v1571
    %v1647 = vunpack.c.l.s4 1983009808
    %v1648 = vunpack.c.0.s8 %v1647
    %v1649 = vperm.slane %v1645, %v1648
    %v1650 = vrot.slane %v1638, 4
    %v1651 = vsel %vm213, %v1650, %v1632
    %v1652 = vrot.slane %v1632, 4
    %v1653 = vsel %vm213, %v1638, %v1652
    %v1655 = vunpack.c.l.s4 1934713408
    %v1656 = vunpack.c.0.s8 %v1655
    %v1657 = vperm.slane %v1651, %v1656
    %v1659 = vunpack.c.l.s4 1934713408
    %v1660 = vunpack.c.0.s8 %v1659
    %v1661 = vperm.slane %v1653, %v1660
    %v1662 = vrot.slane %v1649, 4
    %v1663 = vsel %vm213, %v1662, %v1643
    %v1664 = vrot.slane %v1643, 4
    %v1665 = vsel %vm213, %v1649, %v1664
    %v1667 = vunpack.c.l.s4 1934713408
    %v1668 = vunpack.c.0.s8 %v1667
    %v1669 = vperm.slane %v1663, %v1668
    %v1671 = vunpack.c.l.s4 1934713408
    %v1672 = vunpack.c.0.s8 %v1671
    %v1673 = vperm.slane %v1665, %v1672
    %v1674 = vrot.slane %v1669, 4
    %v1675 = vsel %vm213, %v1674, %v1657
    %v1676 = vrot.slane %v1657, 4
    %v1677 = vsel %vm213, %v1669, %v1676
    %v1678 = vrot.slane %v1673, 4
    %v1679 = vsel %vm213, %v1678, %v1661
    %v1680 = vrot.slane %v1661, 4
    %v1681 = vsel %vm213, %v1673, %v1680
    %v1682 = vpack.c.bf16 %v1621, %v1621
    %v1683 = vpack.c.bf16 %v1675, %v1675
    %v1684 = vpack.c.bf16 %v1623, %v1623
    %v1685 = vpack.c.bf16 %v1677, %v1677
    %v1686 = vpack.c.bf16 %v1625, %v1625
    %v1687 = vpack.c.bf16 %v1679, %v1679
    %v1688 = vpack.c.bf16 %v1627, %v1627
    %v1689 = vpack.c.bf16 %v1681, %v1681
    %v1692 = vunpack.c.l.b16 %v1434
    %v1693 = vunpack.c.l.b16 %v1435
    %v1694 = vpack.c.b16 %v1693, %v1692
    %v1696 = vsel %vm575, %v1190, 0
    %v1699 = vsel %vm575, %v1694, 0
    %1701 = vmatpush.bf16.xpose.msra.mxu0 0
    %1702 = vmatpush.bf16.xpose.msra.mxu0 0
    %1703 = vmatpush.bf16.xpose.msra.mxu0 0
    %1704 = vmatpush.bf16.xpose.msra.mxu0 0
    %1705 = vmatpush.bf16.xpose.msra.mxu0 0
    %1706 = vmatpush.bf16.xpose.msra.mxu0 0
    %1707 = vmatpush.bf16.xpose.msra.mxu0 0
    %1708 = vmatpush.bf16.xpose.msra.mxu0 %v1699
    %1709 = vmatmul.bf16.gmra.mxu0 %v1696
    %v1710 = vpop.f32.mrf.mxu0
    %v1711 = vadd.f32 0.0, %v1710
    %v1712 = vpop.f32.mrf.mxu0
    %1713 = vdwg.mxu0
    %v1716 = vunpack.c.l.b16 %v1436
    %v1717 = vunpack.c.l.b16 %v1437
    %v1718 = vpack.c.b16 %v1717, %v1716
    %v1720 = vsel %vm575, %v1191, 0
    %v1723 = vsel %vm575, %v1718, 0
    %1725 = vmatpush.bf16.xpose.msra.mxu0 0
    %1726 = vmatpush.bf16.xpose.msra.mxu0 0
    %1727 = vmatpush.bf16.xpose.msra.mxu0 0
    %1728 = vmatpush.bf16.xpose.msra.mxu0 0
    %1729 = vmatpush.bf16.xpose.msra.mxu0 0
    %1730 = vmatpush.bf16.xpose.msra.mxu0 0
    %1731 = vmatpush.bf16.xpose.msra.mxu0 0
    %1732 = vmatpush.bf16.xpose.msra.mxu0 %v1723
    %1733 = vmatmul.bf16.gmra.mxu0 %v1720
    %v1734 = vpop.f32.mrf.mxu0
    %v1735 = vadd.f32 0.0, %v1734
    %v1736 = vpop.f32.mrf.mxu0
    %1737 = vdwg.mxu0
    %v1740 = vunpack.c.l.b16 %v1438
    %v1741 = vunpack.c.l.b16 %v1439
    %v1742 = vpack.c.b16 %v1741, %v1740
    %v1744 = vsel %vm575, %v1192, 0
    %v1747 = vsel %vm575, %v1742, 0
    %1749 = vmatpush.bf16.xpose.msra.mxu0 0
    %1750 = vmatpush.bf16.xpose.msra.mxu0 0
    %1751 = vmatpush.bf16.xpose.msra.mxu0 0
    %1752 = vmatpush.bf16.xpose.msra.mxu0 0
    %1753 = vmatpush.bf16.xpose.msra.mxu0 0
    %1754 = vmatpush.bf16.xpose.msra.mxu0 0
    %1755 = vmatpush.bf16.xpose.msra.mxu0 0
    %1756 = vmatpush.bf16.xpose.msra.mxu0 %v1747
    %1757 = vmatmul.bf16.gmra.mxu0 %v1744
    %v1758 = vpop.f32.mrf.mxu0
    %v1759 = vadd.f32 0.0, %v1758
    %v1760 = vpop.f32.mrf.mxu0
    %1761 = vdwg.mxu0
    %v1764 = vunpack.c.l.b16 %v1440
    %v1765 = vunpack.c.l.b16 %v1441
    %v1766 = vpack.c.b16 %v1765, %v1764
    %v1768 = vsel %vm575, %v1193, 0
    %v1771 = vsel %vm575, %v1766, 0
    %1773 = vmatpush.bf16.xpose.msra.mxu0 0
    %1774 = vmatpush.bf16.xpose.msra.mxu0 0
    %1775 = vmatpush.bf16.xpose.msra.mxu0 0
    %1776 = vmatpush.bf16.xpose.msra.mxu0 0
    %1777 = vmatpush.bf16.xpose.msra.mxu0 0
    %1778 = vmatpush.bf16.xpose.msra.mxu0 0
    %1779 = vmatpush.bf16.xpose.msra.mxu0 0
    %1780 = vmatpush.bf16.xpose.msra.mxu0 %v1771
    %1781 = vmatmul.bf16.gmra.mxu0 %v1768
    %v1782 = vpop.f32.mrf.mxu0
    %v1783 = vadd.f32 0.0, %v1782
    %v1784 = vpop.f32.mrf.mxu0
    %1785 = vdwg.mxu0
    %v1786 = vsel %vm900, %v1711, -inf
    %1787 = vmax.xlane.f32.xlu0 %v1786
    %v1788 = vpop.xlane.xlu0 %1787
    %v1789 = vsel %vm900, %v1735, -inf
    %1790 = vmax.xlane.f32.xlu0 %v1789
    %v1791 = vpop.xlane.xlu0 %1790
    %v1792 = vsel %vm900, %v1759, -inf
    %1793 = vmax.xlane.f32.xlu0 %v1792
    %v1794 = vpop.xlane.xlu0 %1793
    %v1795 = vsel %vm900, %v1783, -inf
    %1796 = vmax.xlane.f32.xlu0 %v1795
    %v1797 = vpop.xlane.xlu0 %1796
    %v1798 = vsub.f32 %v1711, %v1788
    %v1799 = vsub.f32 %v1735, %v1791
    %v1800 = vsub.f32 %v1759, %v1794
    %v1801 = vsub.f32 %v1783, %v1797
    %v1802 = vmul.f32 %v1798, 1.442695
    %v1803 = vpow.pop %v1802
    %v1804 = vmul.f32 %v1799, 1.442695
    %v1805 = vpow.pop %v1804
    %v1806 = vmul.f32 %v1800, 1.442695
    %v1807 = vpow.pop %v1806
    %v1808 = vmul.f32 %v1801, 1.442695
    %v1809 = vpow.pop %v1808
    %v1810 = vsel %vm900, %v1803, 0.0
    %1811 = vadd.xlane.f32.xlu0 %v1810
    %v1812 = vpop.xlane.xlu0 %1811
    %v1813 = vsel %vm900, %v1805, 0.0
    %1814 = vadd.xlane.f32.xlu0 %v1813
    %v1815 = vpop.xlane.xlu0 %1814
    %v1816 = vsel %vm900, %v1807, 0.0
    %1817 = vadd.xlane.f32.xlu0 %v1816
    %v1818 = vpop.xlane.xlu0 %1817
    %v1819 = vsel %vm900, %v1809, 0.0
    %1820 = vadd.xlane.f32.xlu0 %v1819
    %v1821 = vpop.xlane.xlu0 %1820
    %v1822 = vrcp.pop %v1812
    %v1823 = vrcp.pop %v1815
    %v1824 = vrcp.pop %v1818
    %v1825 = vrcp.pop %v1821
    %v1826 = vmul.f32 %v1803, %v1822
    %v1827 = vmul.f32 %v1805, %v1823
    %v1828 = vmul.f32 %v1807, %v1824
    %v1829 = vmul.f32 %v1809, %v1825
    %v1830 = vpack.c.bf16 %v1826, %v1826
    %v1831 = vpack.c.bf16 %v1827, %v1827
    %v1832 = vpack.c.bf16 %v1828, %v1828
    %v1833 = vpack.c.bf16 %v1829, %v1829
    %v1836 = vunpack.c.l.b16 %v1682
    %v1837 = vunpack.c.l.b16 %v1683
    %v1838 = vpack.c.b16 %v1837, %v1836
    %v1841 = vsel %vm900, %v1830, 0
    %1843 = vmatpush.bf16.msra.mxu0 0
    %1844 = vmatpush.bf16.msra.mxu0 0
    %1845 = vmatpush.bf16.msra.mxu0 0
    %1846 = vmatpush.bf16.msra.mxu0 0
    %1847 = vmatpush.bf16.msra.mxu0 0
    %1848 = vmatpush.bf16.msra.mxu0 0
    %1849 = vmatpush.bf16.msra.mxu0 0
    %1850 = vmatpush.bf16.msra.mxu0 %v1838
    %1851 = vmatmul.bf16.gmra.mxu0 %v1841
    %v1852 = vpop.f32.mrf.mxu0
    %v1853 = vadd.f32 0.0, %v1852
    %v1854 = vpop.f32.mrf.mxu0
    %1855 = vdwg.mxu0
    %v1858 = vunpack.c.l.b16 %v1684
    %v1859 = vunpack.c.l.b16 %v1685
    %v1860 = vpack.c.b16 %v1859, %v1858
    %v1863 = vsel %vm900, %v1831, 0
    %1865 = vmatpush.bf16.msra.mxu0 0
    %1866 = vmatpush.bf16.msra.mxu0 0
    %1867 = vmatpush.bf16.msra.mxu0 0
    %1868 = vmatpush.bf16.msra.mxu0 0
    %1869 = vmatpush.bf16.msra.mxu0 0
    %1870 = vmatpush.bf16.msra.mxu0 0
    %1871 = vmatpush.bf16.msra.mxu0 0
    %1872 = vmatpush.bf16.msra.mxu0 %v1860
    %1873 = vmatmul.bf16.gmra.mxu0 %v1863
    %v1874 = vpop.f32.mrf.mxu0
    %v1875 = vadd.f32 0.0, %v1874
    %v1876 = vpop.f32.mrf.mxu0
    %1877 = vdwg.mxu0
    %v1880 = vunpack.c.l.b16 %v1686
    %v1881 = vunpack.c.l.b16 %v1687
    %v1882 = vpack.c.b16 %v1881, %v1880
    %v1885 = vsel %vm900, %v1832, 0
    %1887 = vmatpush.bf16.msra.mxu0 0
    %1888 = vmatpush.bf16.msra.mxu0 0
    %1889 = vmatpush.bf16.msra.mxu0 0
    %1890 = vmatpush.bf16.msra.mxu0 0
    %1891 = vmatpush.bf16.msra.mxu0 0
    %1892 = vmatpush.bf16.msra.mxu0 0
    %1893 = vmatpush.bf16.msra.mxu0 0
    %1894 = vmatpush.bf16.msra.mxu0 %v1882
    %1895 = vmatmul.bf16.gmra.mxu0 %v1885
    %v1896 = vpop.f32.mrf.mxu0
    %v1897 = vadd.f32 0.0, %v1896
    %v1898 = vpop.f32.mrf.mxu0
    %1899 = vdwg.mxu0
    %v1902 = vunpack.c.l.b16 %v1688
    %v1903 = vunpack.c.l.b16 %v1689
    %v1904 = vpack.c.b16 %v1903, %v1902
    %v1907 = vsel %vm900, %v1833, 0
    %1909 = vmatpush.bf16.msra.mxu0 0
    %1910 = vmatpush.bf16.msra.mxu0 0
    %1911 = vmatpush.bf16.msra.mxu0 0
    %1912 = vmatpush.bf16.msra.mxu0 0
    %1913 = vmatpush.bf16.msra.mxu0 0
    %1914 = vmatpush.bf16.msra.mxu0 0
    %1915 = vmatpush.bf16.msra.mxu0 0
    %1916 = vmatpush.bf16.msra.mxu0 %v1904
    %1917 = vmatmul.bf16.gmra.mxu0 %v1907
    %v1918 = vpop.f32.mrf.mxu0
    %v1919 = vadd.f32 0.0, %v1918
    %v1920 = vpop.f32.mrf.mxu0
    %1921 = vdwg.mxu0
    %v1922 = vrot.slane %v1897, 4
    %v1923 = vsel %vm213, %v1922, %v1853
    %v1924 = vrot.slane %v1853, 4
    %v1925 = vsel %vm213, %v1897, %v1924
    %v1927 = vunpack.c.l.s4 1983009808
    %v1928 = vunpack.c.0.s8 %v1927
    %v1929 = vperm.slane %v1923, %v1928
    %v1931 = vunpack.c.l.s4 1983009808
    %v1932 = vunpack.c.0.s8 %v1931
    %v1933 = vperm.slane %v1925, %v1932
    %v1934 = vrot.slane %v1919, 4
    %v1935 = vsel %vm213, %v1934, %v1875
    %v1936 = vrot.slane %v1875, 4
    %v1937 = vsel %vm213, %v1919, %v1936
    %v1939 = vunpack.c.l.s4 1983009808
    %v1940 = vunpack.c.0.s8 %v1939
    %v1941 = vperm.slane %v1935, %v1940
    %v1943 = vunpack.c.l.s4 1983009808
    %v1944 = vunpack.c.0.s8 %v1943
    %v1945 = vperm.slane %v1937, %v1944
    %v1946 = vrot.slane %v1941, 4
    %v1947 = vsel %vm213, %v1946, %v1929
    %v1948 = vrot.slane %v1929, 4
    %v1949 = vsel %vm213, %v1941, %v1948
    %v1951 = vunpack.c.l.s4 1934713408
    %v1952 = vunpack.c.0.s8 %v1951
    %v1953 = vperm.slane %v1947, %v1952
    %v1955 = vunpack.c.l.s4 1934713408
    %v1956 = vunpack.c.0.s8 %v1955
    %v1957 = vperm.slane %v1949, %v1956
    %v1958 = vrot.slane %v1945, 4
    %v1959 = vsel %vm213, %v1958, %v1933
    %v1960 = vrot.slane %v1933, 4
    %v1961 = vsel %vm213, %v1945, %v1960
    %v1963 = vunpack.c.l.s4 1934713408
    %v1964 = vunpack.c.0.s8 %v1963
    %v1965 = vperm.slane %v1959, %v1964
    %v1967 = vunpack.c.l.s4 1934713408
    %v1968 = vunpack.c.0.s8 %v1967
    %v1969 = vperm.slane %v1961, %v1968
    %v1970 = vrot.slane %v1953, 4
    %v1971 = vsel %vm213, 0.0, %v1970
    %v1972 = vrot.slane %v1957, 4
    %v1973 = vsel %vm213, 0.0, %v1972
    %v1974 = vrot.slane %v1965, 4
    %v1975 = vsel %vm213, 0.0, %v1974
    %v1976 = vrot.slane %v1969, 4
    %v1977 = vsel %vm213, 0.0, %v1976
    %v1978 = vsel %vm213, %v1972, %v1953
    %v1980 = vunpack.c.l.s4 1983009808
    %v1981 = vunpack.c.0.s8 %v1980
    %v1982 = vperm.slane %v1978, %v1981
    %v1983 = vrot.slane %v1973, 4
    %v1984 = vsel %vm213, %v1983, %v1971
    %v1986 = vunpack.c.l.s4 1983009808
    %v1987 = vunpack.c.0.s8 %v1986
    %v1988 = vperm.slane %v1984, %v1987
    %v1989 = vsel %vm213, %v1976, %v1965
    %v1991 = vunpack.c.l.s4 1983009808
    %v1992 = vunpack.c.0.s8 %v1991
    %v1993 = vperm.slane %v1989, %v1992
    %v1994 = vrot.slane %v1977, 4
    %v1995 = vsel %vm213, %v1994, %v1975
    %v1997 = vunpack.c.l.s4 1983009808
    %v1998 = vunpack.c.0.s8 %v1997
    %v1999 = vperm.slane %v1995, %v1998
    %v2000 = vrot.slane %v1988, 4
    %v2001 = vsel %vm213, %v2000, %v1982
    %v2002 = vrot.slane %v1982, 4
    %v2003 = vsel %vm213, %v1988, %v2002
    %v2005 = vunpack.c.l.s4 1934713408
    %v2006 = vunpack.c.0.s8 %v2005
    %v2007 = vperm.slane %v2001, %v2006
    %v2009 = vunpack.c.l.s4 1934713408
    %v2010 = vunpack.c.0.s8 %v2009
    %v2011 = vperm.slane %v2003, %v2010
    %v2012 = vrot.slane %v1999, 4
    %v2013 = vsel %vm213, %v2012, %v1993
    %v2014 = vrot.slane %v1993, 4
    %v2015 = vsel %vm213, %v1999, %v2014
    %v2017 = vunpack.c.l.s4 1934713408
    %v2018 = vunpack.c.0.s8 %v2017
    %v2019 = vperm.slane %v2013, %v2018
    %v2021 = vunpack.c.l.s4 1934713408
    %v2022 = vunpack.c.0.s8 %v2021
    %v2023 = vperm.slane %v2015, %v2022
    %v2024 = vrot.slane %v2019, 4
    %v2025 = vsel %vm213, %v2024, %v2007
    %v2026 = vrot.slane %v2007, 4
    %v2027 = vsel %vm213, %v2019, %v2026
    %v2028 = vrot.slane %v2023, 4
    %v2029 = vsel %vm213, %v2028, %v2011
    %v2030 = vrot.slane %v2011, 4
    %v2031 = vsel %vm213, %v2023, %v2030
    %2033 = vrot.lane.b32.xlu0 %v2027, 8
    %v2034 = vpop.permute.xlu0 %2033
    %2037 = vrot.lane.b32.xlu0 %v2029, 16
    %v2038 = vpop.permute.xlu0 %2037
    %2041 = vrot.lane.b32.xlu0 %v2031, 24
    %v2042 = vpop.permute.xlu0 %2041
    %v2044 = vsel %vm575, %v2025, %v2034
    %v2045 = vsel %vm900, %v2044, %v2038
    %v2046 = vsel %vm902, %v2045, %v2042
    %v2047 = vpack.c.bf16 %v2046, %v2046
    %v2048 = vperm.slane %v99, 7
    %v2053 = vunpack.c.l.b16 %v1066
    %v2054 = vunpack.c.l.b16 %v1067
    %v2055 = vunpack.c.l.b16 %v1068
    %v2056 = vunpack.c.l.b16 %v1069
    %v2057 = vpack.c.b16 %v2054, %v2053
    %v2058 = vpack.c.b16 %v2056, %v2055
    %v2062 = vsel %vm119, %v2047, 0
    %2064 = vmatpush.bf16.msra.mxu0 0
    %2065 = vmatpush.bf16.msra.mxu0 0
    %2066 = vmatpush.bf16.msra.mxu0 0
    %2067 = vmatpush.bf16.msra.mxu0 0
    %2068 = vmatpush.bf16.msra.mxu0 0
    %2069 = vmatpush.bf16.msra.mxu0 0
    %2070 = vmatpush.bf16.msra.mxu0 %v2058
    %2071 = vmatpush.bf16.msra.mxu0 %v2057
    %2072 = vmatmul.bf16.gmra.mxu0 %v2062
    %v2073 = vpop.f32.mrf.mxu0
    %v2074 = vadd.f32 %v2048, %v2073
    %v2075 = vpop.f32.mrf.mxu0
    %2076 = vdwg.mxu0
    %v2077 = vadd.f32 %v962, %v2074
    %v2078 = vsel %vm119, %v2077, 0.0
    %2079 = vadd.xlane.f32.xlu0 %v2078
    %v2080 = vpop.xlane.xlu0 %2079
    %v2081 = vmul.f32 %v2077, %v2077
    %v2082 = vsel %vm119, %v2081, 0.0
    %2083 = vadd.xlane.f32.xlu0 %v2082
    %v2084 = vpop.xlane.xlu0 %2083
    %v2085 = vmul.f32 %v2080, 0.03125
    %v2086 = vmul.f32 %v2084, 0.03125
    %v2087 = vmul.f32 %v2085, %v2085
    %v2088 = vsub.f32 %v2086, %v2087
    %v2089 = vsub.f32 %v2077, %v2085
    %v2090 = vadd.f32 %v2088, 1e-05
    %v2091 = vrsqrt.pop %v2090
    %v2092 = vmul.f32 %v2091, %v2090
    %v2093 = vmul.f32 %v2092, %v2091
    %v2094 = vmul.f32 0.5, %v2093
    %v2095 = vsub.f32 1.5, %v2094
    %v2096 = vmul.f32 %v2091, %v2095
    %vm2097 = vweird.f32 %v2090
    %vm2098 = vweird.f32 %v2091
    %vm2099 = vmor %vm2097, %vm2098
    %v2100 = vsel %vm2099, %v2091, %v2096
    %v2101 = vmul.f32 %v2089, %v2100
    %v2102 = vperm.slane %v100, 3
    %v2103 = vmul.f32 %v2101, %v2102
    %v2104 = vperm.slane %v100, 4
    %v2105 = vadd.f32 %v2103, %v2104
    %v2106 = vpack.c.bf16 %v2105, %v2105
    %v2107 = vld [vmem:[%s4] sm:$0xf]
    %v2108 = vld [vmem:[%s4 + $0x4] sm:$0xf]
    %v2109 = vld [vmem:[%s4 + $0x8] sm:$0xf]
    %v2110 = vld [vmem:[%s4 + $0xc] sm:$0xf]
    %v2111 = vld [vmem:[%s7] sm:$0x1]
    %v2113 = vperm.slane %v2111, 0
    %v2119 = vunpack.c.l.b16 %v2107
    %v2120 = vunpack.c.l.b16 %v2108
    %v2121 = vunpack.c.l.b16 %v2109
    %v2122 = vunpack.c.l.b16 %v2110
    %v2123 = vpack.c.b16 %v2120, %v2119
    %v2124 = vpack.c.b16 %v2122, %v2121
    %v2128 = vsel %vm119, %v2106, 0
    %2130 = vmatpush.bf16.msra.mxu0 0
    %2131 = vmatpush.bf16.msra.mxu0 0
    %2132 = vmatpush.bf16.msra.mxu0 0
    %2133 = vmatpush.bf16.msra.mxu0 0
    %2134 = vmatpush.bf16.msra.mxu0 0
    %2135 = vmatpush.bf16.msra.mxu0 0
    %2136 = vmatpush.bf16.msra.mxu0 %v2124
    %2137 = vmatpush.bf16.msra.mxu0 %v2123
    %2138 = vmatmul.bf16.gmra.mxu0 %v2128
    %v2139 = vpop.f32.mrf.mxu0
    %v2140 = vadd.f32 %v2113, %v2139
    %v2141 = vpop.f32.mrf.mxu0
    %2142 = vdwg.mxu0
    %v2143 = vmax.f32 %v2140, 0.0
    %v2144 = vpack.c.bf16 %v2143, %v2143
    %v2145 = vld [vmem:[%s5] sm:$0xf]
    %v2146 = vld [vmem:[%s5 + $0x4] sm:$0xf]
    %v2147 = vld [vmem:[%s5 + $0x8] sm:$0xf]
    %v2148 = vld [vmem:[%s5 + $0xc] sm:$0xf]
    %v2149 = vld [vmem:[%s5 + $0x10] sm:$0xf]
    %v2150 = vld [vmem:[%s5 + $0x14] sm:$0xf]
    %v2151 = vld [vmem:[%s5 + $0x18] sm:$0xf]
    %v2152 = vld [vmem:[%s5 + $0x1c] sm:$0xf]
    %v2153 = vperm.slane %v100, 0
    %v2162 = vunpack.c.l.b16 %v2145
    %v2163 = vunpack.c.l.b16 %v2146
    %v2164 = vunpack.c.l.b16 %v2147
    %v2165 = vunpack.c.l.b16 %v2148
    %v2166 = vunpack.c.l.b16 %v2149
    %v2167 = vunpack.c.l.b16 %v2150
    %v2168 = vunpack.c.l.b16 %v2151
    %v2169 = vunpack.c.l.b16 %v2152
    %v2170 = vpack.c.b16 %v2163, %v2162
    %v2171 = vpack.c.b16 %v2165, %v2164
    %v2172 = vpack.c.b16 %v2167, %v2166
    %v2173 = vpack.c.b16 %v2169, %v2168
    %vm2178 = vcmask 523264
    %v2180 = vsel %vm2178, %v2144, 0
    %2182 = vmatpush.bf16.msra.mxu0 0
    %2183 = vmatpush.bf16.msra.mxu0 0
    %2184 = vmatpush.bf16.msra.mxu0 0
    %2185 = vmatpush.bf16.msra.mxu0 0
    %2186 = vmatpush.bf16.msra.mxu0 %v2173
    %2187 = vmatpush.bf16.msra.mxu0 %v2172
    %2188 = vmatpush.bf16.msra.mxu0 %v2171
    %2189 = vmatpush.bf16.msra.mxu0 %v2170
    %2190 = vmatmul.bf16.gmra.mxu0 %v2180
    %v2191 = vpop.f32.mrf.mxu0
    %v2192 = vadd.f32 %v2153, %v2191
    %v2193 = vpop.f32.mrf.mxu0
    %2194 = vdwg.mxu0
    %v2195 = vadd.f32 %v2105, %v2192
    %v2196 = vsel %vm119, %v2195, 0.0
    %2197 = vadd.xlane.f32.xlu0 %v2196
    %v2198 = vpop.xlane.xlu0 %2197
    %v2199 = vmul.f32 %v2195, %v2195
    %v2200 = vsel %vm119, %v2199, 0.0
    %2201 = vadd.xlane.f32.xlu0 %v2200
    %v2202 = vpop.xlane.xlu0 %2201
    %v2203 = vmul.f32 %v2198, 0.03125
    %v2204 = vmul.f32 %v2202, 0.03125
    %v2205 = vmul.f32 %v2203, %v2203
    %v2206 = vsub.f32 %v2204, %v2205
    %v2207 = vsub.f32 %v2195, %v2203
    %v2208 = vadd.f32 %v2206, 1e-05
    %v2209 = vrsqrt.pop %v2208
    %v2210 = vmul.f32 %v2209, %v2208
    %v2211 = vmul.f32 %v2210, %v2209
    %v2212 = vmul.f32 0.5, %v2211
    %v2213 = vsub.f32 1.5, %v2212
    %v2214 = vmul.f32 %v2209, %v2213
    %vm2215 = vweird.f32 %v2208
    %vm2216 = vweird.f32 %v2209
    %vm2217 = vmor %vm2215, %vm2216
    %v2218 = vsel %vm2217, %v2209, %v2214
    %v2219 = vmul.f32 %v2207, %v2218
    %v2220 = vperm.slane %v100, 5
    %v2221 = vmul.f32 %v2219, %v2220
    %v2222 = vperm.slane %v100, 6
    %v2223 = vadd.f32 %v2221, %v2222
    %v2224 = vadd.f32 %v2223, %v98
    %s2225 = scalar_lea.vmem [#allocation8], 16
    %v2226 = vld [vmem:[%s2225] sm:$0xff]
    %v2227 = vld [vmem:[%s2225 + $0x8] sm:$0xff]
    %v2228 = vpack.c.bf16 %v2224, %v2224
    %s2229 = scalar_lea.vmem [#allocation7], 96
    %v2230 = vld [vmem:[%s2229] sm:$0xf]
    %v2231 = vld [vmem:[%s2229 + $0x4] sm:$0xf]
    %v2232 = vld [vmem:[%s2229 + $0x8] sm:$0xf]
    %v2233 = vld [vmem:[%s2229 + $0xc] sm:$0xf]
    %v2234 = vperm.slane %v2226, 0
    %v2239 = vunpack.c.l.b16 %v2230
    %v2240 = vunpack.c.l.b16 %v2231
    %v2241 = vunpack.c.l.b16 %v2232
    %v2242 = vunpack.c.l.b16 %v2233
    %v2243 = vpack.c.b16 %v2240, %v2239
    %v2244 = vpack.c.b16 %v2242, %v2241
    %v2248 = vsel %vm119, %v2228, 0
    %2250 = vmatpush.bf16.msra.mxu0 0
    %2251 = vmatpush.bf16.msra.mxu0 0
    %2252 = vmatpush.bf16.msra.mxu0 0
    %2253 = vmatpush.bf16.msra.mxu0 0
    %2254 = vmatpush.bf16.msra.mxu0 0
    %2255 = vmatpush.bf16.msra.mxu0 0
    %2256 = vmatpush.bf16.msra.mxu0 %v2244
    %2257 = vmatpush.bf16.msra.mxu0 %v2243
    %2258 = vmatmul.bf16.gmra.mxu0 %v2248
    %v2259 = vpop.f32.mrf.mxu0
    %v2260 = vadd.f32 %v2234, %v2259
    %v2261 = vpop.f32.mrf.mxu0
    %2262 = vdwg.mxu0
    %s2263 = scalar_lea.vmem [#allocation7], 112
    %v2264 = vld [vmem:[%s2263] sm:$0xf]
    %v2265 = vld [vmem:[%s2263 + $0x4] sm:$0xf]
    %v2266 = vld [vmem:[%s2263 + $0x8] sm:$0xf]
    %v2267 = vld [vmem:[%s2263 + $0xc] sm:$0xf]
    %v2268 = vperm.slane %v2226, 1
    %v2273 = vunpack.c.l.b16 %v2264
    %v2274 = vunpack.c.l.b16 %v2265
    %v2275 = vunpack.c.l.b16 %v2266
    %v2276 = vunpack.c.l.b16 %v2267
    %v2277 = vpack.c.b16 %v2274, %v2273
    %v2278 = vpack.c.b16 %v2276, %v2275
    %2281 = vmatpush.bf16.msra.mxu0 0
    %2282 = vmatpush.bf16.msra.mxu0 0
    %2283 = vmatpush.bf16.msra.mxu0 0
    %2284 = vmatpush.bf16.msra.mxu0 0
    %2285 = vmatpush.bf16.msra.mxu0 0
    %2286 = vmatpush.bf16.msra.mxu0 0
    %2287 = vmatpush.bf16.msra.mxu0 %v2278
    %2288 = vmatpush.bf16.msra.mxu0 %v2277
    %2289 = vmatmul.bf16.gmra.mxu0 %v2248
    %v2290 = vpop.f32.mrf.mxu0
    %v2291 = vadd.f32 %v2268, %v2290
    %v2292 = vpop.f32.mrf.mxu0
    %2293 = vdwg.mxu0
    %s2294 = scalar_lea.vmem [#allocation7], 128
    %v2295 = vld [vmem:[%s2294] sm:$0xf]
    %v2296 = vld [vmem:[%s2294 + $0x4] sm:$0xf]
    %v2297 = vld [vmem:[%s2294 + $0x8] sm:$0xf]
    %v2298 = vld [vmem:[%s2294 + $0xc] sm:$0xf]
    %v2299 = vperm.slane %v2226, 2
    %v2304 = vunpack.c.l.b16 %v2295
    %v2305 = vunpack.c.l.b16 %v2296
    %v2306 = vunpack.c.l.b16 %v2297
    %v2307 = vunpack.c.l.b16 %v2298
    %v2308 = vpack.c.b16 %v2305, %v2304
    %v2309 = vpack.c.b16 %v2307, %v2306
    %2312 = vmatpush.bf16.msra.mxu0 0
    %2313 = vmatpush.bf16.msra.mxu0 0
    %2314 = vmatpush.bf16.msra.mxu0 0
    %2315 = vmatpush.bf16.msra.mxu0 0
    %2316 = vmatpush.bf16.msra.mxu0 0
    %2317 = vmatpush.bf16.msra.mxu0 0
    %2318 = vmatpush.bf16.msra.mxu0 %v2309
    %2319 = vmatpush.bf16.msra.mxu0 %v2308
    %2320 = vmatmul.bf16.gmra.mxu0 %v2248
    %v2321 = vpop.f32.mrf.mxu0
    %v2322 = vadd.f32 %v2299, %v2321
    %v2323 = vpop.f32.mrf.mxu0
    %2324 = vdwg.mxu0
    %s2325 = scalar_lea.vmem %s3, 32
    %v2326 = vld [vmem:[%s2325] sm:$0xf]
    %v2327 = vld [vmem:[%s2325 + $0x4] sm:$0xf]
    %v2328 = vld [vmem:[%s2325 + $0x8] sm:$0xf]
    %v2329 = vld [vmem:[%s2325 + $0xc] sm:$0xf]
    %2331 = vrot.lane.b32.xlu0 %v2260, 120
    %v2332 = vpop.permute.xlu0 %2331
    %2334 = vrot.lane.b32.xlu0 %v2260, 112
    %v2335 = vpop.permute.xlu0 %2334
    %2337 = vrot.lane.b32.xlu0 %v2260, 104
    %v2338 = vpop.permute.xlu0 %2337
    %v2340 = vrot.slane %v2335, 4
    %v2341 = vsel %vm213, %v2340, %v2260
    %v2342 = vrot.slane %v2260, 4
    %v2343 = vsel %vm213, %v2335, %v2342
    %v2345 = vunpack.c.l.s4 1983009808
    %v2346 = vunpack.c.0.s8 %v2345
    %v2347 = vperm.slane %v2341, %v2346
    %v2349 = vunpack.c.l.s4 1983009808
    %v2350 = vunpack.c.0.s8 %v2349
    %v2351 = vperm.slane %v2343, %v2350
    %v2352 = vrot.slane %v2338, 4
    %v2353 = vsel %vm213, %v2352, %v2332
    %v2354 = vrot.slane %v2332, 4
    %v2355 = vsel %vm213, %v2338, %v2354
    %v2357 = vunpack.c.l.s4 1983009808
    %v2358 = vunpack.c.0.s8 %v2357
    %v2359 = vperm.slane %v2353, %v2358
    %v2361 = vunpack.c.l.s4 1983009808
    %v2362 = vunpack.c.0.s8 %v2361
    %v2363 = vperm.slane %v2355, %v2362
    %v2364 = vrot.slane %v2359, 4
    %v2365 = vsel %vm213, %v2364, %v2347
    %v2366 = vrot.slane %v2347, 4
    %v2367 = vsel %vm213, %v2359, %v2366
    %v2369 = vunpack.c.l.s4 1934713408
    %v2370 = vunpack.c.0.s8 %v2369
    %v2371 = vperm.slane %v2365, %v2370
    %v2373 = vunpack.c.l.s4 1934713408
    %v2374 = vunpack.c.0.s8 %v2373
    %v2375 = vperm.slane %v2367, %v2374
    %v2376 = vrot.slane %v2363, 4
    %v2377 = vsel %vm213, %v2376, %v2351
    %v2378 = vrot.slane %v2351, 4
    %v2379 = vsel %vm213, %v2363, %v2378
    %v2381 = vunpack.c.l.s4 1934713408
    %v2382 = vunpack.c.0.s8 %v2381
    %v2383 = vperm.slane %v2377, %v2382
    %v2385 = vunpack.c.l.s4 1934713408
    %v2386 = vunpack.c.0.s8 %v2385
    %v2387 = vperm.slane %v2379, %v2386
    %v2388 = vrot.slane %v2371, 4
    %v2389 = vsel %vm213, 0.0, %v2388
    %v2390 = vrot.slane %v2375, 4
    %v2391 = vsel %vm213, 0.0, %v2390
    %v2392 = vrot.slane %v2383, 4
    %v2393 = vsel %vm213, 0.0, %v2392
    %v2394 = vrot.slane %v2387, 4
    %v2395 = vsel %vm213, 0.0, %v2394
    %v2396 = vsel %vm213, %v2390, %v2371
    %v2398 = vunpack.c.l.s4 1983009808
    %v2399 = vunpack.c.0.s8 %v2398
    %v2400 = vperm.slane %v2396, %v2399
    %v2401 = vrot.slane %v2391, 4
    %v2402 = vsel %vm213, %v2401, %v2389
    %v2404 = vunpack.c.l.s4 1983009808
    %v2405 = vunpack.c.0.s8 %v2404
    %v2406 = vperm.slane %v2402, %v2405
    %v2407 = vsel %vm213, %v2394, %v2383
    %v2409 = vunpack.c.l.s4 1983009808
    %v2410 = vunpack.c.0.s8 %v2409
    %v2411 = vperm.slane %v2407, %v2410
    %v2412 = vrot.slane %v2395, 4
    %v2413 = vsel %vm213, %v2412, %v2393
    %v2415 = vunpack.c.l.s4 1983009808
    %v2416 = vunpack.c.0.s8 %v2415
    %v2417 = vperm.slane %v2413, %v2416
    %v2418 = vrot.slane %v2406, 4
    %v2419 = vsel %vm213, %v2418, %v2400
    %v2420 = vrot.slane %v2400, 4
    %v2421 = vsel %vm213, %v2406, %v2420
    %v2423 = vunpack.c.l.s4 1934713408
    %v2424 = vunpack.c.0.s8 %v2423
    %v2425 = vperm.slane %v2419, %v2424
    %v2427 = vunpack.c.l.s4 1934713408
    %v2428 = vunpack.c.0.s8 %v2427
    %v2429 = vperm.slane %v2421, %v2428
    %v2430 = vrot.slane %v2417, 4
    %v2431 = vsel %vm213, %v2430, %v2411
    %v2432 = vrot.slane %v2411, 4
    %v2433 = vsel %vm213, %v2417, %v2432
    %v2435 = vunpack.c.l.s4 1934713408
    %v2436 = vunpack.c.0.s8 %v2435
    %v2437 = vperm.slane %v2431, %v2436
    %v2439 = vunpack.c.l.s4 1934713408
    %v2440 = vunpack.c.0.s8 %v2439
    %v2441 = vperm.slane %v2433, %v2440
    %v2442 = vrot.slane %v2437, 4
    %v2443 = vsel %vm213, %v2442, %v2425
    %v2444 = vrot.slane %v2425, 4
    %v2445 = vsel %vm213, %v2437, %v2444
    %v2446 = vrot.slane %v2441, 4
    %v2447 = vsel %vm213, %v2446, %v2429
    %v2448 = vrot.slane %v2429, 4
    %v2449 = vsel %vm213, %v2441, %v2448
    %v2450 = vpack.c.bf16 %v2443, %v2443
    %v2451 = vpack.c.bf16 %v2445, %v2445
    %v2452 = vpack.c.bf16 %v2447, %v2447
    %v2453 = vpack.c.bf16 %v2449, %v2449
    %2455 = vrot.lane.b32.xlu0 %v2291, 120
    %v2456 = vpop.permute.xlu0 %2455
    %2458 = vrot.lane.b32.xlu0 %v2291, 112
    %v2459 = vpop.permute.xlu0 %2458
    %2461 = vrot.lane.b32.xlu0 %v2291, 104
    %v2462 = vpop.permute.xlu0 %2461
    %v2464 = vrot.slane %v2459, 4
    %v2465 = vsel %vm213, %v2464, %v2291
    %v2466 = vrot.slane %v2291, 4
    %v2467 = vsel %vm213, %v2459, %v2466
    %v2469 = vunpack.c.l.s4 1983009808
    %v2470 = vunpack.c.0.s8 %v2469
    %v2471 = vperm.slane %v2465, %v2470
    %v2473 = vunpack.c.l.s4 1983009808
    %v2474 = vunpack.c.0.s8 %v2473
    %v2475 = vperm.slane %v2467, %v2474
    %v2476 = vrot.slane %v2462, 4
    %v2477 = vsel %vm213, %v2476, %v2456
    %v2478 = vrot.slane %v2456, 4
    %v2479 = vsel %vm213, %v2462, %v2478
    %v2481 = vunpack.c.l.s4 1983009808
    %v2482 = vunpack.c.0.s8 %v2481
    %v2483 = vperm.slane %v2477, %v2482
    %v2485 = vunpack.c.l.s4 1983009808
    %v2486 = vunpack.c.0.s8 %v2485
    %v2487 = vperm.slane %v2479, %v2486
    %v2488 = vrot.slane %v2483, 4
    %v2489 = vsel %vm213, %v2488, %v2471
    %v2490 = vrot.slane %v2471, 4
    %v2491 = vsel %vm213, %v2483, %v2490
    %v2493 = vunpack.c.l.s4 1934713408
    %v2494 = vunpack.c.0.s8 %v2493
    %v2495 = vperm.slane %v2489, %v2494
    %v2497 = vunpack.c.l.s4 1934713408
    %v2498 = vunpack.c.0.s8 %v2497
    %v2499 = vperm.slane %v2491, %v2498
    %v2500 = vrot.slane %v2487, 4
    %v2501 = vsel %vm213, %v2500, %v2475
    %v2502 = vrot.slane %v2475, 4
    %v2503 = vsel %vm213, %v2487, %v2502
    %v2505 = vunpack.c.l.s4 1934713408
    %v2506 = vunpack.c.0.s8 %v2505
    %v2507 = vperm.slane %v2501, %v2506
    %v2509 = vunpack.c.l.s4 1934713408
    %v2510 = vunpack.c.0.s8 %v2509
    %v2511 = vperm.slane %v2503, %v2510
    %v2512 = vrot.slane %v2495, 4
    %v2513 = vsel %vm213, 0.0, %v2512
    %v2514 = vrot.slane %v2499, 4
    %v2515 = vsel %vm213, 0.0, %v2514
    %v2516 = vrot.slane %v2507, 4
    %v2517 = vsel %vm213, 0.0, %v2516
    %v2518 = vrot.slane %v2511, 4
    %v2519 = vsel %vm213, 0.0, %v2518
    %v2520 = vsel %vm213, %v2514, %v2495
    %v2522 = vunpack.c.l.s4 1983009808
    %v2523 = vunpack.c.0.s8 %v2522
    %v2524 = vperm.slane %v2520, %v2523
    %v2525 = vrot.slane %v2515, 4
    %v2526 = vsel %vm213, %v2525, %v2513
    %v2528 = vunpack.c.l.s4 1983009808
    %v2529 = vunpack.c.0.s8 %v2528
    %v2530 = vperm.slane %v2526, %v2529
    %v2531 = vsel %vm213, %v2518, %v2507
    %v2533 = vunpack.c.l.s4 1983009808
    %v2534 = vunpack.c.0.s8 %v2533
    %v2535 = vperm.slane %v2531, %v2534
    %v2536 = vrot.slane %v2519, 4
    %v2537 = vsel %vm213, %v2536, %v2517
    %v2539 = vunpack.c.l.s4 1983009808
    %v2540 = vunpack.c.0.s8 %v2539
    %v2541 = vperm.slane %v2537, %v2540
    %v2542 = vrot.slane %v2530, 4
    %v2543 = vsel %vm213, %v2542, %v2524
    %v2544 = vrot.slane %v2524, 4
    %v2545 = vsel %vm213, %v2530, %v2544
    %v2547 = vunpack.c.l.s4 1934713408
    %v2548 = vunpack.c.0.s8 %v2547
    %v2549 = vperm.slane %v2543, %v2548
    %v2551 = vunpack.c.l.s4 1934713408
    %v2552 = vunpack.c.0.s8 %v2551
    %v2553 = vperm.slane %v2545, %v2552
    %v2554 = vrot.slane %v2541, 4
    %v2555 = vsel %vm213, %v2554, %v2535
    %v2556 = vrot.slane %v2535, 4
    %v2557 = vsel %vm213, %v2541, %v2556
    %v2559 = vunpack.c.l.s4 1934713408
    %v2560 = vunpack.c.0.s8 %v2559
    %v2561 = vperm.slane %v2555, %v2560
    %v2563 = vunpack.c.l.s4 1934713408
    %v2564 = vunpack.c.0.s8 %v2563
    %v2565 = vperm.slane %v2557, %v2564
    %v2566 = vrot.slane %v2561, 4
    %v2567 = vsel %vm213, %v2566, %v2549
    %v2568 = vrot.slane %v2549, 4
    %v2569 = vsel %vm213, %v2561, %v2568
    %v2570 = vrot.slane %v2565, 4
    %v2571 = vsel %vm213, %v2570, %v2553
    %v2572 = vrot.slane %v2553, 4
    %v2573 = vsel %vm213, %v2565, %v2572
    %v2574 = vpack.c.bf16 %v2567, %v2567
    %v2575 = vpack.c.bf16 %v2569, %v2569
    %v2576 = vpack.c.bf16 %v2571, %v2571
    %v2577 = vpack.c.bf16 %v2573, %v2573
    %2579 = vrot.lane.b32.xlu0 %v2322, 120
    %v2580 = vpop.permute.xlu0 %2579
    %2582 = vrot.lane.b32.xlu0 %v2322, 112
    %v2583 = vpop.permute.xlu0 %2582
    %2585 = vrot.lane.b32.xlu0 %v2322, 104
    %v2586 = vpop.permute.xlu0 %2585
    %v2588 = vrot.slane %v2583, 4
    %v2589 = vsel %vm213, %v2588, %v2322
    %v2590 = vrot.slane %v2322, 4
    %v2591 = vsel %vm213, %v2583, %v2590
    %v2593 = vunpack.c.l.s4 1983009808
    %v2594 = vunpack.c.0.s8 %v2593
    %v2595 = vperm.slane %v2589, %v2594
    %v2597 = vunpack.c.l.s4 1983009808
    %v2598 = vunpack.c.0.s8 %v2597
    %v2599 = vperm.slane %v2591, %v2598
    %v2600 = vrot.slane %v2586, 4
    %v2601 = vsel %vm213, %v2600, %v2580
    %v2602 = vrot.slane %v2580, 4
    %v2603 = vsel %vm213, %v2586, %v2602
    %v2605 = vunpack.c.l.s4 1983009808
    %v2606 = vunpack.c.0.s8 %v2605
    %v2607 = vperm.slane %v2601, %v2606
    %v2609 = vunpack.c.l.s4 1983009808
    %v2610 = vunpack.c.0.s8 %v2609
    %v2611 = vperm.slane %v2603, %v2610
    %v2612 = vrot.slane %v2607, 4
    %v2613 = vsel %vm213, %v2612, %v2595
    %v2614 = vrot.slane %v2595, 4
    %v2615 = vsel %vm213, %v2607, %v2614
    %v2617 = vunpack.c.l.s4 1934713408
    %v2618 = vunpack.c.0.s8 %v2617
    %v2619 = vperm.slane %v2613, %v2618
    %v2621 = vunpack.c.l.s4 1934713408
    %v2622 = vunpack.c.0.s8 %v2621
    %v2623 = vperm.slane %v2615, %v2622
    %v2624 = vrot.slane %v2611, 4
    %v2625 = vsel %vm213, %v2624, %v2599
    %v2626 = vrot.slane %v2599, 4
    %v2627 = vsel %vm213, %v2611, %v2626
    %v2629 = vunpack.c.l.s4 1934713408
    %v2630 = vunpack.c.0.s8 %v2629
    %v2631 = vperm.slane %v2625, %v2630
    %v2633 = vunpack.c.l.s4 1934713408
    %v2634 = vunpack.c.0.s8 %v2633
    %v2635 = vperm.slane %v2627, %v2634
    %v2636 = vrot.slane %v2619, 4
    %v2637 = vsel %vm213, 0.0, %v2636
    %v2638 = vrot.slane %v2623, 4
    %v2639 = vsel %vm213, 0.0, %v2638
    %v2640 = vrot.slane %v2631, 4
    %v2641 = vsel %vm213, 0.0, %v2640
    %v2642 = vrot.slane %v2635, 4
    %v2643 = vsel %vm213, 0.0, %v2642
    %v2644 = vsel %vm213, %v2638, %v2619
    %v2646 = vunpack.c.l.s4 1983009808
    %v2647 = vunpack.c.0.s8 %v2646
    %v2648 = vperm.slane %v2644, %v2647
    %v2649 = vrot.slane %v2639, 4
    %v2650 = vsel %vm213, %v2649, %v2637
    %v2652 = vunpack.c.l.s4 1983009808
    %v2653 = vunpack.c.0.s8 %v2652
    %v2654 = vperm.slane %v2650, %v2653
    %v2655 = vsel %vm213, %v2642, %v2631
    %v2657 = vunpack.c.l.s4 1983009808
    %v2658 = vunpack.c.0.s8 %v2657
    %v2659 = vperm.slane %v2655, %v2658
    %v2660 = vrot.slane %v2643, 4
    %v2661 = vsel %vm213, %v2660, %v2641
    %v2663 = vunpack.c.l.s4 1983009808
    %v2664 = vunpack.c.0.s8 %v2663
    %v2665 = vperm.slane %v2661, %v2664
    %v2666 = vrot.slane %v2654, 4
    %v2667 = vsel %vm213, %v2666, %v2648
    %v2668 = vrot.slane %v2648, 4
    %v2669 = vsel %vm213, %v2654, %v2668
    %v2671 = vunpack.c.l.s4 1934713408
    %v2672 = vunpack.c.0.s8 %v2671
    %v2673 = vperm.slane %v2667, %v2672
    %v2675 = vunpack.c.l.s4 1934713408
    %v2676 = vunpack.c.0.s8 %v2675
    %v2677 = vperm.slane %v2669, %v2676
    %v2678 = vrot.slane %v2665, 4
    %v2679 = vsel %vm213, %v2678, %v2659
    %v2680 = vrot.slane %v2659, 4
    %v2681 = vsel %vm213, %v2665, %v2680
    %v2683 = vunpack.c.l.s4 1934713408
    %v2684 = vunpack.c.0.s8 %v2683
    %v2685 = vperm.slane %v2679, %v2684
    %v2687 = vunpack.c.l.s4 1934713408
    %v2688 = vunpack.c.0.s8 %v2687
    %v2689 = vperm.slane %v2681, %v2688
    %v2690 = vrot.slane %v2685, 4
    %v2691 = vsel %vm213, %v2690, %v2673
    %v2692 = vrot.slane %v2673, 4
    %v2693 = vsel %vm213, %v2685, %v2692
    %v2694 = vrot.slane %v2689, 4
    %v2695 = vsel %vm213, %v2694, %v2677
    %v2696 = vrot.slane %v2677, 4
    %v2697 = vsel %vm213, %v2689, %v2696
    %v2698 = vpack.c.bf16 %v2691, %v2691
    %v2699 = vpack.c.bf16 %v2693, %v2693
    %v2700 = vpack.c.bf16 %v2695, %v2695
    %v2701 = vpack.c.bf16 %v2697, %v2697
    %v2703 = vsel %vm575, %v2450, 0
    %v2706 = vsel %vm575, %v2574, 0
    %2708 = vmatpush.bf16.xpose.msra.mxu0 0
    %2709 = vmatpush.bf16.xpose.msra.mxu0 0
    %2710 = vmatpush.bf16.xpose.msra.mxu0 0
    %2711 = vmatpush.bf16.xpose.msra.mxu0 0
    %2712 = vmatpush.bf16.xpose.msra.mxu0 0
    %2713 = vmatpush.bf16.xpose.msra.mxu0 0
    %2714 = vmatpush.bf16.xpose.msra.mxu0 0
    %2715 = vmatpush.bf16.xpose.msra.mxu0 %v2706
    %2716 = vmatmul.bf16.gmra.mxu0 %v2703
    %v2717 = vpop.f32.mrf.mxu0
    %v2718 = vadd.f32 0.0, %v2717
    %v2719 = vpop.f32.mrf.mxu0
    %2720 = vdwg.mxu0
    %v2722 = vsel %vm575, %v2451, 0
    %v2725 = vsel %vm575, %v2575, 0
    %2727 = vmatpush.bf16.xpose.msra.mxu0 0
    %2728 = vmatpush.bf16.xpose.msra.mxu0 0
    %2729 = vmatpush.bf16.xpose.msra.mxu0 0
    %2730 = vmatpush.bf16.xpose.msra.mxu0 0
    %2731 = vmatpush.bf16.xpose.msra.mxu0 0
    %2732 = vmatpush.bf16.xpose.msra.mxu0 0
    %2733 = vmatpush.bf16.xpose.msra.mxu0 0
    %2734 = vmatpush.bf16.xpose.msra.mxu0 %v2725
    %2735 = vmatmul.bf16.gmra.mxu0 %v2722
    %v2736 = vpop.f32.mrf.mxu0
    %v2737 = vadd.f32 0.0, %v2736
    %v2738 = vpop.f32.mrf.mxu0
    %2739 = vdwg.mxu0
    %v2741 = vsel %vm575, %v2452, 0
    %v2744 = vsel %vm575, %v2576, 0
    %2746 = vmatpush.bf16.xpose.msra.mxu0 0
    %2747 = vmatpush.bf16.xpose.msra.mxu0 0
    %2748 = vmatpush.bf16.xpose.msra.mxu0 0
    %2749 = vmatpush.bf16.xpose.msra.mxu0 0
    %2750 = vmatpush.bf16.xpose.msra.mxu0 0
    %2751 = vmatpush.bf16.xpose.msra.mxu0 0
    %2752 = vmatpush.bf16.xpose.msra.mxu0 0
    %2753 = vmatpush.bf16.xpose.msra.mxu0 %v2744
    %2754 = vmatmul.bf16.gmra.mxu0 %v2741
    %v2755 = vpop.f32.mrf.mxu0
    %v2756 = vadd.f32 0.0, %v2755
    %v2757 = vpop.f32.mrf.mxu0
    %2758 = vdwg.mxu0
    %v2760 = vsel %vm575, %v2453, 0
    %v2763 = vsel %vm575, %v2577, 0
    %2765 = vmatpush.bf16.xpose.msra.mxu0 0
    %2766 = vmatpush.bf16.xpose.msra.mxu0 0
    %2767 = vmatpush.bf16.xpose.msra.mxu0 0
    %2768 = vmatpush.bf16.xpose.msra.mxu0 0
    %2769 = vmatpush.bf16.xpose.msra.mxu0 0
    %2770 = vmatpush.bf16.xpose.msra.mxu0 0
    %2771 = vmatpush.bf16.xpose.msra.mxu0 0
    %2772 = vmatpush.bf16.xpose.msra.mxu0 %v2763
    %2773 = vmatmul.bf16.gmra.mxu0 %v2760
    %v2774 = vpop.f32.mrf.mxu0
    %v2775 = vadd.f32 0.0, %v2774
    %v2776 = vpop.f32.mrf.mxu0
    %2777 = vdwg.mxu0
    %v2778 = vsel %vm575, %v2718, -inf
    %2779 = vmax.xlane.f32.xlu0 %v2778
    %v2780 = vpop.xlane.xlu0 %2779
    %v2781 = vsel %vm575, %v2737, -inf
    %2782 = vmax.xlane.f32.xlu0 %v2781
    %v2783 = vpop.xlane.xlu0 %2782
    %v2784 = vsel %vm575, %v2756, -inf
    %2785 = vmax.xlane.f32.xlu0 %v2784
    %v2786 = vpop.xlane.xlu0 %2785
    %v2787 = vsel %vm575, %v2775, -inf
    %2788 = vmax.xlane.f32.xlu0 %v2787
    %v2789 = vpop.xlane.xlu0 %2788
    %v2790 = vsub.f32 %v2718, %v2780
    %v2791 = vsub.f32 %v2737, %v2783
    %v2792 = vsub.f32 %v2756, %v2786
    %v2793 = vsub.f32 %v2775, %v2789
    %v2794 = vmul.f32 %v2790, 1.442695
    %v2795 = vpow.pop %v2794
    %v2796 = vmul.f32 %v2791, 1.442695
    %v2797 = vpow.pop %v2796
    %v2798 = vmul.f32 %v2792, 1.442695
    %v2799 = vpow.pop %v2798
    %v2800 = vmul.f32 %v2793, 1.442695
    %v2801 = vpow.pop %v2800
    %v2802 = vsel %vm575, %v2795, 0.0
    %2803 = vadd.xlane.f32.xlu0 %v2802
    %v2804 = vpop.xlane.xlu0 %2803
    %v2805 = vsel %vm575, %v2797, 0.0
    %2806 = vadd.xlane.f32.xlu0 %v2805
    %v2807 = vpop.xlane.xlu0 %2806
    %v2808 = vsel %vm575, %v2799, 0.0
    %2809 = vadd.xlane.f32.xlu0 %v2808
    %v2810 = vpop.xlane.xlu0 %2809
    %v2811 = vsel %vm575, %v2801, 0.0
    %2812 = vadd.xlane.f32.xlu0 %v2811
    %v2813 = vpop.xlane.xlu0 %2812
    %v2814 = vrcp.pop %v2804
    %v2815 = vrcp.pop %v2807
    %v2816 = vrcp.pop %v2810
    %v2817 = vrcp.pop %v2813
    %v2818 = vmul.f32 %v2795, %v2814
    %v2819 = vmul.f32 %v2797, %v2815
    %v2820 = vmul.f32 %v2799, %v2816
    %v2821 = vmul.f32 %v2801, %v2817
    %v2822 = vpack.c.bf16 %v2818, %v2818
    %v2823 = vpack.c.bf16 %v2819, %v2819
    %v2824 = vpack.c.bf16 %v2820, %v2820
    %v2825 = vpack.c.bf16 %v2821, %v2821
    %v2827 = vsel %vm575, %v2822, 0
    %v2830 = vsel %vm703, %v2698, 0
    %2832 = vmatpush.bf16.msra.mxu0 0
    %2833 = vmatpush.bf16.msra.mxu0 0
    %2834 = vmatpush.bf16.msra.mxu0 0
    %2835 = vmatpush.bf16.msra.mxu0 0
    %2836 = vmatpush.bf16.msra.mxu0 0
    %2837 = vmatpush.bf16.msra.mxu0 0
    %2838 = vmatpush.bf16.msra.mxu0 0
    %2839 = vmatpush.bf16.msra.mxu0 %v2830
    %2840 = vmatmul.bf16.gmra.mxu0 %v2827
    %v2841 = vpop.f32.mrf.mxu0
    %v2842 = vadd.f32 0.0, %v2841
    %v2843 = vpop.f32.mrf.mxu0
    %2844 = vdwg.mxu0
    %v2846 = vsel %vm575, %v2823, 0
    %v2849 = vsel %vm703, %v2699, 0
    %2851 = vmatpush.bf16.msra.mxu0 0
    %2852 = vmatpush.bf16.msra.mxu0 0
    %2853 = vmatpush.bf16.msra.mxu0 0
    %2854 = vmatpush.bf16.msra.mxu0 0
    %2855 = vmatpush.bf16.msra.mxu0 0
    %2856 = vmatpush.bf16.msra.mxu0 0
    %2857 = vmatpush.bf16.msra.mxu0 0
    %2858 = vmatpush.bf16.msra.mxu0 %v2849
    %2859 = vmatmul.bf16.gmra.mxu0 %v2846
    %v2860 = vpop.f32.mrf.mxu0
    %v2861 = vadd.f32 0.0, %v2860
    %v2862 = vpop.f32.mrf.mxu0
    %2863 = vdwg.mxu0
    %v2865 = vsel %vm575, %v2824, 0
    %v2868 = vsel %vm703, %v2700, 0
    %2870 = vmatpush.bf16.msra.mxu0 0
    %2871 = vmatpush.bf16.msra.mxu0 0
    %2872 = vmatpush.bf16.msra.mxu0 0
    %2873 = vmatpush.bf16.msra.mxu0 0
    %2874 = vmatpush.bf16.msra.mxu0 0
    %2875 = vmatpush.bf16.msra.mxu0 0
    %2876 = vmatpush.bf16.msra.mxu0 0
    %2877 = vmatpush.bf16.msra.mxu0 %v2868
    %2878 = vmatmul.bf16.gmra.mxu0 %v2865
    %v2879 = vpop.f32.mrf.mxu0
    %v2880 = vadd.f32 0.0, %v2879
    %v2881 = vpop.f32.mrf.mxu0
    %2882 = vdwg.mxu0
    %v2884 = vsel %vm575, %v2825, 0
    %v2887 = vsel %vm703, %v2701, 0
    %2889 = vmatpush.bf16.msra.mxu0 0
    %2890 = vmatpush.bf16.msra.mxu0 0
    %2891 = vmatpush.bf16.msra.mxu0 0
    %2892 = vmatpush.bf16.msra.mxu0 0
    %2893 = vmatpush.bf16.msra.mxu0 0
    %2894 = vmatpush.bf16.msra.mxu0 0
    %2895 = vmatpush.bf16.msra.mxu0 0
    %2896 = vmatpush.bf16.msra.mxu0 %v2887
    %2897 = vmatmul.bf16.gmra.mxu0 %v2884
    %v2898 = vpop.f32.mrf.mxu0
    %v2899 = vadd.f32 0.0, %v2898
    %v2900 = vpop.f32.mrf.mxu0
    %2901 = vdwg.mxu0
    %v2902 = vrot.slane %v2880, 4
    %v2903 = vsel %vm213, %v2902, %v2842
    %v2904 = vrot.slane %v2842, 4
    %v2905 = vsel %vm213, %v2880, %v2904
    %v2907 = vunpack.c.l.s4 1983009808
    %v2908 = vunpack.c.0.s8 %v2907
    %v2909 = vperm.slane %v2903, %v2908
    %v2911 = vunpack.c.l.s4 1983009808
    %v2912 = vunpack.c.0.s8 %v2911
    %v2913 = vperm.slane %v2905, %v2912
    %v2914 = vrot.slane %v2899, 4
    %v2915 = vsel %vm213, %v2914, %v2861
    %v2916 = vrot.slane %v2861, 4
    %v2917 = vsel %vm213, %v2899, %v2916
    %v2919 = vunpack.c.l.s4 1983009808
    %v2920 = vunpack.c.0.s8 %v2919
    %v2921 = vperm.slane %v2915, %v2920
    %v2923 = vunpack.c.l.s4 1983009808
    %v2924 = vunpack.c.0.s8 %v2923
    %v2925 = vperm.slane %v2917, %v2924
    %v2926 = vrot.slane %v2921, 4
    %v2927 = vsel %vm213, %v2926, %v2909
    %v2928 = vrot.slane %v2909, 4
    %v2929 = vsel %vm213, %v2921, %v2928
    %v2931 = vunpack.c.l.s4 1934713408
    %v2932 = vunpack.c.0.s8 %v2931
    %v2933 = vperm.slane %v2927, %v2932
    %v2935 = vunpack.c.l.s4 1934713408
    %v2936 = vunpack.c.0.s8 %v2935
    %v2937 = vperm.slane %v2929, %v2936
    %v2938 = vrot.slane %v2925, 4
    %v2939 = vsel %vm213, %v2938, %v2913
    %v2940 = vrot.slane %v2913, 4
    %v2941 = vsel %vm213, %v2925, %v2940
    %v2943 = vunpack.c.l.s4 1934713408
    %v2944 = vunpack.c.0.s8 %v2943
    %v2945 = vperm.slane %v2939, %v2944
    %v2947 = vunpack.c.l.s4 1934713408
    %v2948 = vunpack.c.0.s8 %v2947
    %v2949 = vperm.slane %v2941, %v2948
    %v2950 = vrot.slane %v2933, 4
    %v2951 = vsel %vm213, 0.0, %v2950
    %v2952 = vrot.slane %v2937, 4
    %v2953 = vsel %vm213, 0.0, %v2952
    %v2954 = vrot.slane %v2945, 4
    %v2955 = vsel %vm213, 0.0, %v2954
    %v2956 = vrot.slane %v2949, 4
    %v2957 = vsel %vm213, 0.0, %v2956
    %v2958 = vsel %vm213, %v2952, %v2933
    %v2960 = vunpack.c.l.s4 1983009808
    %v2961 = vunpack.c.0.s8 %v2960
    %v2962 = vperm.slane %v2958, %v2961
    %v2963 = vrot.slane %v2953, 4
    %v2964 = vsel %vm213, %v2963, %v2951
    %v2966 = vunpack.c.l.s4 1983009808
    %v2967 = vunpack.c.0.s8 %v2966
    %v2968 = vperm.slane %v2964, %v2967
    %v2969 = vsel %vm213, %v2956, %v2945
    %v2971 = vunpack.c.l.s4 1983009808
    %v2972 = vunpack.c.0.s8 %v2971
    %v2973 = vperm.slane %v2969, %v2972
    %v2974 = vrot.slane %v2957, 4
    %v2975 = vsel %vm213, %v2974, %v2955
    %v2977 = vunpack.c.l.s4 1983009808
    %v2978 = vunpack.c.0.s8 %v2977
    %v2979 = vperm.slane %v2975, %v2978
    %v2980 = vrot.slane %v2968, 4
    %v2981 = vsel %vm213, %v2980, %v2962
    %v2982 = vrot.slane %v2962, 4
    %v2983 = vsel %vm213, %v2968, %v2982
    %v2985 = vunpack.c.l.s4 1934713408
    %v2986 = vunpack.c.0.s8 %v2985
    %v2987 = vperm.slane %v2981, %v2986
    %v2989 = vunpack.c.l.s4 1934713408
    %v2990 = vunpack.c.0.s8 %v2989
    %v2991 = vperm.slane %v2983, %v2990
    %v2992 = vrot.slane %v2979, 4
    %v2993 = vsel %vm213, %v2992, %v2973
    %v2994 = vrot.slane %v2973, 4
    %v2995 = vsel %vm213, %v2979, %v2994
    %v2997 = vunpack.c.l.s4 1934713408
    %v2998 = vunpack.c.0.s8 %v2997
    %v2999 = vperm.slane %v2993, %v2998
    %v3001 = vunpack.c.l.s4 1934713408
    %v3002 = vunpack.c.0.s8 %v3001
    %v3003 = vperm.slane %v2995, %v3002
    %v3004 = vrot.slane %v2999, 4
    %v3005 = vsel %vm213, %v3004, %v2987
    %v3006 = vrot.slane %v2987, 4
    %v3007 = vsel %vm213, %v2999, %v3006
    %v3008 = vrot.slane %v3003, 4
    %v3009 = vsel %vm213, %v3008, %v2991
    %v3010 = vrot.slane %v2991, 4
    %v3011 = vsel %vm213, %v3003, %v3010
    %3013 = vrot.lane.b32.xlu0 %v3007, 8
    %v3014 = vpop.permute.xlu0 %3013
    %3017 = vrot.lane.b32.xlu0 %v3009, 16
    %v3018 = vpop.permute.xlu0 %3017
    %3021 = vrot.lane.b32.xlu0 %v3011, 24
    %v3022 = vpop.permute.xlu0 %3021
    %v3024 = vsel %vm575, %v3005, %v3014
    %v3025 = vsel %vm900, %v3024, %v3018
    %v3026 = vsel %vm902, %v3025, %v3022
    %v3027 = vpack.c.bf16 %v3026, %v3026
    %v3028 = vperm.slane %v2226, 3
    %v3033 = vunpack.c.l.b16 %v2326
    %v3034 = vunpack.c.l.b16 %v2327
    %v3035 = vunpack.c.l.b16 %v2328
    %v3036 = vunpack.c.l.b16 %v2329
    %v3037 = vpack.c.b16 %v3034, %v3033
    %v3038 = vpack.c.b16 %v3036, %v3035
    %v3042 = vsel %vm119, %v3027, 0
    %3044 = vmatpush.bf16.msra.mxu0 0
    %3045 = vmatpush.bf16.msra.mxu0 0
    %3046 = vmatpush.bf16.msra.mxu0 0
    %3047 = vmatpush.bf16.msra.mxu0 0
    %3048 = vmatpush.bf16.msra.mxu0 0
    %3049 = vmatpush.bf16.msra.mxu0 0
    %3050 = vmatpush.bf16.msra.mxu0 %v3038
    %3051 = vmatpush.bf16.msra.mxu0 %v3037
    %3052 = vmatmul.bf16.gmra.mxu0 %v3042
    %v3053 = vpop.f32.mrf.mxu0
    %v3054 = vadd.f32 %v3028, %v3053
    %v3055 = vpop.f32.mrf.mxu0
    %3056 = vdwg.mxu0
    %v3057 = vadd.f32 %v2224, %v3054
    %v3058 = vsel %vm119, %v3057, 0.0
    %3059 = vadd.xlane.f32.xlu0 %v3058
    %v3060 = vpop.xlane.xlu0 %3059
    %v3061 = vmul.f32 %v3057, %v3057
    %v3062 = vsel %vm119, %v3061, 0.0
    %3063 = vadd.xlane.f32.xlu0 %v3062
    %v3064 = vpop.xlane.xlu0 %3063
    %v3065 = vmul.f32 %v3060, 0.03125
    %v3066 = vmul.f32 %v3064, 0.03125
    %v3067 = vmul.f32 %v3065, %v3065
    %v3068 = vsub.f32 %v3066, %v3067
    %v3069 = vsub.f32 %v3057, %v3065
    %v3070 = vadd.f32 %v3068, 1e-05
    %v3071 = vrsqrt.pop %v3070
    %v3072 = vmul.f32 %v3071, %v3070
    %v3073 = vmul.f32 %v3072, %v3071
    %v3074 = vmul.f32 0.5, %v3073
    %v3075 = vsub.f32 1.5, %v3074
    %v3076 = vmul.f32 %v3071, %v3075
    %vm3077 = vweird.f32 %v3070
    %vm3078 = vweird.f32 %v3071
    %vm3079 = vmor %vm3077, %vm3078
    %v3080 = vsel %vm3079, %v3071, %v3076
    %v3081 = vmul.f32 %v3069, %v3080
    %v3082 = vperm.slane %v2227, 1
    %v3083 = vmul.f32 %v3081, %v3082
    %v3084 = vperm.slane %v2227, 2
    %v3085 = vadd.f32 %v3083, %v3084
    %v3086 = vpack.c.bf16 %v3085, %v3085
    %s3087 = scalar_lea.vmem [#allocation7], 144
    %v3088 = vld [vmem:[%s3087] sm:$0xf]
    %v3089 = vld [vmem:[%s3087 + $0x4] sm:$0xf]
    %v3090 = vld [vmem:[%s3087 + $0x8] sm:$0xf]
    %v3091 = vld [vmem:[%s3087 + $0xc] sm:$0xf]
    %v3092 = vperm.slane %v2226, 4
    %v3097 = vunpack.c.l.b16 %v3088
    %v3098 = vunpack.c.l.b16 %v3089
    %v3099 = vunpack.c.l.b16 %v3090
    %v3100 = vunpack.c.l.b16 %v3091
    %v3101 = vpack.c.b16 %v3098, %v3097
    %v3102 = vpack.c.b16 %v3100, %v3099
    %v3106 = vsel %vm119, %v3086, 0
    %3108 = vmatpush.bf16.msra.mxu0 0
    %3109 = vmatpush.bf16.msra.mxu0 0
    %3110 = vmatpush.bf16.msra.mxu0 0
    %3111 = vmatpush.bf16.msra.mxu0 0
    %3112 = vmatpush.bf16.msra.mxu0 0
    %3113 = vmatpush.bf16.msra.mxu0 0
    %3114 = vmatpush.bf16.msra.mxu0 %v3102
    %3115 = vmatpush.bf16.msra.mxu0 %v3101
    %3116 = vmatmul.bf16.gmra.mxu0 %v3106
    %v3117 = vpop.f32.mrf.mxu0
    %v3118 = vadd.f32 %v3092, %v3117
    %v3119 = vpop.f32.mrf.mxu0
    %3120 = vdwg.mxu0
    %s3121 = scalar_lea.vmem [#allocation7], 160
    %v3122 = vld [vmem:[%s3121] sm:$0xf]
    %v3123 = vld [vmem:[%s3121 + $0x4] sm:$0xf]
    %v3124 = vld [vmem:[%s3121 + $0x8] sm:$0xf]
    %v3125 = vld [vmem:[%s3121 + $0xc] sm:$0xf]
    %v3126 = vperm.slane %v2226, 5
    %v3131 = vunpack.c.l.b16 %v3122
    %v3132 = vunpack.c.l.b16 %v3123
    %v3133 = vunpack.c.l.b16 %v3124
    %v3134 = vunpack.c.l.b16 %v3125
    %v3135 = vpack.c.b16 %v3132, %v3131
    %v3136 = vpack.c.b16 %v3134, %v3133
    %3139 = vmatpush.bf16.msra.mxu0 0
    %3140 = vmatpush.bf16.msra.mxu0 0
    %3141 = vmatpush.bf16.msra.mxu0 0
    %3142 = vmatpush.bf16.msra.mxu0 0
    %3143 = vmatpush.bf16.msra.mxu0 0
    %3144 = vmatpush.bf16.msra.mxu0 0
    %3145 = vmatpush.bf16.msra.mxu0 %v3136
    %3146 = vmatpush.bf16.msra.mxu0 %v3135
    %3147 = vmatmul.bf16.gmra.mxu0 %v1017
    %v3148 = vpop.f32.mrf.mxu0
    %v3149 = vadd.f32 %v3126, %v3148
    %v3150 = vpop.f32.mrf.mxu0
    %v3151 = vadd.f32 %v3126, %v3150
    %3152 = vdwg.mxu0
    %s3153 = scalar_lea.vmem [#allocation7], 176
    %v3154 = vld [vmem:[%s3153] sm:$0xf]
    %v3155 = vld [vmem:[%s3153 + $0x4] sm:$0xf]
    %v3156 = vld [vmem:[%s3153 + $0x8] sm:$0xf]
    %v3157 = vld [vmem:[%s3153 + $0xc] sm:$0xf]
    %v3158 = vperm.slane %v2226, 6
    %v3163 = vunpack.c.l.b16 %v3154
    %v3164 = vunpack.c.l.b16 %v3155
    %v3165 = vunpack.c.l.b16 %v3156
    %v3166 = vunpack.c.l.b16 %v3157
    %v3167 = vpack.c.b16 %v3164, %v3163
    %v3168 = vpack.c.b16 %v3166, %v3165
    %3171 = vmatpush.bf16.msra.mxu0 0
    %3172 = vmatpush.bf16.msra.mxu0 0
    %3173 = vmatpush.bf16.msra.mxu0 0
    %3174 = vmatpush.bf16.msra.mxu0 0
    %3175 = vmatpush.bf16.msra.mxu0 0
    %3176 = vmatpush.bf16.msra.mxu0 0
    %3177 = vmatpush.bf16.msra.mxu0 %v3168
    %3178 = vmatpush.bf16.msra.mxu0 %v3167
    %3179 = vmatmul.bf16.gmra.mxu0 %v1017
    %v3180 = vpop.f32.mrf.mxu0
    %v3181 = vadd.f32 %v3158, %v3180
    %v3182 = vpop.f32.mrf.mxu0
    %v3183 = vadd.f32 %v3158, %v3182
    %3184 = vdwg.mxu0
    %s3185 = scalar_lea.vmem %s3, 48
    %v3186 = vld [vmem:[%s3185] sm:$0xf]
    %v3187 = vld [vmem:[%s3185 + $0x4] sm:$0xf]
    %v3188 = vld [vmem:[%s3185 + $0x8] sm:$0xf]
    %v3189 = vld [vmem:[%s3185 + $0xc] sm:$0xf]
    %3191 = vrot.lane.b32.xlu0 %v3118, 120
    %v3192 = vpop.permute.xlu0 %3191
    %3194 = vrot.lane.b32.xlu0 %v3118, 112
    %v3195 = vpop.permute.xlu0 %3194
    %3197 = vrot.lane.b32.xlu0 %v3118, 104
    %v3198 = vpop.permute.xlu0 %3197
    %v3200 = vrot.slane %v3195, 4
    %v3201 = vsel %vm213, %v3200, %v3118
    %v3202 = vrot.slane %v3118, 4
    %v3203 = vsel %vm213, %v3195, %v3202
    %v3205 = vunpack.c.l.s4 1983009808
    %v3206 = vunpack.c.0.s8 %v3205
    %v3207 = vperm.slane %v3201, %v3206
    %v3209 = vunpack.c.l.s4 1983009808
    %v3210 = vunpack.c.0.s8 %v3209
    %v3211 = vperm.slane %v3203, %v3210
    %v3212 = vrot.slane %v3198, 4
    %v3213 = vsel %vm213, %v3212, %v3192
    %v3214 = vrot.slane %v3192, 4
    %v3215 = vsel %vm213, %v3198, %v3214
    %v3217 = vunpack.c.l.s4 1983009808
    %v3218 = vunpack.c.0.s8 %v3217
    %v3219 = vperm.slane %v3213, %v3218
    %v3221 = vunpack.c.l.s4 1983009808
    %v3222 = vunpack.c.0.s8 %v3221
    %v3223 = vperm.slane %v3215, %v3222
    %v3224 = vrot.slane %v3219, 4
    %v3225 = vsel %vm213, %v3224, %v3207
    %v3226 = vrot.slane %v3207, 4
    %v3227 = vsel %vm213, %v3219, %v3226
    %v3229 = vunpack.c.l.s4 1934713408
    %v3230 = vunpack.c.0.s8 %v3229
    %v3231 = vperm.slane %v3225, %v3230
    %v3233 = vunpack.c.l.s4 1934713408
    %v3234 = vunpack.c.0.s8 %v3233
    %v3235 = vperm.slane %v3227, %v3234
    %v3236 = vrot.slane %v3223, 4
    %v3237 = vsel %vm213, %v3236, %v3211
    %v3238 = vrot.slane %v3211, 4
    %v3239 = vsel %vm213, %v3223, %v3238
    %v3241 = vunpack.c.l.s4 1934713408
    %v3242 = vunpack.c.0.s8 %v3241
    %v3243 = vperm.slane %v3237, %v3242
    %v3245 = vunpack.c.l.s4 1934713408
    %v3246 = vunpack.c.0.s8 %v3245
    %v3247 = vperm.slane %v3239, %v3246
    %v3248 = vrot.slane %v3231, 4
    %v3249 = vsel %vm213, 0.0, %v3248
    %v3250 = vrot.slane %v3235, 4
    %v3251 = vsel %vm213, 0.0, %v3250
    %v3252 = vrot.slane %v3243, 4
    %v3253 = vsel %vm213, 0.0, %v3252
    %v3254 = vrot.slane %v3247, 4
    %v3255 = vsel %vm213, 0.0, %v3254
    %v3256 = vsel %vm213, %v3250, %v3231
    %v3258 = vunpack.c.l.s4 1983009808
    %v3259 = vunpack.c.0.s8 %v3258
    %v3260 = vperm.slane %v3256, %v3259
    %v3261 = vrot.slane %v3251, 4
    %v3262 = vsel %vm213, %v3261, %v3249
    %v3264 = vunpack.c.l.s4 1983009808
    %v3265 = vunpack.c.0.s8 %v3264
    %v3266 = vperm.slane %v3262, %v3265
    %v3267 = vsel %vm213, %v3254, %v3243
    %v3269 = vunpack.c.l.s4 1983009808
    %v3270 = vunpack.c.0.s8 %v3269
    %v3271 = vperm.slane %v3267, %v3270
    %v3272 = vrot.slane %v3255, 4
    %v3273 = vsel %vm213, %v3272, %v3253
    %v3275 = vunpack.c.l.s4 1983009808
    %v3276 = vunpack.c.0.s8 %v3275
    %v3277 = vperm.slane %v3273, %v3276
    %v3278 = vrot.slane %v3266, 4
    %v3279 = vsel %vm213, %v3278, %v3260
    %v3280 = vrot.slane %v3260, 4
    %v3281 = vsel %vm213, %v3266, %v3280
    %v3283 = vunpack.c.l.s4 1934713408
    %v3284 = vunpack.c.0.s8 %v3283
    %v3285 = vperm.slane %v3279, %v3284
    %v3287 = vunpack.c.l.s4 1934713408
    %v3288 = vunpack.c.0.s8 %v3287
    %v3289 = vperm.slane %v3281, %v3288
    %v3290 = vrot.slane %v3277, 4
    %v3291 = vsel %vm213, %v3290, %v3271
    %v3292 = vrot.slane %v3271, 4
    %v3293 = vsel %vm213, %v3277, %v3292
    %v3295 = vunpack.c.l.s4 1934713408
    %v3296 = vunpack.c.0.s8 %v3295
    %v3297 = vperm.slane %v3291, %v3296
    %v3299 = vunpack.c.l.s4 1934713408
    %v3300 = vunpack.c.0.s8 %v3299
    %v3301 = vperm.slane %v3293, %v3300
    %v3302 = vrot.slane %v3297, 4
    %v3303 = vsel %vm213, %v3302, %v3285
    %v3304 = vrot.slane %v3285, 4
    %v3305 = vsel %vm213, %v3297, %v3304
    %v3306 = vrot.slane %v3301, 4
    %v3307 = vsel %vm213, %v3306, %v3289
    %v3308 = vrot.slane %v3289, 4
    %v3309 = vsel %vm213, %v3301, %v3308
    %v3310 = vpack.c.bf16 %v3303, %v3303
    %v3311 = vpack.c.bf16 %v3305, %v3305
    %v3312 = vpack.c.bf16 %v3307, %v3307
    %v3313 = vpack.c.bf16 %v3309, %v3309
    %3316 = vrot.lane.b32.xlu0 %v3149, 120
    %v3317 = vpop.permute.xlu0 %3316
    %3318 = vrot.lane.b32.xlu0 %v3151, 120
    %v3319 = vpop.permute.xlu0 %3318
    %3322 = vrot.lane.b32.xlu0 %v3149, 112
    %v3323 = vpop.permute.xlu0 %3322
    %3324 = vrot.lane.b32.xlu0 %v3151, 112
    %v3325 = vpop.permute.xlu0 %3324
    %3328 = vrot.lane.b32.xlu0 %v3149, 104
    %v3329 = vpop.permute.xlu0 %3328
    %3330 = vrot.lane.b32.xlu0 %v3151, 104
    %v3331 = vpop.permute.xlu0 %3330
    %v3334 = vrot.slane %v3323, 4
    %v3335 = vsel %vm213, %v3334, %v3149
    %v3336 = vrot.slane %v3149, 4
    %v3337 = vsel %vm213, %v3323, %v3336
    %v3339 = vunpack.c.l.s4 1983009808
    %v3340 = vunpack.c.0.s8 %v3339
    %v3341 = vperm.slane %v3335, %v3340
    %v3343 = vunpack.c.l.s4 1983009808
    %v3344 = vunpack.c.0.s8 %v3343
    %v3345 = vperm.slane %v3337, %v3344
    %v3346 = vrot.slane %v3329, 4
    %v3347 = vsel %vm213, %v3346, %v3317
    %v3348 = vrot.slane %v3317, 4
    %v3349 = vsel %vm213, %v3329, %v3348
    %v3351 = vunpack.c.l.s4 1983009808
    %v3352 = vunpack.c.0.s8 %v3351
    %v3353 = vperm.slane %v3347, %v3352
    %v3355 = vunpack.c.l.s4 1983009808
    %v3356 = vunpack.c.0.s8 %v3355
    %v3357 = vperm.slane %v3349, %v3356
    %v3358 = vrot.slane %v3353, 4
    %v3359 = vsel %vm213, %v3358, %v3341
    %v3360 = vrot.slane %v3341, 4
    %v3361 = vsel %vm213, %v3353, %v3360
    %v3363 = vunpack.c.l.s4 1934713408
    %v3364 = vunpack.c.0.s8 %v3363
    %v3365 = vperm.slane %v3359, %v3364
    %v3367 = vunpack.c.l.s4 1934713408
    %v3368 = vunpack.c.0.s8 %v3367
    %v3369 = vperm.slane %v3361, %v3368
    %v3370 = vrot.slane %v3357, 4
    %v3371 = vsel %vm213, %v3370, %v3345
    %v3372 = vrot.slane %v3345, 4
    %v3373 = vsel %vm213, %v3357, %v3372
    %v3375 = vunpack.c.l.s4 1934713408
    %v3376 = vunpack.c.0.s8 %v3375
    %v3377 = vperm.slane %v3371, %v3376
    %v3379 = vunpack.c.l.s4 1934713408
    %v3380 = vunpack.c.0.s8 %v3379
    %v3381 = vperm.slane %v3373, %v3380
    %v3382 = vrot.slane %v3365, 4
    %v3383 = vsel %vm213, 0.0, %v3382
    %v3384 = vrot.slane %v3369, 4
    %v3385 = vsel %vm213, 0.0, %v3384
    %v3386 = vrot.slane %v3377, 4
    %v3387 = vsel %vm213, 0.0, %v3386
    %v3388 = vrot.slane %v3381, 4
    %v3389 = vsel %vm213, 0.0, %v3388
    %v3390 = vrot.slane %v3325, 4
    %v3391 = vsel %vm213, %v3390, %v3151
    %v3392 = vrot.slane %v3151, 4
    %v3393 = vsel %vm213, %v3325, %v3392
    %v3395 = vunpack.c.l.s4 1983009808
    %v3396 = vunpack.c.0.s8 %v3395
    %v3397 = vperm.slane %v3391, %v3396
    %v3399 = vunpack.c.l.s4 1983009808
    %v3400 = vunpack.c.0.s8 %v3399
    %v3401 = vperm.slane %v3393, %v3400
    %v3402 = vrot.slane %v3331, 4
    %v3403 = vsel %vm213, %v3402, %v3319
    %v3404 = vrot.slane %v3319, 4
    %v3405 = vsel %vm213, %v3331, %v3404
    %v3407 = vunpack.c.l.s4 1983009808
    %v3408 = vunpack.c.0.s8 %v3407
    %v3409 = vperm.slane %v3403, %v3408
    %v3411 = vunpack.c.l.s4 1983009808
    %v3412 = vunpack.c.0.s8 %v3411
    %v3413 = vperm.slane %v3405, %v3412
    %v3414 = vrot.slane %v3409, 4
    %v3415 = vsel %vm213, %v3414, %v3397
    %v3416 = vrot.slane %v3397, 4
    %v3417 = vsel %vm213, %v3409, %v3416
    %v3419 = vunpack.c.l.s4 1934713408
    %v3420 = vunpack.c.0.s8 %v3419
    %v3421 = vperm.slane %v3415, %v3420
    %v3423 = vunpack.c.l.s4 1934713408
    %v3424 = vunpack.c.0.s8 %v3423
    %v3425 = vperm.slane %v3417, %v3424
    %v3426 = vrot.slane %v3413, 4
    %v3427 = vsel %vm213, %v3426, %v3401
    %v3428 = vrot.slane %v3401, 4
    %v3429 = vsel %vm213, %v3413, %v3428
    %v3431 = vunpack.c.l.s4 1934713408
    %v3432 = vunpack.c.0.s8 %v3431
    %v3433 = vperm.slane %v3427, %v3432
    %v3435 = vunpack.c.l.s4 1934713408
    %v3436 = vunpack.c.0.s8 %v3435
    %v3437 = vperm.slane %v3429, %v3436
    %v3438 = vrot.slane %v3421, 4
    %v3439 = vsel %vm213, 0.0, %v3438
    %v3440 = vrot.slane %v3425, 4
    %v3441 = vsel %vm213, 0.0, %v3440
    %v3442 = vrot.slane %v3433, 4
    %v3443 = vsel %vm213, 0.0, %v3442
    %v3444 = vrot.slane %v3437, 4
    %v3445 = vsel %vm213, 0.0, %v3444
    %v3446 = vsel %vm213, %v3384, %v3365
    %v3448 = vunpack.c.l.s4 1983009808
    %v3449 = vunpack.c.0.s8 %v3448
    %v3450 = vperm.slane %v3446, %v3449
    %v3451 = vrot.slane %v3385, 4
    %v3452 = vsel %vm213, %v3451, %v3383
    %v3454 = vunpack.c.l.s4 1983009808
    %v3455 = vunpack.c.0.s8 %v3454
    %v3456 = vperm.slane %v3452, %v3455
    %v3457 = vsel %vm213, %v3388, %v3377
    %v3459 = vunpack.c.l.s4 1983009808
    %v3460 = vunpack.c.0.s8 %v3459
    %v3461 = vperm.slane %v3457, %v3460
    %v3462 = vrot.slane %v3389, 4
    %v3463 = vsel %vm213, %v3462, %v3387
    %v3465 = vunpack.c.l.s4 1983009808
    %v3466 = vunpack.c.0.s8 %v3465
    %v3467 = vperm.slane %v3463, %v3466
    %v3468 = vrot.slane %v3456, 4
    %v3469 = vsel %vm213, %v3468, %v3450
    %v3470 = vrot.slane %v3450, 4
    %v3471 = vsel %vm213, %v3456, %v3470
    %v3473 = vunpack.c.l.s4 1934713408
    %v3474 = vunpack.c.0.s8 %v3473
    %v3475 = vperm.slane %v3469, %v3474
    %v3477 = vunpack.c.l.s4 1934713408
    %v3478 = vunpack.c.0.s8 %v3477
    %v3479 = vperm.slane %v3471, %v3478
    %v3480 = vrot.slane %v3467, 4
    %v3481 = vsel %vm213, %v3480, %v3461
    %v3482 = vrot.slane %v3461, 4
    %v3483 = vsel %vm213, %v3467, %v3482
    %v3485 = vunpack.c.l.s4 1934713408
    %v3486 = vunpack.c.0.s8 %v3485
    %v3487 = vperm.slane %v3481, %v3486
    %v3489 = vunpack.c.l.s4 1934713408
    %v3490 = vunpack.c.0.s8 %v3489
    %v3491 = vperm.slane %v3483, %v3490
    %v3492 = vrot.slane %v3487, 4
    %v3493 = vsel %vm213, %v3492, %v3475
    %v3494 = vrot.slane %v3475, 4
    %v3495 = vsel %vm213, %v3487, %v3494
    %v3496 = vrot.slane %v3491, 4
    %v3497 = vsel %vm213, %v3496, %v3479
    %v3498 = vrot.slane %v3479, 4
    %v3499 = vsel %vm213, %v3491, %v3498
    %v3500 = vsel %vm213, %v3440, %v3421
    %v3502 = vunpack.c.l.s4 1983009808
    %v3503 = vunpack.c.0.s8 %v3502
    %v3504 = vperm.slane %v3500, %v3503
    %v3505 = vrot.slane %v3441, 4
    %v3506 = vsel %vm213, %v3505, %v3439
    %v3508 = vunpack.c.l.s4 1983009808
    %v3509 = vunpack.c.0.s8 %v3508
    %v3510 = vperm.slane %v3506, %v3509
    %v3511 = vsel %vm213, %v3444, %v3433
    %v3513 = vunpack.c.l.s4 1983009808
    %v3514 = vunpack.c.0.s8 %v3513
    %v3515 = vperm.slane %v3511, %v3514
    %v3516 = vrot.slane %v3445, 4
    %v3517 = vsel %vm213, %v3516, %v3443
    %v3519 = vunpack.c.l.s4 1983009808
    %v3520 = vunpack.c.0.s8 %v3519
    %v3521 = vperm.slane %v3517, %v3520
    %v3522 = vrot.slane %v3510, 4
    %v3523 = vsel %vm213, %v3522, %v3504
    %v3524 = vrot.slane %v3504, 4
    %v3525 = vsel %vm213, %v3510, %v3524
    %v3527 = vunpack.c.l.s4 1934713408
    %v3528 = vunpack.c.0.s8 %v3527
    %v3529 = vperm.slane %v3523, %v3528
    %v3531 = vunpack.c.l.s4 1934713408
    %v3532 = vunpack.c.0.s8 %v3531
    %v3533 = vperm.slane %v3525, %v3532
    %v3534 = vrot.slane %v3521, 4
    %v3535 = vsel %vm213, %v3534, %v3515
    %v3536 = vrot.slane %v3515, 4
    %v3537 = vsel %vm213, %v3521, %v3536
    %v3539 = vunpack.c.l.s4 1934713408
    %v3540 = vunpack.c.0.s8 %v3539
    %v3541 = vperm.slane %v3535, %v3540
    %v3543 = vunpack.c.l.s4 1934713408
    %v3544 = vunpack.c.0.s8 %v3543
    %v3545 = vperm.slane %v3537, %v3544
    %v3546 = vrot.slane %v3541, 4
    %v3547 = vsel %vm213, %v3546, %v3529
    %v3548 = vrot.slane %v3529, 4
    %v3549 = vsel %vm213, %v3541, %v3548
    %v3550 = vrot.slane %v3545, 4
    %v3551 = vsel %vm213, %v3550, %v3533
    %v3552 = vrot.slane %v3533, 4
    %v3553 = vsel %vm213, %v3545, %v3552
    %v3554 = vpack.c.bf16 %v3493, %v3493
    %v3555 = vpack.c.bf16 %v3547, %v3547
    %v3556 = vpack.c.bf16 %v3495, %v3495
    %v3557 = vpack.c.bf16 %v3549, %v3549
    %v3558 = vpack.c.bf16 %v3497, %v3497
    %v3559 = vpack.c.bf16 %v3551, %v3551
    %v3560 = vpack.c.bf16 %v3499, %v3499
    %v3561 = vpack.c.bf16 %v3553, %v3553
    %3564 = vrot.lane.b32.xlu0 %v3181, 120
    %v3565 = vpop.permute.xlu0 %3564
    %3566 = vrot.lane.b32.xlu0 %v3183, 120
    %v3567 = vpop.permute.xlu0 %3566
    %3570 = vrot.lane.b32.xlu0 %v3181, 112
    %v3571 = vpop.permute.xlu0 %3570
    %3572 = vrot.lane.b32.xlu0 %v3183, 112
    %v3573 = vpop.permute.xlu0 %3572
    %3576 = vrot.lane.b32.xlu0 %v3181, 104
    %v3577 = vpop.permute.xlu0 %3576
    %3578 = vrot.lane.b32.xlu0 %v3183, 104
    %v3579 = vpop.permute.xlu0 %3578
    %v3582 = vrot.slane %v3571, 4
    %v3583 = vsel %vm213, %v3582, %v3181
    %v3584 = vrot.slane %v3181, 4
    %v3585 = vsel %vm213, %v3571, %v3584
    %v3587 = vunpack.c.l.s4 1983009808
    %v3588 = vunpack.c.0.s8 %v3587
    %v3589 = vperm.slane %v3583, %v3588
    %v3591 = vunpack.c.l.s4 1983009808
    %v3592 = vunpack.c.0.s8 %v3591
    %v3593 = vperm.slane %v3585, %v3592
    %v3594 = vrot.slane %v3577, 4
    %v3595 = vsel %vm213, %v3594, %v3565
    %v3596 = vrot.slane %v3565, 4
    %v3597 = vsel %vm213, %v3577, %v3596
    %v3599 = vunpack.c.l.s4 1983009808
    %v3600 = vunpack.c.0.s8 %v3599
    %v3601 = vperm.slane %v3595, %v3600
    %v3603 = vunpack.c.l.s4 1983009808
    %v3604 = vunpack.c.0.s8 %v3603
    %v3605 = vperm.slane %v3597, %v3604
    %v3606 = vrot.slane %v3601, 4
    %v3607 = vsel %vm213, %v3606, %v3589
    %v3608 = vrot.slane %v3589, 4
    %v3609 = vsel %vm213, %v3601, %v3608
    %v3611 = vunpack.c.l.s4 1934713408
    %v3612 = vunpack.c.0.s8 %v3611
    %v3613 = vperm.slane %v3607, %v3612
    %v3615 = vunpack.c.l.s4 1934713408
    %v3616 = vunpack.c.0.s8 %v3615
    %v3617 = vperm.slane %v3609, %v3616
    %v3618 = vrot.slane %v3605, 4
    %v3619 = vsel %vm213, %v3618, %v3593
    %v3620 = vrot.slane %v3593, 4
    %v3621 = vsel %vm213, %v3605, %v3620
    %v3623 = vunpack.c.l.s4 1934713408
    %v3624 = vunpack.c.0.s8 %v3623
    %v3625 = vperm.slane %v3619, %v3624
    %v3627 = vunpack.c.l.s4 1934713408
    %v3628 = vunpack.c.0.s8 %v3627
    %v3629 = vperm.slane %v3621, %v3628
    %v3630 = vrot.slane %v3613, 4
    %v3631 = vsel %vm213, 0.0, %v3630
    %v3632 = vrot.slane %v3617, 4
    %v3633 = vsel %vm213, 0.0, %v3632
    %v3634 = vrot.slane %v3625, 4
    %v3635 = vsel %vm213, 0.0, %v3634
    %v3636 = vrot.slane %v3629, 4
    %v3637 = vsel %vm213, 0.0, %v3636
    %v3638 = vrot.slane %v3573, 4
    %v3639 = vsel %vm213, %v3638, %v3183
    %v3640 = vrot.slane %v3183, 4
    %v3641 = vsel %vm213, %v3573, %v3640
    %v3643 = vunpack.c.l.s4 1983009808
    %v3644 = vunpack.c.0.s8 %v3643
    %v3645 = vperm.slane %v3639, %v3644
    %v3647 = vunpack.c.l.s4 1983009808
    %v3648 = vunpack.c.0.s8 %v3647
    %v3649 = vperm.slane %v3641, %v3648
    %v3650 = vrot.slane %v3579, 4
    %v3651 = vsel %vm213, %v3650, %v3567
    %v3652 = vrot.slane %v3567, 4
    %v3653 = vsel %vm213, %v3579, %v3652
    %v3655 = vunpack.c.l.s4 1983009808
    %v3656 = vunpack.c.0.s8 %v3655
    %v3657 = vperm.slane %v3651, %v3656
    %v3659 = vunpack.c.l.s4 1983009808
    %v3660 = vunpack.c.0.s8 %v3659
    %v3661 = vperm.slane %v3653, %v3660
    %v3662 = vrot.slane %v3657, 4
    %v3663 = vsel %vm213, %v3662, %v3645
    %v3664 = vrot.slane %v3645, 4
    %v3665 = vsel %vm213, %v3657, %v3664
    %v3667 = vunpack.c.l.s4 1934713408
    %v3668 = vunpack.c.0.s8 %v3667
    %v3669 = vperm.slane %v3663, %v3668
    %v3671 = vunpack.c.l.s4 1934713408
    %v3672 = vunpack.c.0.s8 %v3671
    %v3673 = vperm.slane %v3665, %v3672
    %v3674 = vrot.slane %v3661, 4
    %v3675 = vsel %vm213, %v3674, %v3649
    %v3676 = vrot.slane %v3649, 4
    %v3677 = vsel %vm213, %v3661, %v3676
    %v3679 = vunpack.c.l.s4 1934713408
    %v3680 = vunpack.c.0.s8 %v3679
    %v3681 = vperm.slane %v3675, %v3680
    %v3683 = vunpack.c.l.s4 1934713408
    %v3684 = vunpack.c.0.s8 %v3683
    %v3685 = vperm.slane %v3677, %v3684
    %v3686 = vrot.slane %v3669, 4
    %v3687 = vsel %vm213, 0.0, %v3686
    %v3688 = vrot.slane %v3673, 4
    %v3689 = vsel %vm213, 0.0, %v3688
    %v3690 = vrot.slane %v3681, 4
    %v3691 = vsel %vm213, 0.0, %v3690
    %v3692 = vrot.slane %v3685, 4
    %v3693 = vsel %vm213, 0.0, %v3692
    %v3694 = vsel %vm213, %v3632, %v3613
    %v3696 = vunpack.c.l.s4 1983009808
    %v3697 = vunpack.c.0.s8 %v3696
    %v3698 = vperm.slane %v3694, %v3697
    %v3699 = vrot.slane %v3633, 4
    %v3700 = vsel %vm213, %v3699, %v3631
    %v3702 = vunpack.c.l.s4 1983009808
    %v3703 = vunpack.c.0.s8 %v3702
    %v3704 = vperm.slane %v3700, %v3703
    %v3705 = vsel %vm213, %v3636, %v3625
    %v3707 = vunpack.c.l.s4 1983009808
    %v3708 = vunpack.c.0.s8 %v3707
    %v3709 = vperm.slane %v3705, %v3708
    %v3710 = vrot.slane %v3637, 4
    %v3711 = vsel %vm213, %v3710, %v3635
    %v3713 = vunpack.c.l.s4 1983009808
    %v3714 = vunpack.c.0.s8 %v3713
    %v3715 = vperm.slane %v3711, %v3714
    %v3716 = vrot.slane %v3704, 4
    %v3717 = vsel %vm213, %v3716, %v3698
    %v3718 = vrot.slane %v3698, 4
    %v3719 = vsel %vm213, %v3704, %v3718
    %v3721 = vunpack.c.l.s4 1934713408
    %v3722 = vunpack.c.0.s8 %v3721
    %v3723 = vperm.slane %v3717, %v3722
    %v3725 = vunpack.c.l.s4 1934713408
    %v3726 = vunpack.c.0.s8 %v3725
    %v3727 = vperm.slane %v3719, %v3726
    %v3728 = vrot.slane %v3715, 4
    %v3729 = vsel %vm213, %v3728, %v3709
    %v3730 = vrot.slane %v3709, 4
    %v3731 = vsel %vm213, %v3715, %v3730
    %v3733 = vunpack.c.l.s4 1934713408
    %v3734 = vunpack.c.0.s8 %v3733
    %v3735 = vperm.slane %v3729, %v3734
    %v3737 = vunpack.c.l.s4 1934713408
    %v3738 = vunpack.c.0.s8 %v3737
    %v3739 = vperm.slane %v3731, %v3738
    %v3740 = vrot.slane %v3735, 4
    %v3741 = vsel %vm213, %v3740, %v3723
    %v3742 = vrot.slane %v3723, 4
    %v3743 = vsel %vm213, %v3735, %v3742
    %v3744 = vrot.slane %v3739, 4
    %v3745 = vsel %vm213, %v3744, %v3727
    %v3746 = vrot.slane %v3727, 4
    %v3747 = vsel %vm213, %v3739, %v3746
    %v3748 = vsel %vm213, %v3688, %v3669
    %v3750 = vunpack.c.l.s4 1983009808
    %v3751 = vunpack.c.0.s8 %v3750
    %v3752 = vperm.slane %v3748, %v3751
    %v3753 = vrot.slane %v3689, 4
    %v3754 = vsel %vm213, %v3753, %v3687
    %v3756 = vunpack.c.l.s4 1983009808
    %v3757 = vunpack.c.0.s8 %v3756
    %v3758 = vperm.slane %v3754, %v3757
    %v3759 = vsel %vm213, %v3692, %v3681
    %v3761 = vunpack.c.l.s4 1983009808
    %v3762 = vunpack.c.0.s8 %v3761
    %v3763 = vperm.slane %v3759, %v3762
    %v3764 = vrot.slane %v3693, 4
    %v3765 = vsel %vm213, %v3764, %v3691
    %v3767 = vunpack.c.l.s4 1983009808
    %v3768 = vunpack.c.0.s8 %v3767
    %v3769 = vperm.slane %v3765, %v3768
    %v3770 = vrot.slane %v3758, 4
    %v3771 = vsel %vm213, %v3770, %v3752
    %v3772 = vrot.slane %v3752, 4
    %v3773 = vsel %vm213, %v3758, %v3772
    %v3775 = vunpack.c.l.s4 1934713408
    %v3776 = vunpack.c.0.s8 %v3775
    %v3777 = vperm.slane %v3771, %v3776
    %v3779 = vunpack.c.l.s4 1934713408
    %v3780 = vunpack.c.0.s8 %v3779
    %v3781 = vperm.slane %v3773, %v3780
    %v3782 = vrot.slane %v3769, 4
    %v3783 = vsel %vm213, %v3782, %v3763
    %v3784 = vrot.slane %v3763, 4
    %v3785 = vsel %vm213, %v3769, %v3784
    %v3787 = vunpack.c.l.s4 1934713408
    %v3788 = vunpack.c.0.s8 %v3787
    %v3789 = vperm.slane %v3783, %v3788
    %v3791 = vunpack.c.l.s4 1934713408
    %v3792 = vunpack.c.0.s8 %v3791
    %v3793 = vperm.slane %v3785, %v3792
    %v3794 = vrot.slane %v3789, 4
    %v3795 = vsel %vm213, %v3794, %v3777
    %v3796 = vrot.slane %v3777, 4
    %v3797 = vsel %vm213, %v3789, %v3796
    %v3798 = vrot.slane %v3793, 4
    %v3799 = vsel %vm213, %v3798, %v3781
    %v3800 = vrot.slane %v3781, 4
    %v3801 = vsel %vm213, %v3793, %v3800
    %v3802 = vpack.c.bf16 %v3741, %v3741
    %v3803 = vpack.c.bf16 %v3795, %v3795
    %v3804 = vpack.c.bf16 %v3743, %v3743
    %v3805 = vpack.c.bf16 %v3797, %v3797
    %v3806 = vpack.c.bf16 %v3745, %v3745
    %v3807 = vpack.c.bf16 %v3799, %v3799
    %v3808 = vpack.c.bf16 %v3747, %v3747
    %v3809 = vpack.c.bf16 %v3801, %v3801
    %v3812 = vunpack.c.l.b16 %v3554
    %v3813 = vunpack.c.l.b16 %v3555
    %v3814 = vpack.c.b16 %v3813, %v3812
    %v3816 = vsel %vm575, %v3310, 0
    %v3819 = vsel %vm575, %v3814, 0
    %3821 = vmatpush.bf16.xpose.msra.mxu0 0
    %3822 = vmatpush.bf16.xpose.msra.mxu0 0
    %3823 = vmatpush.bf16.xpose.msra.mxu0 0
    %3824 = vmatpush.bf16.xpose.msra.mxu0 0
    %3825 = vmatpush.bf16.xpose.msra.mxu0 0
    %3826 = vmatpush.bf16.xpose.msra.mxu0 0
    %3827 = vmatpush.bf16.xpose.msra.mxu0 0
    %3828 = vmatpush.bf16.xpose.msra.mxu0 %v3819
    %3829 = vmatmul.bf16.gmra.mxu0 %v3816
    %v3830 = vpop.f32.mrf.mxu0
    %v3831 = vadd.f32 0.0, %v3830
    %v3832 = vpop.f32.mrf.mxu0
    %3833 = vdwg.mxu0
    %v3836 = vunpack.c.l.b16 %v3556
    %v3837 = vunpack.c.l.b16 %v3557
    %v3838 = vpack.c.b16 %v3837, %v3836
    %v3840 = vsel %vm575, %v3311, 0
    %v3843 = vsel %vm575, %v3838, 0
    %3845 = vmatpush.bf16.xpose.msra.mxu0 0
    %3846 = vmatpush.bf16.xpose.msra.mxu0 0
    %3847 = vmatpush.bf16.xpose.msra.mxu0 0
    %3848 = vmatpush.bf16.xpose.msra.mxu0 0
    %3849 = vmatpush.bf16.xpose.msra.mxu0 0
    %3850 = vmatpush.bf16.xpose.msra.mxu0 0
    %3851 = vmatpush.bf16.xpose.msra.mxu0 0
    %3852 = vmatpush.bf16.xpose.msra.mxu0 %v3843
    %3853 = vmatmul.bf16.gmra.mxu0 %v3840
    %v3854 = vpop.f32.mrf.mxu0
    %v3855 = vadd.f32 0.0, %v3854
    %v3856 = vpop.f32.mrf.mxu0
    %3857 = vdwg.mxu0
    %v3860 = vunpack.c.l.b16 %v3558
    %v3861 = vunpack.c.l.b16 %v3559
    %v3862 = vpack.c.b16 %v3861, %v3860
    %v3864 = vsel %vm575, %v3312, 0
    %v3867 = vsel %vm575, %v3862, 0
    %3869 = vmatpush.bf16.xpose.msra.mxu0 0
    %3870 = vmatpush.bf16.xpose.msra.mxu0 0
    %3871 = vmatpush.bf16.xpose.msra.mxu0 0
    %3872 = vmatpush.bf16.xpose.msra.mxu0 0
    %3873 = vmatpush.bf16.xpose.msra.mxu0 0
    %3874 = vmatpush.bf16.xpose.msra.mxu0 0
    %3875 = vmatpush.bf16.xpose.msra.mxu0 0
    %3876 = vmatpush.bf16.xpose.msra.mxu0 %v3867
    %3877 = vmatmul.bf16.gmra.mxu0 %v3864
    %v3878 = vpop.f32.mrf.mxu0
    %v3879 = vadd.f32 0.0, %v3878
    %v3880 = vpop.f32.mrf.mxu0
    %3881 = vdwg.mxu0
    %v3884 = vunpack.c.l.b16 %v3560
    %v3885 = vunpack.c.l.b16 %v3561
    %v3886 = vpack.c.b16 %v3885, %v3884
    %v3888 = vsel %vm575, %v3313, 0
    %v3891 = vsel %vm575, %v3886, 0
    %3893 = vmatpush.bf16.xpose.msra.mxu0 0
    %3894 = vmatpush.bf16.xpose.msra.mxu0 0
    %3895 = vmatpush.bf16.xpose.msra.mxu0 0
    %3896 = vmatpush.bf16.xpose.msra.mxu0 0
    %3897 = vmatpush.bf16.xpose.msra.mxu0 0
    %3898 = vmatpush.bf16.xpose.msra.mxu0 0
    %3899 = vmatpush.bf16.xpose.msra.mxu0 0
    %3900 = vmatpush.bf16.xpose.msra.mxu0 %v3891
    %3901 = vmatmul.bf16.gmra.mxu0 %v3888
    %v3902 = vpop.f32.mrf.mxu0
    %v3903 = vadd.f32 0.0, %v3902
    %v3904 = vpop.f32.mrf.mxu0
    %3905 = vdwg.mxu0
    %v3906 = vsel %vm900, %v3831, -inf
    %3907 = vmax.xlane.f32.xlu0 %v3906
    %v3908 = vpop.xlane.xlu0 %3907
    %v3909 = vsel %vm900, %v3855, -inf
    %3910 = vmax.xlane.f32.xlu0 %v3909
    %v3911 = vpop.xlane.xlu0 %3910
    %v3912 = vsel %vm900, %v3879, -inf
    %3913 = vmax.xlane.f32.xlu0 %v3912
    %v3914 = vpop.xlane.xlu0 %3913
    %v3915 = vsel %vm900, %v3903, -inf
    %3916 = vmax.xlane.f32.xlu0 %v3915
    %v3917 = vpop.xlane.xlu0 %3916
    %v3918 = vsub.f32 %v3831, %v3908
    %v3919 = vsub.f32 %v3855, %v3911
    %v3920 = vsub.f32 %v3879, %v3914
    %v3921 = vsub.f32 %v3903, %v3917
    %v3922 = vmul.f32 %v3918, 1.442695
    %v3923 = vpow.pop %v3922
    %v3924 = vmul.f32 %v3919, 1.442695
    %v3925 = vpow.pop %v3924
    %v3926 = vmul.f32 %v3920, 1.442695
    %v3927 = vpow.pop %v3926
    %v3928 = vmul.f32 %v3921, 1.442695
    %v3929 = vpow.pop %v3928
    %v3930 = vsel %vm900, %v3923, 0.0
    %3931 = vadd.xlane.f32.xlu0 %v3930
    %v3932 = vpop.xlane.xlu0 %3931
    %v3933 = vsel %vm900, %v3925, 0.0
    %3934 = vadd.xlane.f32.xlu0 %v3933
    %v3935 = vpop.xlane.xlu0 %3934
    %v3936 = vsel %vm900, %v3927, 0.0
    %3937 = vadd.xlane.f32.xlu0 %v3936
    %v3938 = vpop.xlane.xlu0 %3937
    %v3939 = vsel %vm900, %v3929, 0.0
    %3940 = vadd.xlane.f32.xlu0 %v3939
    %v3941 = vpop.xlane.xlu0 %3940
    %v3942 = vrcp.pop %v3932
    %v3943 = vrcp.pop %v3935
    %v3944 = vrcp.pop %v3938
    %v3945 = vrcp.pop %v3941
    %v3946 = vmul.f32 %v3923, %v3942
    %v3947 = vmul.f32 %v3925, %v3943
    %v3948 = vmul.f32 %v3927, %v3944
    %v3949 = vmul.f32 %v3929, %v3945
    %v3950 = vpack.c.bf16 %v3946, %v3946
    %v3951 = vpack.c.bf16 %v3947, %v3947
    %v3952 = vpack.c.bf16 %v3948, %v3948
    %v3953 = vpack.c.bf16 %v3949, %v3949
    %v3956 = vunpack.c.l.b16 %v3802
    %v3957 = vunpack.c.l.b16 %v3803
    %v3958 = vpack.c.b16 %v3957, %v3956
    %v3961 = vsel %vm900, %v3950, 0
    %3963 = vmatpush.bf16.msra.mxu0 0
    %3964 = vmatpush.bf16.msra.mxu0 0
    %3965 = vmatpush.bf16.msra.mxu0 0
    %3966 = vmatpush.bf16.msra.mxu0 0
    %3967 = vmatpush.bf16.msra.mxu0 0
    %3968 = vmatpush.bf16.msra.mxu0 0
    %3969 = vmatpush.bf16.msra.mxu0 0
    %3970 = vmatpush.bf16.msra.mxu0 %v3958
    %3971 = vmatmul.bf16.gmra.mxu0 %v3961
    %v3972 = vpop.f32.mrf.mxu0
    %v3973 = vadd.f32 0.0, %v3972
    %v3974 = vpop.f32.mrf.mxu0
    %3975 = vdwg.mxu0
    %v3978 = vunpack.c.l.b16 %v3804
    %v3979 = vunpack.c.l.b16 %v3805
    %v3980 = vpack.c.b16 %v3979, %v3978
    %v3983 = vsel %vm900, %v3951, 0
    %3985 = vmatpush.bf16.msra.mxu0 0
    %3986 = vmatpush.bf16.msra.mxu0 0
    %3987 = vmatpush.bf16.msra.mxu0 0
    %3988 = vmatpush.bf16.msra.mxu0 0
    %3989 = vmatpush.bf16.msra.mxu0 0
    %3990 = vmatpush.bf16.msra.mxu0 0
    %3991 = vmatpush.bf16.msra.mxu0 0
    %3992 = vmatpush.bf16.msra.mxu0 %v3980
    %3993 = vmatmul.bf16.gmra.mxu0 %v3983
    %v3994 = vpop.f32.mrf.mxu0
    %v3995 = vadd.f32 0.0, %v3994
    %v3996 = vpop.f32.mrf.mxu0
    %3997 = vdwg.mxu0
    %v4000 = vunpack.c.l.b16 %v3806
    %v4001 = vunpack.c.l.b16 %v3807
    %v4002 = vpack.c.b16 %v4001, %v4000
    %v4005 = vsel %vm900, %v3952, 0
    %4007 = vmatpush.bf16.msra.mxu0 0
    %4008 = vmatpush.bf16.msra.mxu0 0
    %4009 = vmatpush.bf16.msra.mxu0 0
    %4010 = vmatpush.bf16.msra.mxu0 0
    %4011 = vmatpush.bf16.msra.mxu0 0
    %4012 = vmatpush.bf16.msra.mxu0 0
    %4013 = vmatpush.bf16.msra.mxu0 0
    %4014 = vmatpush.bf16.msra.mxu0 %v4002
    %4015 = vmatmul.bf16.gmra.mxu0 %v4005
    %v4016 = vpop.f32.mrf.mxu0
    %v4017 = vadd.f32 0.0, %v4016
    %v4018 = vpop.f32.mrf.mxu0
    %4019 = vdwg.mxu0
    %v4022 = vunpack.c.l.b16 %v3808
    %v4023 = vunpack.c.l.b16 %v3809
    %v4024 = vpack.c.b16 %v4023, %v4022
    %v4027 = vsel %vm900, %v3953, 0
    %4029 = vmatpush.bf16.msra.mxu0 0
    %4030 = vmatpush.bf16.msra.mxu0 0
    %4031 = vmatpush.bf16.msra.mxu0 0
    %4032 = vmatpush.bf16.msra.mxu0 0
    %4033 = vmatpush.bf16.msra.mxu0 0
    %4034 = vmatpush.bf16.msra.mxu0 0
    %4035 = vmatpush.bf16.msra.mxu0 0
    %4036 = vmatpush.bf16.msra.mxu0 %v4024
    %4037 = vmatmul.bf16.gmra.mxu0 %v4027
    %v4038 = vpop.f32.mrf.mxu0
    %v4039 = vadd.f32 0.0, %v4038
    %v4040 = vpop.f32.mrf.mxu0
    %4041 = vdwg.mxu0
    %v4042 = vrot.slane %v4017, 4
    %v4043 = vsel %vm213, %v4042, %v3973
    %v4044 = vrot.slane %v3973, 4
    %v4045 = vsel %vm213, %v4017, %v4044
    %v4047 = vunpack.c.l.s4 1983009808
    %v4048 = vunpack.c.0.s8 %v4047
    %v4049 = vperm.slane %v4043, %v4048
    %v4051 = vunpack.c.l.s4 1983009808
    %v4052 = vunpack.c.0.s8 %v4051
    %v4053 = vperm.slane %v4045, %v4052
    %v4054 = vrot.slane %v4039, 4
    %v4055 = vsel %vm213, %v4054, %v3995
    %v4056 = vrot.slane %v3995, 4
    %v4057 = vsel %vm213, %v4039, %v4056
    %v4059 = vunpack.c.l.s4 1983009808
    %v4060 = vunpack.c.0.s8 %v4059
    %v4061 = vperm.slane %v4055, %v4060
    %v4063 = vunpack.c.l.s4 1983009808
    %v4064 = vunpack.c.0.s8 %v4063
    %v4065 = vperm.slane %v4057, %v4064
    %v4066 = vrot.slane %v4061, 4
    %v4067 = vsel %vm213, %v4066, %v4049
    %v4068 = vrot.slane %v4049, 4
    %v4069 = vsel %vm213, %v4061, %v4068
    %v4071 = vunpack.c.l.s4 1934713408
    %v4072 = vunpack.c.0.s8 %v4071
    %v4073 = vperm.slane %v4067, %v4072
    %v4075 = vunpack.c.l.s4 1934713408
    %v4076 = vunpack.c.0.s8 %v4075
    %v4077 = vperm.slane %v4069, %v4076
    %v4078 = vrot.slane %v4065, 4
    %v4079 = vsel %vm213, %v4078, %v4053
    %v4080 = vrot.slane %v4053, 4
    %v4081 = vsel %vm213, %v4065, %v4080
    %v4083 = vunpack.c.l.s4 1934713408
    %v4084 = vunpack.c.0.s8 %v4083
    %v4085 = vperm.slane %v4079, %v4084
    %v4087 = vunpack.c.l.s4 1934713408
    %v4088 = vunpack.c.0.s8 %v4087
    %v4089 = vperm.slane %v4081, %v4088
    %v4090 = vrot.slane %v4073, 4
    %v4091 = vsel %vm213, 0.0, %v4090
    %v4092 = vrot.slane %v4077, 4
    %v4093 = vsel %vm213, 0.0, %v4092
    %v4094 = vrot.slane %v4085, 4
    %v4095 = vsel %vm213, 0.0, %v4094
    %v4096 = vrot.slane %v4089, 4
    %v4097 = vsel %vm213, 0.0, %v4096
    %v4098 = vsel %vm213, %v4092, %v4073
    %v4100 = vunpack.c.l.s4 1983009808
    %v4101 = vunpack.c.0.s8 %v4100
    %v4102 = vperm.slane %v4098, %v4101
    %v4103 = vrot.slane %v4093, 4
    %v4104 = vsel %vm213, %v4103, %v4091
    %v4106 = vunpack.c.l.s4 1983009808
    %v4107 = vunpack.c.0.s8 %v4106
    %v4108 = vperm.slane %v4104, %v4107
    %v4109 = vsel %vm213, %v4096, %v4085
    %v4111 = vunpack.c.l.s4 1983009808
    %v4112 = vunpack.c.0.s8 %v4111
    %v4113 = vperm.slane %v4109, %v4112
    %v4114 = vrot.slane %v4097, 4
    %v4115 = vsel %vm213, %v4114, %v4095
    %v4117 = vunpack.c.l.s4 1983009808
    %v4118 = vunpack.c.0.s8 %v4117
    %v4119 = vperm.slane %v4115, %v4118
    %v4120 = vrot.slane %v4108, 4
    %v4121 = vsel %vm213, %v4120, %v4102
    %v4122 = vrot.slane %v4102, 4
    %v4123 = vsel %vm213, %v4108, %v4122
    %v4125 = vunpack.c.l.s4 1934713408
    %v4126 = vunpack.c.0.s8 %v4125
    %v4127 = vperm.slane %v4121, %v4126
    %v4129 = vunpack.c.l.s4 1934713408
    %v4130 = vunpack.c.0.s8 %v4129
    %v4131 = vperm.slane %v4123, %v4130
    %v4132 = vrot.slane %v4119, 4
    %v4133 = vsel %vm213, %v4132, %v4113
    %v4134 = vrot.slane %v4113, 4
    %v4135 = vsel %vm213, %v4119, %v4134
    %v4137 = vunpack.c.l.s4 1934713408
    %v4138 = vunpack.c.0.s8 %v4137
    %v4139 = vperm.slane %v4133, %v4138
    %v4141 = vunpack.c.l.s4 1934713408
    %v4142 = vunpack.c.0.s8 %v4141
    %v4143 = vperm.slane %v4135, %v4142
    %v4144 = vrot.slane %v4139, 4
    %v4145 = vsel %vm213, %v4144, %v4127
    %v4146 = vrot.slane %v4127, 4
    %v4147 = vsel %vm213, %v4139, %v4146
    %v4148 = vrot.slane %v4143, 4
    %v4149 = vsel %vm213, %v4148, %v4131
    %v4150 = vrot.slane %v4131, 4
    %v4151 = vsel %vm213, %v4143, %v4150
    %4153 = vrot.lane.b32.xlu0 %v4147, 8
    %v4154 = vpop.permute.xlu0 %4153
    %4157 = vrot.lane.b32.xlu0 %v4149, 16
    %v4158 = vpop.permute.xlu0 %4157
    %4161 = vrot.lane.b32.xlu0 %v4151, 24
    %v4162 = vpop.permute.xlu0 %4161
    %v4164 = vsel %vm575, %v4145, %v4154
    %v4165 = vsel %vm900, %v4164, %v4158
    %v4166 = vsel %vm902, %v4165, %v4162
    %v4167 = vpack.c.bf16 %v4166, %v4166
    %v4168 = vperm.slane %v2226, 7
    %v4173 = vunpack.c.l.b16 %v3186
    %v4174 = vunpack.c.l.b16 %v3187
    %v4175 = vunpack.c.l.b16 %v3188
    %v4176 = vunpack.c.l.b16 %v3189
    %v4177 = vpack.c.b16 %v4174, %v4173
    %v4178 = vpack.c.b16 %v4176, %v4175
    %v4182 = vsel %vm119, %v4167, 0
    %4184 = vmatpush.bf16.msra.mxu0 0
    %4185 = vmatpush.bf16.msra.mxu0 0
    %4186 = vmatpush.bf16.msra.mxu0 0
    %4187 = vmatpush.bf16.msra.mxu0 0
    %4188 = vmatpush.bf16.msra.mxu0 0
    %4189 = vmatpush.bf16.msra.mxu0 0
    %4190 = vmatpush.bf16.msra.mxu0 %v4178
    %4191 = vmatpush.bf16.msra.mxu0 %v4177
    %4192 = vmatmul.bf16.gmra.mxu0 %v4182
    %v4193 = vpop.f32.mrf.mxu0
    %v4194 = vadd.f32 %v4168, %v4193
    %v4195 = vpop.f32.mrf.mxu0
    %4196 = vdwg.mxu0
    %v4197 = vadd.f32 %v3085, %v4194
    %v4198 = vsel %vm119, %v4197, 0.0
    %4199 = vadd.xlane.f32.xlu0 %v4198
    %v4200 = vpop.xlane.xlu0 %4199
    %v4201 = vmul.f32 %v4197, %v4197
    %v4202 = vsel %vm119, %v4201, 0.0
    %4203 = vadd.xlane.f32.xlu0 %v4202
    %v4204 = vpop.xlane.xlu0 %4203
    %v4205 = vmul.f32 %v4200, 0.03125
    %v4206 = vmul.f32 %v4204, 0.03125
    %v4207 = vmul.f32 %v4205, %v4205
    %v4208 = vsub.f32 %v4206, %v4207
    %v4209 = vsub.f32 %v4197, %v4205
    %v4210 = vadd.f32 %v4208, 1e-05
    %v4211 = vrsqrt.pop %v4210
    %v4212 = vmul.f32 %v4211, %v4210
    %v4213 = vmul.f32 %v4212, %v4211
    %v4214 = vmul.f32 0.5, %v4213
    %v4215 = vsub.f32 1.5, %v4214
    %v4216 = vmul.f32 %v4211, %v4215
    %vm4217 = vweird.f32 %v4210
    %vm4218 = vweird.f32 %v4211
    %vm4219 = vmor %vm4217, %vm4218
    %v4220 = vsel %vm4219, %v4211, %v4216
    %v4221 = vmul.f32 %v4209, %v4220
    %v4222 = vperm.slane %v2227, 3
    %v4223 = vmul.f32 %v4221, %v4222
    %v4224 = vperm.slane %v2227, 4
    %v4225 = vadd.f32 %v4223, %v4224
    %v4226 = vpack.c.bf16 %v4225, %v4225
    %s4227 = scalar_lea.vmem %s4, 16
    %v4228 = vld [vmem:[%s4227] sm:$0xf]
    %v4229 = vld [vmem:[%s4227 + $0x4] sm:$0xf]
    %v4230 = vld [vmem:[%s4227 + $0x8] sm:$0xf]
    %v4231 = vld [vmem:[%s4227 + $0xc] sm:$0xf]
    %s4232 = scalar_lea.vmem %s7, 1
    %v4233 = vld [vmem:[%s4232] sm:$0x1]
    %v4235 = vperm.slane %v4233, 0
    %v4241 = vunpack.c.l.b16 %v4228
    %v4242 = vunpack.c.l.b16 %v4229
    %v4243 = vunpack.c.l.b16 %v4230
    %v4244 = vunpack.c.l.b16 %v4231
    %v4245 = vpack.c.b16 %v4242, %v4241
    %v4246 = vpack.c.b16 %v4244, %v4243
    %v4250 = vsel %vm119, %v4226, 0
    %4252 = vmatpush.bf16.msra.mxu0 0
    %4253 = vmatpush.bf16.msra.mxu0 0
    %4254 = vmatpush.bf16.msra.mxu0 0
    %4255 = vmatpush.bf16.msra.mxu0 0
    %4256 = vmatpush.bf16.msra.mxu0 0
    %4257 = vmatpush.bf16.msra.mxu0 0
    %4258 = vmatpush.bf16.msra.mxu0 %v4246
    %4259 = vmatpush.bf16.msra.mxu0 %v4245
    %4260 = vmatmul.bf16.gmra.mxu0 %v4250
    %v4261 = vpop.f32.mrf.mxu0
    %v4262 = vadd.f32 %v4235, %v4261
    %v4263 = vpop.f32.mrf.mxu0
    %4264 = vdwg.mxu0
    %v4265 = vmax.f32 %v4262, 0.0
    %v4266 = vpack.c.bf16 %v4265, %v4265
    %s4267 = scalar_lea.vmem %s5, 32
    %v4268 = vld [vmem:[%s4267] sm:$0xf]
    %v4269 = vld [vmem:[%s4267 + $0x4] sm:$0xf]
    %v4270 = vld [vmem:[%s4267 + $0x8] sm:$0xf]
    %v4271 = vld [vmem:[%s4267 + $0xc] sm:$0xf]
    %v4272 = vld [vmem:[%s4267 + $0x10] sm:$0xf]
    %v4273 = vld [vmem:[%s4267 + $0x14] sm:$0xf]
    %v4274 = vld [vmem:[%s4267 + $0x18] sm:$0xf]
    %v4275 = vld [vmem:[%s4267 + $0x1c] sm:$0xf]
    %v4276 = vperm.slane %v2227, 0
    %v4285 = vunpack.c.l.b16 %v4268
    %v4286 = vunpack.c.l.b16 %v4269
    %v4287 = vunpack.c.l.b16 %v4270
    %v4288 = vunpack.c.l.b16 %v4271
    %v4289 = vunpack.c.l.b16 %v4272
    %v4290 = vunpack.c.l.b16 %v4273
    %v4291 = vunpack.c.l.b16 %v4274
    %v4292 = vunpack.c.l.b16 %v4275
    %v4293 = vpack.c.b16 %v4286, %v4285
    %v4294 = vpack.c.b16 %v4288, %v4287
    %v4295 = vpack.c.b16 %v4290, %v4289
    %v4296 = vpack.c.b16 %v4292, %v4291
    %v4302 = vsel %vm2178, %v4266, 0
    %4304 = vmatpush.bf16.msra.mxu0 0
    %4305 = vmatpush.bf16.msra.mxu0 0
    %4306 = vmatpush.bf16.msra.mxu0 0
    %4307 = vmatpush.bf16.msra.mxu0 0
    %4308 = vmatpush.bf16.msra.mxu0 %v4296
    %4309 = vmatpush.bf16.msra.mxu0 %v4295
    %4310 = vmatpush.bf16.msra.mxu0 %v4294
    %4311 = vmatpush.bf16.msra.mxu0 %v4293
    %4312 = vmatmul.bf16.gmra.mxu0 %v4302
    %v4313 = vpop.f32.mrf.mxu0
    %v4314 = vadd.f32 %v4276, %v4313
    %v4315 = vpop.f32.mrf.mxu0
    %4316 = vdwg.mxu0
    %v4317 = vadd.f32 %v4225, %v4314
    %v4318 = vsel %vm119, %v4317, 0.0
    %4319 = vadd.xlane.f32.xlu0 %v4318
    %v4320 = vpop.xlane.xlu0 %4319
    %v4321 = vmul.f32 %v4317, %v4317
    %v4322 = vsel %vm119, %v4321, 0.0
    %4323 = vadd.xlane.f32.xlu0 %v4322
    %v4324 = vpop.xlane.xlu0 %4323
    %v4325 = vmul.f32 %v4320, 0.03125
    %v4326 = vmul.f32 %v4324, 0.03125
    %v4327 = vmul.f32 %v4325, %v4325
    %v4328 = vsub.f32 %v4326, %v4327
    %v4329 = vsub.f32 %v4317, %v4325
    %v4330 = vadd.f32 %v4328, 1e-05
    %v4331 = vrsqrt.pop %v4330
    %v4332 = vmul.f32 %v4331, %v4330
    %v4333 = vmul.f32 %v4332, %v4331
    %v4334 = vmul.f32 0.5, %v4333
    %v4335 = vsub.f32 1.5, %v4334
    %v4336 = vmul.f32 %v4331, %v4335
    %vm4337 = vweird.f32 %v4330
    %vm4338 = vweird.f32 %v4331
    %vm4339 = vmor %vm4337, %vm4338
    %v4340 = vsel %vm4339, %v4331, %v4336
    %v4341 = vmul.f32 %v4329, %v4340
    %v4342 = vperm.slane %v2227, 5
    %v4343 = vmul.f32 %v4341, %v4342
    %v4344 = vperm.slane %v2227, 6
    %v4345 = vadd.f32 %v4343, %v4344
    %v4346 = vadd.f32 %v4345, %v2224
    %v4347 = vld [vmem:[%s8] sm:$0x3]
    %v4348 = vsel %vm119, %v4346, 0.0
    %4349 = vadd.xlane.f32.xlu0 %v4348
    %v4350 = vpop.xlane.xlu0 %4349
    %v4351 = vmul.f32 %v4346, %v4346
    %v4352 = vsel %vm119, %v4351, 0.0
    %4353 = vadd.xlane.f32.xlu0 %v4352
    %v4354 = vpop.xlane.xlu0 %4353
    %v4355 = vmul.f32 %v4350, 0.03125
    %v4356 = vmul.f32 %v4354, 0.03125
    %v4357 = vmul.f32 %v4355, %v4355
    %v4358 = vsub.f32 %v4356, %v4357
    %v4359 = vsub.f32 %v4346, %v4355
    %v4360 = vadd.f32 %v4358, 1e-05
    %v4361 = vrsqrt.pop %v4360
    %v4362 = vmul.f32 %v4361, %v4360
    %v4363 = vmul.f32 %v4362, %v4361
    %v4364 = vmul.f32 0.5, %v4363
    %v4365 = vsub.f32 1.5, %v4364
    %v4366 = vmul.f32 %v4361, %v4365
    %vm4367 = vweird.f32 %v4360
    %vm4368 = vweird.f32 %v4361
    %vm4369 = vmor %vm4367, %vm4368
    %v4370 = vsel %vm4369, %v4361, %v4366
    %v4371 = vmul.f32 %v4359, %v4370
    %v4372 = vperm.slane %v4347, 0
    %v4373 = vmul.f32 %v4371, %v4372
    %v4374 = vperm.slane %v4347, 1
    %v4375 = vadd.f32 %v4373, %v4374
    %4376 = vst.msk [vmem:[#allocation10] sm:$0xff] %vm119, %v4375
    // Predicated region
    $region54: #{tpu_custom_call.1} parent=1 // pred_check
      _
    $region55: #{tpu_custom_call.1} parent=1 // pred_check_branch
      %4378 = sbr.rel (0) target = $region57
    $region56: #{tpu_custom_call.1} parent=1 // pred_region
      %4380 = vsyncadd [#allocation4], 0
      %s4382 = sshll.u32 [#allocation10], 4
      %s4383 = int_to_ptr.vmem [resolvable:$true] %s4382
      %s4384 = sshll.u32 %s9, 4
      %s4385 = int_to_ptr.hbm [resolvable:$true] %s4384
      %4387 = dma.vmem_to_hbm [thread:$0]  %s4383, 128, %s4385, [#allocation4]
    $region57: #{tpu_custom_call.1} parent=1 // pred_fallthru
      _
    // Predicated region
    $region58: #{tpu_custom_call.1} parent=1 // pred_check
      _
    $region59: #{tpu_custom_call.1} parent=1 // pred_check_branch
      %4389 = sbr.rel (0) target = $region61
    $region60: #{tpu_custom_call.1} parent=1 // pred_region
      %4391 = dma.done [#allocation4], 128
    $region61: #{tpu_custom_call.1} parent=1 // pred_fallthru
      _
    %4392 = vsyncpa [#allocation3], 1
    %4393 = vsyncpa [#allocation6], 1
    %4394 = vsyncpa [#allocation9], 1
    %4395 = vsyncpa [#allocation4], 1

</llo_original>
